<compile_context>
chip_gen: v7x
topology: tpu7x:2x2x1
jax: 0.10.0
libtpu: 0.0.40
codegen_flags: <defaults>
</compile_context>

<pallas_src>
import functools

import jax
import jax.numpy as jnp
from jax.experimental import pallas as pl
from jax.experimental.pallas import tpu as pltpu


_OUT_LANES = 128  # lane-dense per-block output slab (loss broadcast across lanes)


def _supcon_block_kernel(valid_ref, feat_ref, lab_col_ref, lab_row_ref,
                         sim_col_ref, sim_row_ref, out_ref, *,
                         temperature, beta):
    """Full SupConLoss for one spatial block (one grid step).

    valid_ref:   SMEM int32 [num_blocks]  (scalar prefetch) 1 if block has fg
    feat_ref:    [N, C] f32 pixel features (pixel-major order, see header)
    lab_col_ref: [N, 1] f32 per-pixel label
    lab_row_ref: [1, N] f32 per-pixel label (row layout)
    sim_col_ref: [N, 1] f32 per-pixel cross-view cosine similarity
    sim_row_ref: [1, N] f32
    out_ref:     [1, _OUT_LANES] f32, loss broadcast across lanes
    """
    # Background-only blocks contribute 0 (filtered again by the masked mean in
    # the wrapper); also avoids the 0/0 that an all-background block would hit.
    out_ref[...] = jnp.zeros((1, _OUT_LANES), jnp.float32)

    @pl.when(valid_ref[pl.program_id(0)] != 0)
    def _compute():
        f = feat_ref[...].astype(jnp.float32)              # [N, C]
        N = f.shape[0]
        rs = N // 2                                        # region_size

        lab_c = lab_col_ref[...]                           # [N, 1]
        lab_r = lab_row_ref[...]                           # [1, N]
        sim_c = sim_col_ref[...]                           # [N, 1]
        sim_r = sim_row_ref[...]                           # [1, N]

        # logits[p, q] = <f_p, f_q> / temperature  (== F.conv2d with 1x1 kernels)
        logits = jax.lax.dot_general(
            f, f, (((1,), (1,)), ((), ())),
            preferred_element_type=jnp.float32) / temperature

        row_ids = jax.lax.broadcasted_iota(jnp.int32, (N, N), 0)
        col_ids = jax.lax.broadcasted_iota(jnp.int32, (N, N), 1)
        off_diag = row_ids != col_ids                      # scatter(ones,...,0) == 1 - I

        logits_mask = jnp.where(off_diag, 1.0, 0.0).astype(jnp.float32)
        mask = jnp.where(jnp.logical_and(lab_c == lab_r, off_diag),
                         1.0, 0.0).astype(jnp.float32)
        neg_mask = 1.0 - mask

        # labels >= 0 so sqrt(l_p*l_q) == sqrt(l_p)*sqrt(l_q): N^2 -> 2N sqrts.
        lab_hard = mask * (jnp.sqrt(lab_c) * jnp.sqrt(lab_r))
        # cosine similarity may be negative; keep sqrt on the outer product so
        # NaN semantics match the torch reference exactly.
        sim_hard = mask * jnp.sqrt(sim_c * sim_r)

        # Fused exponential: exp(logits)*exp(-beta*sim_hard) in one EUP pass.
        # sim_hard == 0 wherever neg_mask == 1 (incl. the diagonal), so the same
        # array doubles as exp(logits) for the negative-pair sum.
        exp_fused = jnp.exp(logits - beta * sim_hard)
        exp_logits = exp_fused * logits_mask
        neg_logits = jnp.sum(exp_fused * neg_mask, axis=1, keepdims=True)   # [N,1]

        mask_sum = jnp.sum(mask, axis=1, keepdims=True)                     # [N,1]
        nbg_c = jnp.where(lab_c != 0.0, 1.0, 0.0).astype(jnp.float32)       # [N,1]
        inv_nbg = 1.0 / jnp.sum(nbg_c)

        # Reference builds, per 2x2 region, the block matrix [[region,1],[1,1]];
        # its only (i,j)-dependent part is the top-left rs x rs corner.  Hoist
        # the corner==1 baseline out of the loop and only evaluate an rs x rs
        # correction per region.
        log1p_neg = jnp.log(1.0 + neg_logits)                               # [N,1]
        s_ll = jnp.sum(lab_hard * logits, axis=1, keepdims=True)            # [N,1]
        lab_rowsum = jnp.sum(lab_hard, axis=1, keepdims=True)               # [N,1]
        mlpp_base = (s_ll - lab_rowsum * log1p_neg) / mask_sum              # [N,1]
        tem_base = jnp.sum(-mlpp_base * nbg_c) * inv_nbg

        neg_top = neg_logits[0:rs]                                          # [rs,1]
        log1p_top = log1p_neg[0:rs]                                         # [rs,1]
        l_corner = lab_hard[0:rs, 0:rs]                                     # [rs,rs]
        w_top = nbg_c[0:rs] / mask_sum[0:rs]                                # [rs,1]
        base_corr = jnp.sum(l_corner, axis=1, keepdims=True) * log1p_top    # [rs,1]

        corr_acc = jnp.float32(0.0)
        for i in range(2):              # dvm == 2, statically unrolled
            for j in range(2):
                region = exp_logits[i * rs:(i + 1) * rs, j * rs:(j + 1) * rs]
                g = jnp.log(region + neg_top)                               # [rs,rs]
                corr_num = base_corr - jnp.sum(l_corner * g, axis=1,
                                               keepdims=True)               # [rs,1]
                corr_acc = corr_acc + jnp.sum(corr_num * w_top)

        loss = tem_base - 0.25 * corr_acc * inv_nbg
        out_ref[...] = jnp.broadcast_to(loss, (1, _OUT_LANES))


def _batched_pallas_loss(feats_all, lab_all, sim_all, valid_i32, *,
                         temperature, beta):
    """One gridded pallas_call over all spatial blocks -> per-block losses."""
    nb, N, C = feats_all.shape
    kernel = functools.partial(_supcon_block_kernel,
                               temperature=temperature, beta=beta)
    grid_spec = pltpu.PrefetchScalarGridSpec(
        num_scalar_prefetch=1,
        grid=(nb,),
        in_specs=[
            pl.BlockSpec((None, N, C), lambda b, v: (b, 0, 0)),   # features
            pl.BlockSpec((None, N, 1), lambda b, v: (b, 0, 0)),   # labels (col)
            pl.BlockSpec((None, 1, N), lambda b, v: (b, 0, 0)),   # labels (row)
            pl.BlockSpec((None, N, 1), lambda b, v: (b, 0, 0)),   # cos sim (col)
            pl.BlockSpec((None, 1, N), lambda b, v: (b, 0, 0)),   # cos sim (row)
        ],
        out_specs=pl.BlockSpec((None, 1, _OUT_LANES), lambda b, v: (b, 0, 0)),
    )
    out = pl.pallas_call(
        kernel,
        grid_spec=grid_spec,
        out_shape=jax.ShapeDtypeStruct((nb, 1, _OUT_LANES), jnp.float32),
        compiler_params=pltpu.CompilerParams(
            dimension_semantics=("parallel",)),      # blocks across v7x's 2 TCs
    )(valid_i32,
      feats_all,
      lab_all[:, :, None], lab_all[:, None, :],
      sim_all[:, :, None], sim_all[:, None, :])
    return out[:, 0, 0]                                            # [nb]


@functools.partial(jax.jit, static_argnames=("block_size", "temperature", "beta"))
def block_con_loss(features, labels, block_size=4, temperature=0.7, beta=0.1):
    """BlockConLoss.forward: SupConLoss per spatial block, mean over non-empty blocks."""
    B, V, C, H, W = features.shape
    assert V == 2, "SupConLoss forward requires exactly 2 views"
    assert H == W
    div = H // block_size
    bs = block_size
    nb = div * div
    N = V * B * bs * bs

    features = features.astype(jnp.float32)
    labels = labels.astype(jnp.float32)

    # ---- one vectorized layout pass over the whole image (no per-block slicing)
    x = features.reshape(B, V, C, div, bs, div, bs)
    feats_all = jnp.transpose(x, (3, 5, 1, 0, 4, 6, 2)).reshape(nb, N, C)

    l = labels.reshape(B, V, div, bs, div, bs)
    lab_all = jnp.transpose(l, (2, 4, 1, 0, 3, 5)).reshape(nb, N)

    # per-pixel cross-view cosine similarity (identical for both views)
    f0, f1 = features[:, 0], features[:, 1]                  # [B, C, H, W]
    num = jnp.sum(f0 * f1, axis=1)
    den = jnp.sqrt(jnp.sum(f0 * f0, axis=1)) * jnp.sqrt(jnp.sum(f1 * f1, axis=1))
    sim = num / jnp.maximum(den, 1e-8)                       # [B, H, W]
    s = jnp.transpose(sim.reshape(B, div, bs, div, bs),
                      (1, 3, 0, 2, 4)).reshape(nb, N // 2)
    sim_all = jnp.concatenate([s, s], axis=1)                # [nb, N]

    # Blocks whose labels are all background are skipped, matching the host-side
    # `if labels.sum() == 0: continue` of the reference, but without a sync.
    valid = jnp.sum(lab_all, axis=1) != 0.0
    valid_i32 = valid.astype(jnp.int32)

    losses = _batched_pallas_loss(feats_all, lab_all, sim_all, valid_i32,
                                  temperature=temperature, beta=beta)
    valid_f = valid.astype(jnp.float32)
    return jnp.sum(losses * valid_f) / jnp.maximum(jnp.sum(valid_f), 1.0)


def supcon_loss(features, labels, temperature=0.7, beta=0.1):
    """SupConLoss.forward on the full input (== one block covering the image)."""
    return block_con_loss(features, labels, block_size=features.shape[-1],
                          temperature=temperature, beta=beta)


# --------------------------------------------------------------------------- #
# Pure-JAX reference (direct transcription of the PyTorch code) for validation.
# --------------------------------------------------------------------------- #
def _supcon_loss_ref(block_feats, block_labels, temperature, beta):
    B, V, C, h, w = block_feats.shape
    cf = jnp.concatenate([block_feats[:, v] for v in range(V)], axis=0)
    feat = jnp.transpose(cf, (0, 2, 3, 1)).reshape(-1, C).astype(jnp.float32)
    n = feat.shape[0]
    logits = jnp.matmul(feat, feat.T,
                        precision=jax.lax.Precision.HIGHEST) / temperature
    lab = jnp.concatenate([block_labels[:, v] for v in range(V)],
                          axis=0).reshape(-1, 1).astype(jnp.float32)
    mask = (lab == lab.T).astype(jnp.float32)
    non_bg = (lab[:, 0] != 0).astype(jnp.float32)
    logits_mask = 1.0 - jnp.eye(n, dtype=jnp.float32)
    mask = mask * logits_mask
    neg_mask = 1.0 - mask
    f1, f2 = cf[:B], cf[B:]
    num = jnp.sum(f1 * f2, axis=1)
    den = jnp.sqrt(jnp.sum(f1 * f1, axis=1)) * jnp.sqrt(jnp.sum(f2 * f2, axis=1))
    sim = (num / jnp.maximum(den, 1e-8)).reshape(-1)
    sim = jnp.concatenate([sim, sim], axis=0).reshape(-1, 1)
    sim_hard = mask * jnp.sqrt(sim * sim.T)
    lab_hard = mask * jnp.sqrt(lab * lab.T)
    exp_logits = jnp.exp(logits) * logits_mask * jnp.exp(sim_hard * (-beta))
    rs = n // 2
    ones = jnp.ones((rs, rs), jnp.float32)
    losses = []
    for i in range(2):
        for j in range(2):
            region = exp_logits[i * rs:(i + 1) * rs, j * rs:(j + 1) * rs]
            rf = jnp.concatenate(
                [jnp.concatenate([region, ones], axis=0),
                 jnp.concatenate([ones, ones], axis=0)], axis=1)
            neg = jnp.sum(jnp.exp(logits) * neg_mask, axis=1, keepdims=True)
            log_prob = logits - jnp.log(rf + neg)
            mlpp = jnp.sum(lab_hard * mask * log_prob, axis=1) / jnp.sum(mask, axis=1)
            losses.append(jnp.sum(-mlpp * non_bg) / jnp.sum(non_bg))
    return jnp.mean(jnp.stack(losses))


def block_con_loss_ref(features, labels, block_size=4, temperature=0.7, beta=0.1):
    H = features.shape[-1]
    div = H // block_size
    out = []
    for i in range(div):
        for j in range(div):
            bf = features[:, :, :, i * block_size:(i + 1) * block_size,
                          j * block_size:(j + 1) * block_size]
            bl = labels[:, :, i * block_size:(i + 1) * block_size,
                        j * block_size:(j + 1) * block_size]
            if float(jnp.sum(bl)) == 0.0:
                continue
            out.append(_supcon_loss_ref(bf, bl, temperature, beta))
    if not out:
        return jnp.float32(0.0)
    return jnp.mean(jnp.stack(out))


if __name__ == "__main__":
    key = jax.random.PRNGKey(0)
    kf, kl = jax.random.split(key)

    B, V, C, H, W = 2, 2, 8, 8, 8
    block_size = 4          # div_num = 2 -> 4 blocks, N = 64 pixels per block

    features = jax.random.uniform(kf, (B, V, C, H, W), jnp.float32, 0.1, 1.0)
    labels = jax.random.randint(kl, (B, V, H, W), 0, 3).astype(jnp.float32)

    # 1) SupConLoss on the whole input (single block covering the image).
    loss_full = supcon_loss(features, labels, temperature=0.7, beta=0.1)
    jax.block_until_ready(loss_full)
    ref_full = _supcon_loss_ref(features, labels, 0.7, 0.1)
    assert bool(jnp.isfinite(loss_full)), "full-image loss is not finite"
    assert bool(jnp.allclose(loss_full, ref_full, rtol=2.5e-2, atol=1e-2)), (
        float(loss_full), float(ref_full))

    # 2) BlockConLoss, every block containing foreground.
    loss_blk = block_con_loss(features, labels, block_size=block_size,
                              temperature=0.7, beta=0.1)
    jax.block_until_ready(loss_blk)
    ref_blk = block_con_loss_ref(features, labels, block_size=block_size,
                                 temperature=0.7, beta=0.1)
    assert bool(jnp.isfinite(loss_blk)), "block loss is not finite"
    assert bool(jnp.allclose(loss_blk, ref_blk, rtol=2.5e-2, atol=1e-2)), (
        float(loss_blk), float(ref_blk))

    # 3) One pure-background block -> exercises the pl.when skip / masked mean.
    labels_bg = labels.at[:, :, :block_size, :block_size].set(0.0)
    loss_skip = block_con_loss(features, labels_bg, block_size=block_size,
                               temperature=0.7, beta=0.1)
    jax.block_until_ready(loss_skip)
    ref_skip = block_con_loss_ref(features, labels_bg, block_size=block_size,
                                  temperature=0.7, beta=0.1)
    assert bool(jnp.isfinite(loss_skip)), "skip-case loss is not finite"
    assert bool(jnp.allclose(loss_skip, ref_skip, rtol=2.5e-2, atol=1e-2)), (
        float(loss_skip), float(ref_skip))

    print("KERNEL_OK")
</pallas_src>

<mosaic_0001>
module attributes {stable_mosaic.version = 11 : i64} {
  func.func @_supcon_block_kernel(%arg0: i32, %arg1: memref<1xi32, #tpu.memory_space<smem>>, %arg2: memref<1x256x8xf32, #tpu.memory_space<vmem>>, %arg3: memref<1x256x1xf32, #tpu.memory_space<vmem>>, %arg4: memref<1x1x256xf32, #tpu.memory_space<vmem>>, %arg5: memref<1x256x1xf32, #tpu.memory_space<vmem>>, %arg6: memref<1x1x256xf32, #tpu.memory_space<vmem>>, %arg7: memref<1x1x128xf32, #tpu.memory_space<vmem>>) attributes {dimension_semantics = [#tpu.dimension_semantics<parallel>], iteration_bounds = array<i64: 1>, scalar_prefetch = 1 : i64, scratch_operands = 0 : i64, tpu.core_type = #tpu.core_type<tc>, window_params = [{transform_indices = @transform_0, window_bounds = array<i64: 1, 256, 8>}, {transform_indices = @transform_1, window_bounds = array<i64: 1, 256, 1>}, {transform_indices = @transform_2, window_bounds = array<i64: 1, 1, 256>}, {transform_indices = @transform_3, window_bounds = array<i64: 1, 256, 1>}, {transform_indices = @transform_4, window_bounds = array<i64: 1, 1, 256>}, {transform_indices = @transform_5, window_bounds = array<i64: 1, 1, 128>}]} {
    %cst = arith.constant 0.000000e+00 : f32
    %0 = vector.broadcast %cst : f32 to vector<1x128xf32>
    %c0 = arith.constant 0 : index
    %c0_0 = arith.constant 0 : index
    %c0_1 = arith.constant 0 : index
    %1 = vector.load %arg7[%c0, %c0_0, %c0_1] : memref<1x1x128xf32, #tpu.memory_space<vmem>>, vector<1x1x128xf32>
    %2 = vector.shape_cast %1 : vector<1x1x128xf32> to vector<1x128xf32>
    %3 = vector.shape_cast %0 : vector<1x128xf32> to vector<1x1x128xf32>
    tpu.vector_store %arg7[%c0, %c0_0, %c0_1], %3 {strides = array<i32>} : memref<1x1x128xf32, #tpu.memory_space<vmem>>, vector<1x1x128xf32>,
    %4 = arith.index_cast %arg0 : i32 to index
    %5 = memref.load %arg1[%4] : memref<1xi32, #tpu.memory_space<smem>>
    %c0_i32 = arith.constant 0 : i32
    %6 = arith.cmpi ne, %5, %c0_i32 : i32
    %7 = arith.extui %6 : i1 to i32
    %c0_i32_2 = arith.constant 0 : i32
    %8 = arith.cmpi ne, %7, %c0_i32_2 : i32
    scf.if %8 {
      %c0_3 = arith.constant 0 : index
      %c0_4 = arith.constant 0 : index
      %c0_5 = arith.constant 0 : index
      %9 = vector.load %arg2[%c0_3, %c0_4, %c0_5] : memref<1x256x8xf32, #tpu.memory_space<vmem>>, vector<1x256x8xf32>
      %10 = vector.shape_cast %9 : vector<1x256x8xf32> to vector<256x8xf32>
      %c0_6 = arith.constant 0 : index
      %c0_7 = arith.constant 0 : index
      %c0_8 = arith.constant 0 : index
      %11 = vector.load %arg3[%c0_6, %c0_7, %c0_8] : memref<1x256x1xf32, #tpu.memory_space<vmem>>, vector<1x256x1xf32>
      %12 = vector.shape_cast %11 : vector<1x256x1xf32> to vector<256x1xf32>
      %c0_9 = arith.constant 0 : index
      %c0_10 = arith.constant 0 : index
      %c0_11 = arith.constant 0 : index
      %13 = vector.load %arg4[%c0_9, %c0_10, %c0_11] : memref<1x1x256xf32, #tpu.memory_space<vmem>>, vector<1x1x256xf32>
      %14 = vector.shape_cast %13 : vector<1x1x256xf32> to vector<1x256xf32>
      %c0_12 = arith.constant 0 : index
      %c0_13 = arith.constant 0 : index
      %c0_14 = arith.constant 0 : index
      %15 = vector.load %arg5[%c0_12, %c0_13, %c0_14] : memref<1x256x1xf32, #tpu.memory_space<vmem>>, vector<1x256x1xf32>
      %16 = vector.shape_cast %15 : vector<1x256x1xf32> to vector<256x1xf32>
      %c0_15 = arith.constant 0 : index
      %c0_16 = arith.constant 0 : index
      %c0_17 = arith.constant 0 : index
      %17 = vector.load %arg6[%c0_15, %c0_16, %c0_17] : memref<1x1x256xf32, #tpu.memory_space<vmem>>, vector<1x1x256xf32>
      %18 = vector.shape_cast %17 : vector<1x1x256xf32> to vector<1x256xf32>
      %cst_18 = arith.constant dense<0.000000e+00> : vector<256x256xf32>
      %19 = tpu.matmul %10, %10, %cst_18 {dimension_numbers = #tpu.dot_dimension_numbers<[1], [1], [0], [0], [0, 0, 1, 0], [], []>} : vector<256x8xf32>, vector<256x8xf32>, vector<256x256xf32> -> vector<256x256xf32>
      %cst_19 = arith.constant 0.699999988 : f32
      %20 = vector.broadcast %cst_19 : f32 to vector<256x256xf32>
      %21 = arith.divf %19, %20 : vector<256x256xf32>
      %22 = tpu.iota {dimensions = array<i32: 0>} : vector<256x256xi32>
      %23 = tpu.iota {dimensions = array<i32: 1>} : vector<256x256xi32>
      %24 = arith.cmpi ne, %22, %23 : vector<256x256xi32>
      %cst_20 = arith.constant 1.000000e+00 : f32
      %cst_21 = arith.constant 0.000000e+00 : f32
      %25 = vector.broadcast %cst_20 : f32 to vector<256x256xf32>
      %26 = vector.broadcast %cst_21 : f32 to vector<256x256xf32>
      %27 = arith.select %24, %25, %26 : vector<256x256xi1>, vector<256x256xf32>
      %28 = vector.broadcast %12 : vector<256x1xf32> to vector<256x256xf32>
      %29 = vector.broadcast %14 : vector<1x256xf32> to vector<256x256xf32>
      %30 = arith.cmpf oeq, %28, %29 : vector<256x256xf32>
      %31 = arith.andi %30, %24 : vector<256x256xi1>
      %cst_22 = arith.constant 1.000000e+00 : f32
      %cst_23 = arith.constant 0.000000e+00 : f32
      %32 = vector.broadcast %cst_22 : f32 to vector<256x256xf32>
      %33 = vector.broadcast %cst_23 : f32 to vector<256x256xf32>
      %34 = arith.select %31, %32, %33 : vector<256x256xi1>, vector<256x256xf32>
      %cst_24 = arith.constant 1.000000e+00 : f32
      %35 = vector.broadcast %cst_24 : f32 to vector<256x256xf32>
      %36 = arith.subf %35, %34 : vector<256x256xf32>
      %37 = math.sqrt %12 : vector<256x1xf32>
      %38 = math.sqrt %14 : vector<1x256xf32>
      %39 = vector.broadcast %37 : vector<256x1xf32> to vector<256x256xf32>
      %40 = vector.broadcast %38 : vector<1x256xf32> to vector<256x256xf32>
      %41 = arith.mulf %39, %40 : vector<256x256xf32>
      %42 = arith.mulf %34, %41 : vector<256x256xf32>
      %43 = vector.broadcast %16 : vector<256x1xf32> to vector<256x256xf32>
      %44 = vector.broadcast %18 : vector<1x256xf32> to vector<256x256xf32>
      %45 = arith.mulf %43, %44 : vector<256x256xf32>
      %46 = math.sqrt %45 : vector<256x256xf32>
      %47 = arith.mulf %34, %46 : vector<256x256xf32>
      %cst_25 = arith.constant 1.000000e-01 : f32
      %48 = vector.broadcast %cst_25 : f32 to vector<256x256xf32>
      %49 = arith.mulf %48, %47 : vector<256x256xf32>
      %50 = arith.subf %21, %49 : vector<256x256xf32>
      %51 = math.exp %50 : vector<256x256xf32>
      %52 = arith.mulf %51, %27 : vector<256x256xf32>
      %53 = arith.mulf %51, %36 : vector<256x256xf32>
      %cst_26 = arith.constant dense<0.000000e+00> : vector<256xf32>
      %54 = vector.multi_reduction <add>, %53, %cst_26 [1] : vector<256x256xf32> to vector<256xf32>
      %55 = vector.shape_cast %54 : vector<256xf32> to vector<256x1xf32>
      %cst_27 = arith.constant dense<0.000000e+00> : vector<256xf32>
      %56 = vector.multi_reduction <add>, %34, %cst_27 [1] : vector<256x256xf32> to vector<256xf32>
      %57 = vector.shape_cast %56 : vector<256xf32> to vector<256x1xf32>
      %cst_28 = arith.constant 0.000000e+00 : f32
      %58 = vector.broadcast %cst_28 : f32 to vector<256x1xf32>
      %59 = arith.cmpf one, %12, %58 : vector<256x1xf32>
      %cst_29 = arith.constant 1.000000e+00 : f32
      %cst_30 = arith.constant 0.000000e+00 : f32
      %60 = vector.broadcast %cst_29 : f32 to vector<256x1xf32>
      %61 = vector.broadcast %cst_30 : f32 to vector<256x1xf32>
      %62 = arith.select %59, %60, %61 : vector<256x1xi1>, vector<256x1xf32>
      %63 = vector.shape_cast %62 : vector<256x1xf32> to vector<1x256x1xf32>
      %cst_31 = arith.constant dense<0.000000e+00> : vector<1xf32>
      %64 = vector.multi_reduction <add>, %63, %cst_31 [1, 2] : vector<1x256x1xf32> to vector<1xf32>
      %65 = vector.shape_cast %64 : vector<1xf32> to vector<1x1x1xf32>
      %66 = vector.extract %65[0, 0, 0] : f32 from vector<1x1x1xf32>
      %cst_32 = arith.constant 1.000000e+00 : f32
      %67 = arith.divf %cst_32, %66 : f32
      %cst_33 = arith.constant 1.000000e+00 : f32
      %68 = vector.broadcast %cst_33 : f32 to vector<256x1xf32>
      %69 = arith.addf %68, %55 : vector<256x1xf32>
      %70 = math.log %69 : vector<256x1xf32>
      %71 = arith.mulf %42, %21 : vector<256x256xf32>
      %cst_34 = arith.constant dense<0.000000e+00> : vector<256xf32>
      %72 = vector.multi_reduction <add>, %71, %cst_34 [1] : vector<256x256xf32> to vector<256xf32>
      %73 = vector.shape_cast %72 : vector<256xf32> to vector<256x1xf32>
      %cst_35 = arith.constant dense<0.000000e+00> : vector<256xf32>
      %74 = vector.multi_reduction <add>, %42, %cst_35 [1] : vector<256x256xf32> to vector<256xf32>
      %75 = vector.shape_cast %74 : vector<256xf32> to vector<256x1xf32>
      %76 = arith.mulf %75, %70 : vector<256x1xf32>
      %77 = arith.subf %73, %76 : vector<256x1xf32>
      %78 = arith.divf %77, %57 : vector<256x1xf32>
      %cst_36 = arith.constant 0.000000e+00 : f32
      %79 = vector.broadcast %cst_36 : f32 to vector<256x1xf32>
      %80 = arith.subf %79, %78 : vector<256x1xf32>
      %81 = arith.mulf %80, %62 : vector<256x1xf32>
      %82 = vector.shape_cast %81 : vector<256x1xf32> to vector<1x256x1xf32>
      %cst_37 = arith.constant dense<0.000000e+00> : vector<1xf32>
      %83 = vector.multi_reduction <add>, %82, %cst_37 [1, 2] : vector<1x256x1xf32> to vector<1xf32>
      %84 = vector.shape_cast %83 : vector<1xf32> to vector<1x1x1xf32>
      %85 = vector.extract %84[0, 0, 0] : f32 from vector<1x1x1xf32>
      %86 = arith.mulf %85, %67 : f32
      %87 = vector.extract_strided_slice %55 {offsets = [0, 0], sizes = [128, 1], strides = [1, 1]} : vector<256x1xf32> to vector<128x1xf32>
      %88 = vector.extract_strided_slice %70 {offsets = [0, 0], sizes = [128, 1], strides = [1, 1]} : vector<256x1xf32> to vector<128x1xf32>
      %89 = vector.extract_strided_slice %42 {offsets = [0, 0], sizes = [128, 128], strides = [1, 1]} : vector<256x256xf32> to vector<128x128xf32>
      %90 = vector.extract_strided_slice %62 {offsets = [0, 0], sizes = [128, 1], strides = [1, 1]} : vector<256x1xf32> to vector<128x1xf32>
      %91 = vector.extract_strided_slice %57 {offsets = [0, 0], sizes = [128, 1], strides = [1, 1]} : vector<256x1xf32> to vector<128x1xf32>
      %92 = arith.divf %90, %91 : vector<128x1xf32>
      %cst_38 = arith.constant dense<0.000000e+00> : vector<128xf32>
      %93 = vector.multi_reduction <add>, %89, %cst_38 [1] : vector<128x128xf32> to vector<128xf32>
      %94 = vector.shape_cast %93 : vector<128xf32> to vector<128x1xf32>
      %95 = arith.mulf %94, %88 : vector<128x1xf32>
      %96 = vector.extract_strided_slice %52 {offsets = [0, 0], sizes = [128, 128], strides = [1, 1]} : vector<256x256xf32> to vector<128x128xf32>
      %97 = vector.broadcast %87 : vector<128x1xf32> to vector<128x128xf32>
      %98 = arith.addf %96, %97 : vector<128x128xf32>
      %99 = math.log %98 : vector<128x128xf32>
      %100 = arith.mulf %89, %99 : vector<128x128xf32>
      %cst_39 = arith.constant dense<0.000000e+00> : vector<128xf32>
      %101 = vector.multi_reduction <add>, %100, %cst_39 [1] : vector<128x128xf32> to vector<128xf32>
      %102 = vector.shape_cast %101 : vector<128xf32> to vector<128x1xf32>
      %103 = arith.subf %95, %102 : vector<128x1xf32>
      %104 = arith.mulf %103, %92 : vector<128x1xf32>
      %105 = vector.shape_cast %104 : vector<128x1xf32> to vector<1x128x1xf32>
      %cst_40 = arith.constant dense<0.000000e+00> : vector<1xf32>
      %106 = vector.multi_reduction <add>, %105, %cst_40 [1, 2] : vector<1x128x1xf32> to vector<1xf32>
      %107 = vector.shape_cast %106 : vector<1xf32> to vector<1x1x1xf32>
      %108 = vector.extract %107[0, 0, 0] : f32 from vector<1x1x1xf32>
      %cst_41 = arith.constant 0.000000e+00 : f32
      %109 = arith.addf %cst_41, %108 : f32
      %110 = vector.extract_strided_slice %52 {offsets = [0, 128], sizes = [128, 128], strides = [1, 1]} : vector<256x256xf32> to vector<128x128xf32>
      %111 = vector.broadcast %87 : vector<128x1xf32> to vector<128x128xf32>
      %112 = arith.addf %110, %111 : vector<128x128xf32>
      %113 = math.log %112 : vector<128x128xf32>
      %114 = arith.mulf %89, %113 : vector<128x128xf32>
      %cst_42 = arith.constant dense<0.000000e+00> : vector<128xf32>
      %115 = vector.multi_reduction <add>, %114, %cst_42 [1] : vector<128x128xf32> to vector<128xf32>
      %116 = vector.shape_cast %115 : vector<128xf32> to vector<128x1xf32>
      %117 = arith.subf %95, %116 : vector<128x1xf32>
      %118 = arith.mulf %117, %92 : vector<128x1xf32>
      %119 = vector.shape_cast %118 : vector<128x1xf32> to vector<1x128x1xf32>
      %cst_43 = arith.constant dense<0.000000e+00> : vector<1xf32>
      %120 = vector.multi_reduction <add>, %119, %cst_43 [1, 2] : vector<1x128x1xf32> to vector<1xf32>
      %121 = vector.shape_cast %120 : vector<1xf32> to vector<1x1x1xf32>
      %122 = vector.extract %121[0, 0, 0] : f32 from vector<1x1x1xf32>
      %123 = arith.addf %109, %122 : f32
      %124 = vector.extract_strided_slice %52 {offsets = [128, 0], sizes = [128, 128], strides = [1, 1]} : vector<256x256xf32> to vector<128x128xf32>
      %125 = vector.broadcast %87 : vector<128x1xf32> to vector<128x128xf32>
      %126 = arith.addf %124, %125 : vector<128x128xf32>
      %127 = math.log %126 : vector<128x128xf32>
      %128 = arith.mulf %89, %127 : vector<128x128xf32>
      %cst_44 = arith.constant dense<0.000000e+00> : vector<128xf32>
      %129 = vector.multi_reduction <add>, %128, %cst_44 [1] : vector<128x128xf32> to vector<128xf32>
      %130 = vector.shape_cast %129 : vector<128xf32> to vector<128x1xf32>
      %131 = arith.subf %95, %130 : vector<128x1xf32>
      %132 = arith.mulf %131, %92 : vector<128x1xf32>
      %133 = vector.shape_cast %132 : vector<128x1xf32> to vector<1x128x1xf32>
      %cst_45 = arith.constant dense<0.000000e+00> : vector<1xf32>
      %134 = vector.multi_reduction <add>, %133, %cst_45 [1, 2] : vector<1x128x1xf32> to vector<1xf32>
      %135 = vector.shape_cast %134 : vector<1xf32> to vector<1x1x1xf32>
      %136 = vector.extract %135[0, 0, 0] : f32 from vector<1x1x1xf32>
      %137 = arith.addf %123, %136 : f32
      %138 = vector.extract_strided_slice %52 {offsets = [128, 128], sizes = [128, 128], strides = [1, 1]} : vector<256x256xf32> to vector<128x128xf32>
      %139 = vector.broadcast %87 : vector<128x1xf32> to vector<128x128xf32>
      %140 = arith.addf %138, %139 : vector<128x128xf32>
      %141 = math.log %140 : vector<128x128xf32>
      %142 = arith.mulf %89, %141 : vector<128x128xf32>
      %cst_46 = arith.constant dense<0.000000e+00> : vector<128xf32>
      %143 = vector.multi_reduction <add>, %142, %cst_46 [1] : vector<128x128xf32> to vector<128xf32>
      %144 = vector.shape_cast %143 : vector<128xf32> to vector<128x1xf32>
      %145 = arith.subf %95, %144 : vector<128x1xf32>
      %146 = arith.mulf %145, %92 : vector<128x1xf32>
      %147 = vector.shape_cast %146 : vector<128x1xf32> to vector<1x128x1xf32>
      %cst_47 = arith.constant dense<0.000000e+00> : vector<1xf32>
      %148 = vector.multi_reduction <add>, %147, %cst_47 [1, 2] : vector<1x128x1xf32> to vector<1xf32>
      %149 = vector.shape_cast %148 : vector<1xf32> to vector<1x1x1xf32>
      %150 = vector.extract %149[0, 0, 0] : f32 from vector<1x1x1xf32>
      %151 = arith.addf %137, %150 : f32
      %cst_48 = arith.constant 2.500000e-01 : f32
      %152 = arith.mulf %cst_48, %151 : f32
      %153 = arith.mulf %152, %67 : f32
      %154 = arith.subf %86, %153 : f32
      %155 = vector.broadcast %154 : f32 to vector<1x128xf32>
      %c0_49 = arith.constant 0 : index
      %c0_50 = arith.constant 0 : index
      %c0_51 = arith.constant 0 : index
      %156 = vector.load %arg7[%c0_49, %c0_50, %c0_51] : memref<1x1x128xf32, #tpu.memory_space<vmem>>, vector<1x1x128xf32>
      %157 = vector.shape_cast %156 : vector<1x1x128xf32> to vector<1x128xf32>
      %158 = vector.shape_cast %155 : vector<1x128xf32> to vector<1x1x128xf32>
      tpu.vector_store %arg7[%c0_49, %c0_50, %c0_51], %158 {strides = array<i32>} : memref<1x1x128xf32, #tpu.memory_space<vmem>>, vector<1x1x128xf32>,
    } else {
    }
    return
  }
  func.func @transform_0(%arg0: i32, %arg1: memref<1xi32, #tpu.memory_space<smem>>) -> (i32, i32, i32) {
    %c0_i32 = arith.constant 0 : i32
    %c0_i32_0 = arith.constant 0 : i32
    %c0_i32_1 = arith.constant 0 : i32
    return %arg0, %c0_i32, %c0_i32_0 : i32, i32, i32
  }
  func.func @transform_1(%arg0: i32, %arg1: memref<1xi32, #tpu.memory_space<smem>>) -> (i32, i32, i32) {
    %c0_i32 = arith.constant 0 : i32
    %c0_i32_0 = arith.constant 0 : i32
    %c0_i32_1 = arith.constant 0 : i32
    return %arg0, %c0_i32, %c0_i32_0 : i32, i32, i32
  }
  func.func @transform_2(%arg0: i32, %arg1: memref<1xi32, #tpu.memory_space<smem>>) -> (i32, i32, i32) {
    %c0_i32 = arith.constant 0 : i32
    %c0_i32_0 = arith.constant 0 : i32
    %c0_i32_1 = arith.constant 0 : i32
    return %arg0, %c0_i32, %c0_i32_0 : i32, i32, i32
  }
  func.func @transform_3(%arg0: i32, %arg1: memref<1xi32, #tpu.memory_space<smem>>) -> (i32, i32, i32) {
    %c0_i32 = arith.constant 0 : i32
    %c0_i32_0 = arith.constant 0 : i32
    %c0_i32_1 = arith.constant 0 : i32
    return %arg0, %c0_i32, %c0_i32_0 : i32, i32, i32
  }
  func.func @transform_4(%arg0: i32, %arg1: memref<1xi32, #tpu.memory_space<smem>>) -> (i32, i32, i32) {
    %c0_i32 = arith.constant 0 : i32
    %c0_i32_0 = arith.constant 0 : i32
    %c0_i32_1 = arith.constant 0 : i32
    return %arg0, %c0_i32, %c0_i32_0 : i32, i32, i32
  }
  func.func @transform_5(%arg0: i32, %arg1: memref<1xi32, #tpu.memory_space<smem>>) -> (i32, i32, i32) {
    %c0_i32 = arith.constant 0 : i32
    %c0_i32_0 = arith.constant 0 : i32
    %c0_i32_1 = arith.constant 0 : i32
    return %arg0, %c0_i32, %c0_i32_0 : i32, i32, i32
  }
}

</mosaic_0001>

<llo_original>
// kernel: block_con_loss.1
$region0: #{block_con_loss.1}
  #allocation0 [shape = 'u32[]', space=smem, size = 0x4, offset = 0x4, fixed_abs, tag = 'smem constant byte address 0x4 - core index']
  #allocation1 [shape = 'u32[144,128]{1,0:T(1,128)}', space=vmem, size = 0x12000, scoped, tag = 'internal scratch']
  #allocation2 [shape = 's32[1]{0}', space=sflag, size = 0x4, scoped, tag = 'scoped memory for block_con_loss.1']
  #allocation3 [shape = 's32[1]{0:T(128)S(6)}', space=smem, size = 0x200, scoped, tag = 'prefetched SMEM operand 0']
  %s0 = inlined_call_operand.<no memory space> [shape: s32[1], index: 0, kind: input, shape index: {}]
  %s1 = inlined_call_operand.vmem [shape: f32[1,256,8], index: 1, kind: input, shape index: {}]
  %s2 = inlined_call_operand.vmem [shape: f32[1,256,1], index: 2, kind: input, shape index: {}]
  %s3 = inlined_call_operand.vmem [shape: f32[1,1,256], index: 3, kind: input, shape index: {}]
  %s4 = inlined_call_operand.vmem [shape: f32[1,256,1], index: 4, kind: input, shape index: {}]
  %s5 = inlined_call_operand.vmem [shape: f32[1,1,256], index: 5, kind: input, shape index: {}]
  %s6 = inlined_call_operand.vmem [shape: f32[1,1,128], index: 6, kind: output, shape index: {}]
  %s7 = sld [smem:[#allocation0]]
  $region34: #{block_con_loss.1} parent=0
    _
  %s9 = ssub.s32 1, %s7
  %s10 = scalar_select 0, %s9, %s7
  %11 = sst [smem:[#allocation3]] %s0
  // Predicated region
  $region2: #{block_con_loss.1} parent=0 // pred_check
    _
  $region3: #{block_con_loss.1} parent=0 // pred_check_branch
    %13 = sbr.rel (0) target = $region5
  $region4: #{block_con_loss.1} parent=0 // pred_region
    _
  $region5: #{block_con_loss.1} parent=0 // pred_fallthru
    _
  // Predicated region
  $region6: #{block_con_loss.1} parent=0 // pred_check
    _
  $region7: #{block_con_loss.1} parent=0 // pred_check_branch
    %15 = sbr.rel (0) target = $region9
  $region8: #{block_con_loss.1} parent=0 // pred_region
    _
  $region9: #{block_con_loss.1} parent=0 // pred_fallthru
    _
  // Predicated region
  $region10: #{block_con_loss.1} parent=0 // pred_check
    _
  $region11: #{block_con_loss.1} parent=0 // pred_check_branch
    %17 = sbr.rel (0) target = $region13
  $region12: #{block_con_loss.1} parent=0 // pred_region
    _
  $region13: #{block_con_loss.1} parent=0 // pred_fallthru
    _
  // Predicated region
  $region14: #{block_con_loss.1} parent=0 // pred_check
    _
  $region15: #{block_con_loss.1} parent=0 // pred_check_branch
    %19 = sbr.rel (0) target = $region17
  $region16: #{block_con_loss.1} parent=0 // pred_region
    _
  $region17: #{block_con_loss.1} parent=0 // pred_fallthru
    _
  // Predicated region
  $region18: #{block_con_loss.1} parent=0 // pred_check
    _
  $region19: #{block_con_loss.1} parent=0 // pred_check_branch
    %21 = sbr.rel (0) target = $region21
  $region20: #{block_con_loss.1} parent=0 // pred_region
    _
  $region21: #{block_con_loss.1} parent=0 // pred_fallthru
    _
  %22 = vst [vmem:[%s6] sm:$0x1] 0.0
  %s23 = sld [smem:[#allocation3]]
  %p24 = scmp.ne.s32.totalorder %s23, 0
  // Predicated region
  $region22: #{block_con_loss.1} parent=0 // pred_check
    %p25 = pneg %p24
  $region23: #{block_con_loss.1} parent=0 // pred_check_branch
    %27 = sbr.rel (%p25) target = $region25
  $region24: #{block_con_loss.1} parent=0 // pred_region
    %v28 = vld [vmem:[%s1] sm:$0xff]
    %v29 = vld [vmem:[%s1 + $0x8] sm:$0xff]
    %v30 = vld [vmem:[%s1 + $0x10] sm:$0xff]
    %v31 = vld [vmem:[%s1 + $0x18] sm:$0xff]
    %v32 = vld [vmem:[%s1 + $0x20] sm:$0xff]
    %v33 = vld [vmem:[%s1 + $0x28] sm:$0xff]
    %v34 = vld [vmem:[%s1 + $0x30] sm:$0xff]
    %v35 = vld [vmem:[%s1 + $0x38] sm:$0xff]
    %v36 = vld [vmem:[%s1 + $0x40] sm:$0xff]
    %v37 = vld [vmem:[%s1 + $0x48] sm:$0xff]
    %v38 = vld [vmem:[%s1 + $0x50] sm:$0xff]
    %v39 = vld [vmem:[%s1 + $0x58] sm:$0xff]
    %v40 = vld [vmem:[%s1 + $0x60] sm:$0xff]
    %v41 = vld [vmem:[%s1 + $0x68] sm:$0xff]
    %v42 = vld [vmem:[%s1 + $0x70] sm:$0xff]
    %v43 = vld [vmem:[%s1 + $0x78] sm:$0xff]
    %v44 = vld [vmem:[%s1 + $0x80] sm:$0xff]
    %v45 = vld [vmem:[%s1 + $0x88] sm:$0xff]
    %v46 = vld [vmem:[%s1 + $0x90] sm:$0xff]
    %v47 = vld [vmem:[%s1 + $0x98] sm:$0xff]
    %v48 = vld [vmem:[%s1 + $0xa0] sm:$0xff]
    %v49 = vld [vmem:[%s1 + $0xa8] sm:$0xff]
    %v50 = vld [vmem:[%s1 + $0xb0] sm:$0xff]
    %v51 = vld [vmem:[%s1 + $0xb8] sm:$0xff]
    %v52 = vld [vmem:[%s1 + $0xc0] sm:$0xff]
    %v53 = vld [vmem:[%s1 + $0xc8] sm:$0xff]
    %v54 = vld [vmem:[%s1 + $0xd0] sm:$0xff]
    %v55 = vld [vmem:[%s1 + $0xd8] sm:$0xff]
    %v56 = vld [vmem:[%s1 + $0xe0] sm:$0xff]
    %v57 = vld [vmem:[%s1 + $0xe8] sm:$0xff]
    %v58 = vld [vmem:[%s1 + $0xf0] sm:$0xff]
    %v59 = vld [vmem:[%s1 + $0xf8] sm:$0xff]
    %v60 = vld [vmem:[%s2] sm:$0xff]
    %v61 = vld [vmem:[%s2 + $0x8] sm:$0xff]
    %v62 = vld [vmem:[%s2 + $0x10] sm:$0xff]
    %v63 = vld [vmem:[%s2 + $0x18] sm:$0xff]
    %v64 = vld [vmem:[%s2 + $0x20] sm:$0xff]
    %v65 = vld [vmem:[%s2 + $0x28] sm:$0xff]
    %v66 = vld [vmem:[%s2 + $0x30] sm:$0xff]
    %v67 = vld [vmem:[%s2 + $0x38] sm:$0xff]
    %v68 = vld [vmem:[%s2 + $0x40] sm:$0xff]
    %v69 = vld [vmem:[%s2 + $0x48] sm:$0xff]
    %v70 = vld [vmem:[%s2 + $0x50] sm:$0xff]
    %v71 = vld [vmem:[%s2 + $0x58] sm:$0xff]
    %v72 = vld [vmem:[%s2 + $0x60] sm:$0xff]
    %v73 = vld [vmem:[%s2 + $0x68] sm:$0xff]
    %v74 = vld [vmem:[%s2 + $0x70] sm:$0xff]
    %v75 = vld [vmem:[%s2 + $0x78] sm:$0xff]
    %v76 = vld [vmem:[%s2 + $0x80] sm:$0xff]
    %v77 = vld [vmem:[%s2 + $0x88] sm:$0xff]
    %v78 = vld [vmem:[%s2 + $0x90] sm:$0xff]
    %v79 = vld [vmem:[%s2 + $0x98] sm:$0xff]
    %v80 = vld [vmem:[%s2 + $0xa0] sm:$0xff]
    %v81 = vld [vmem:[%s2 + $0xa8] sm:$0xff]
    %v82 = vld [vmem:[%s2 + $0xb0] sm:$0xff]
    %v83 = vld [vmem:[%s2 + $0xb8] sm:$0xff]
    %v84 = vld [vmem:[%s2 + $0xc0] sm:$0xff]
    %v85 = vld [vmem:[%s2 + $0xc8] sm:$0xff]
    %v86 = vld [vmem:[%s2 + $0xd0] sm:$0xff]
    %v87 = vld [vmem:[%s2 + $0xd8] sm:$0xff]
    %v88 = vld [vmem:[%s2 + $0xe0] sm:$0xff]
    %v89 = vld [vmem:[%s2 + $0xe8] sm:$0xff]
    %v90 = vld [vmem:[%s2 + $0xf0] sm:$0xff]
    %v91 = vld [vmem:[%s2 + $0xf8] sm:$0xff]
    %v92 = vld [vmem:[%s3] sm:$0x3]
    %v93 = vld [vmem:[%s4] sm:$0xff]
    %v94 = vld [vmem:[%s4 + $0x8] sm:$0xff]
    %v95 = vld [vmem:[%s4 + $0x10] sm:$0xff]
    %v96 = vld [vmem:[%s4 + $0x18] sm:$0xff]
    %v97 = vld [vmem:[%s4 + $0x20] sm:$0xff]
    %v98 = vld [vmem:[%s4 + $0x28] sm:$0xff]
    %v99 = vld [vmem:[%s4 + $0x30] sm:$0xff]
    %v100 = vld [vmem:[%s4 + $0x38] sm:$0xff]
    %v101 = vld [vmem:[%s4 + $0x40] sm:$0xff]
    %v102 = vld [vmem:[%s4 + $0x48] sm:$0xff]
    %v103 = vld [vmem:[%s4 + $0x50] sm:$0xff]
    %v104 = vld [vmem:[%s4 + $0x58] sm:$0xff]
    %v105 = vld [vmem:[%s4 + $0x60] sm:$0xff]
    %v106 = vld [vmem:[%s4 + $0x68] sm:$0xff]
    %v107 = vld [vmem:[%s4 + $0x70] sm:$0xff]
    %v108 = vld [vmem:[%s4 + $0x78] sm:$0xff]
    %v109 = vld [vmem:[%s4 + $0x80] sm:$0xff]
    %v110 = vld [vmem:[%s4 + $0x88] sm:$0xff]
    %v111 = vld [vmem:[%s4 + $0x90] sm:$0xff]
    %v112 = vld [vmem:[%s4 + $0x98] sm:$0xff]
    %v113 = vld [vmem:[%s4 + $0xa0] sm:$0xff]
    %v114 = vld [vmem:[%s4 + $0xa8] sm:$0xff]
    %v115 = vld [vmem:[%s4 + $0xb0] sm:$0xff]
    %v116 = vld [vmem:[%s4 + $0xb8] sm:$0xff]
    %v117 = vld [vmem:[%s4 + $0xc0] sm:$0xff]
    %v118 = vld [vmem:[%s4 + $0xc8] sm:$0xff]
    %v119 = vld [vmem:[%s4 + $0xd0] sm:$0xff]
    %v120 = vld [vmem:[%s4 + $0xd8] sm:$0xff]
    %v121 = vld [vmem:[%s4 + $0xe0] sm:$0xff]
    %v122 = vld [vmem:[%s4 + $0xe8] sm:$0xff]
    %v123 = vld [vmem:[%s4 + $0xf0] sm:$0xff]
    %v124 = vld [vmem:[%s4 + $0xf8] sm:$0xff]
    %v125 = vld [vmem:[%s5] sm:$0x3]
    %vm126 = vcmask 64512
    %v128 = vsel %vm126, %v28, 0
    %v131 = vsel %vm126, %v29, 0
    %v134 = vsel %vm126, %v30, 0
    %v137 = vsel %vm126, %v31, 0
    %v140 = vsel %vm126, %v32, 0
    %v143 = vsel %vm126, %v33, 0
    %v146 = vsel %vm126, %v34, 0
    %v149 = vsel %vm126, %v35, 0
    %v152 = vsel %vm126, %v36, 0
    %v155 = vsel %vm126, %v37, 0
    %v158 = vsel %vm126, %v38, 0
    %v161 = vsel %vm126, %v39, 0
    %v164 = vsel %vm126, %v40, 0
    %v167 = vsel %vm126, %v41, 0
    %v170 = vsel %vm126, %v42, 0
    %v173 = vsel %vm126, %v43, 0
    %v176 = vsel %vm126, %v44, 0
    %v179 = vsel %vm126, %v45, 0
    %v182 = vsel %vm126, %v46, 0
    %v185 = vsel %vm126, %v47, 0
    %v188 = vsel %vm126, %v48, 0
    %v191 = vsel %vm126, %v49, 0
    %v194 = vsel %vm126, %v50, 0
    %v197 = vsel %vm126, %v51, 0
    %v200 = vsel %vm126, %v52, 0
    %v203 = vsel %vm126, %v53, 0
    %v206 = vsel %vm126, %v54, 0
    %v209 = vsel %vm126, %v55, 0
    %v212 = vsel %vm126, %v56, 0
    %v215 = vsel %vm126, %v57, 0
    %v218 = vsel %vm126, %v58, 0
    %v221 = vsel %vm126, %v59, 0
    %223 = vmatprep.subr.mxu0 0.0
    %224 = vmatpush1.xpose.msra.mxu0 %v128
    %225 = vmatprep.subr.mxu0 0.0
    %226 = vmatpush1.xpose.msra.mxu0 %v131
    %227 = vmatprep.subr.mxu0 0.0
    %228 = vmatpush1.xpose.msra.mxu0 %v134
    %229 = vmatprep.subr.mxu0 0.0
    %230 = vmatpush1.xpose.msra.mxu0 %v137
    %231 = vmatprep.subr.mxu0 0.0
    %232 = vmatpush1.xpose.msra.mxu0 %v140
    %233 = vmatprep.subr.mxu0 0.0
    %234 = vmatpush1.xpose.msra.mxu0 %v143
    %235 = vmatprep.subr.mxu0 0.0
    %236 = vmatpush1.xpose.msra.mxu0 %v146
    %237 = vmatprep.subr.mxu0 0.0
    %238 = vmatpush1.xpose.msra.mxu0 %v149
    %239 = vmatprep.subr.mxu0 0.0
    %240 = vmatpush1.xpose.msra.mxu0 %v152
    %241 = vmatprep.subr.mxu0 0.0
    %242 = vmatpush1.xpose.msra.mxu0 %v155
    %243 = vmatprep.subr.mxu0 0.0
    %244 = vmatpush1.xpose.msra.mxu0 %v158
    %245 = vmatprep.subr.mxu0 0.0
    %246 = vmatpush1.xpose.msra.mxu0 %v161
    %247 = vmatprep.subr.mxu0 0.0
    %248 = vmatpush1.xpose.msra.mxu0 %v164
    %249 = vmatprep.subr.mxu0 0.0
    %250 = vmatpush1.xpose.msra.mxu0 %v167
    %251 = vmatprep.subr.mxu0 0.0
    %252 = vmatpush1.xpose.msra.mxu0 %v170
    %253 = vmatprep.subr.mxu0 0.0
    %254 = vmatpush1.xpose.msra.mxu0 %v173
    %255 = vmatprep.subr.mxu0 0.0
    %256 = vmatpush1.xpose.msra.mxu0 %v176
    %257 = vmatprep.subr.mxu0 0.0
    %258 = vmatpush1.xpose.msra.mxu0 %v179
    %259 = vmatprep.subr.mxu0 0.0
    %260 = vmatpush1.xpose.msra.mxu0 %v182
    %261 = vmatprep.subr.mxu0 0.0
    %262 = vmatpush1.xpose.msra.mxu0 %v185
    %263 = vmatprep.subr.mxu0 0.0
    %264 = vmatpush1.xpose.msra.mxu0 %v188
    %265 = vmatprep.subr.mxu0 0.0
    %266 = vmatpush1.xpose.msra.mxu0 %v191
    %267 = vmatprep.subr.mxu0 0.0
    %268 = vmatpush1.xpose.msra.mxu0 %v194
    %269 = vmatprep.subr.mxu0 0.0
    %270 = vmatpush1.xpose.msra.mxu0 %v197
    %271 = vmatprep.subr.mxu0 0.0
    %272 = vmatpush1.xpose.msra.mxu0 %v200
    %273 = vmatprep.subr.mxu0 0.0
    %274 = vmatpush1.xpose.msra.mxu0 %v203
    %275 = vmatprep.subr.mxu0 0.0
    %276 = vmatpush1.xpose.msra.mxu0 %v206
    %277 = vmatprep.subr.mxu0 0.0
    %278 = vmatpush1.xpose.msra.mxu0 %v209
    %279 = vmatprep.subr.mxu0 0.0
    %280 = vmatpush1.xpose.msra.mxu0 %v212
    %281 = vmatprep.subr.mxu0 0.0
    %282 = vmatpush1.xpose.msra.mxu0 %v215
    %283 = vmatprep.subr.mxu0 0.0
    %284 = vmatpush1.xpose.msra.mxu0 %v218
    %285 = vmatprep.subr.mxu0 0.0
    %286 = vmatpush1.xpose.msra.mxu0 %v221
    %287 = vmatprep.mubr.f32.mxu0 0.0
    %288 = vmatmul.mubr.f32.gmra.mrb[0].mxu0 %v128
    %v289 = vpop.f32.mrb[0].mxu0
    %v290 = vadd.f32 0.0, %v289
    %v291 = vpop.f32.mrb[0].mxu0
    %v292 = vadd.f32 0.0, %v291
    %293 = vmatprep.mubr.f32.mxu0 0.0
    %294 = vmatmul.mubr.f32.gmra.mrb[0].mxu0 %v131
    %v295 = vpop.f32.mrb[0].mxu0
    %v296 = vadd.f32 0.0, %v295
    %v297 = vpop.f32.mrb[0].mxu0
    %v298 = vadd.f32 0.0, %v297
    %299 = vmatprep.mubr.f32.mxu0 0.0
    %300 = vmatmul.mubr.f32.gmra.mrb[0].mxu0 %v134
    %v301 = vpop.f32.mrb[0].mxu0
    %v302 = vadd.f32 0.0, %v301
    %v303 = vpop.f32.mrb[0].mxu0
    %v304 = vadd.f32 0.0, %v303
    %305 = vmatprep.mubr.f32.mxu0 0.0
    %306 = vmatmul.mubr.f32.gmra.mrb[0].mxu0 %v137
    %v307 = vpop.f32.mrb[0].mxu0
    %v308 = vadd.f32 0.0, %v307
    %v309 = vpop.f32.mrb[0].mxu0
    %v310 = vadd.f32 0.0, %v309
    %311 = vmatprep.mubr.f32.mxu0 0.0
    %312 = vmatmul.mubr.f32.gmra.mrb[0].mxu0 %v140
    %v313 = vpop.f32.mrb[0].mxu0
    %v314 = vadd.f32 0.0, %v313
    %v315 = vpop.f32.mrb[0].mxu0
    %v316 = vadd.f32 0.0, %v315
    %317 = vmatprep.mubr.f32.mxu0 0.0
    %318 = vmatmul.mubr.f32.gmra.mrb[0].mxu0 %v143
    %v319 = vpop.f32.mrb[0].mxu0
    %v320 = vadd.f32 0.0, %v319
    %v321 = vpop.f32.mrb[0].mxu0
    %v322 = vadd.f32 0.0, %v321
    %323 = vmatprep.mubr.f32.mxu0 0.0
    %324 = vmatmul.mubr.f32.gmra.mrb[0].mxu0 %v146
    %v325 = vpop.f32.mrb[0].mxu0
    %v326 = vadd.f32 0.0, %v325
    %v327 = vpop.f32.mrb[0].mxu0
    %v328 = vadd.f32 0.0, %v327
    %329 = vmatprep.mubr.f32.mxu0 0.0
    %330 = vmatmul.mubr.f32.gmra.mrb[0].mxu0 %v149
    %v331 = vpop.f32.mrb[0].mxu0
    %v332 = vadd.f32 0.0, %v331
    %v333 = vpop.f32.mrb[0].mxu0
    %v334 = vadd.f32 0.0, %v333
    %335 = vmatprep.mubr.f32.mxu0 0.0
    %336 = vmatmul.mubr.f32.gmra.mrb[0].mxu0 %v152
    %v337 = vpop.f32.mrb[0].mxu0
    %v338 = vadd.f32 0.0, %v337
    %v339 = vpop.f32.mrb[0].mxu0
    %v340 = vadd.f32 0.0, %v339
    %341 = vmatprep.mubr.f32.mxu0 0.0
    %342 = vmatmul.mubr.f32.gmra.mrb[0].mxu0 %v155
    %v343 = vpop.f32.mrb[0].mxu0
    %v344 = vadd.f32 0.0, %v343
    %v345 = vpop.f32.mrb[0].mxu0
    %v346 = vadd.f32 0.0, %v345
    %347 = vmatprep.mubr.f32.mxu0 0.0
    %348 = vmatmul.mubr.f32.gmra.mrb[0].mxu0 %v158
    %v349 = vpop.f32.mrb[0].mxu0
    %v350 = vadd.f32 0.0, %v349
    %v351 = vpop.f32.mrb[0].mxu0
    %v352 = vadd.f32 0.0, %v351
    %353 = vmatprep.mubr.f32.mxu0 0.0
    %354 = vmatmul.mubr.f32.gmra.mrb[0].mxu0 %v161
    %v355 = vpop.f32.mrb[0].mxu0
    %v356 = vadd.f32 0.0, %v355
    %v357 = vpop.f32.mrb[0].mxu0
    %v358 = vadd.f32 0.0, %v357
    %359 = vmatprep.mubr.f32.mxu0 0.0
    %360 = vmatmul.mubr.f32.gmra.mrb[0].mxu0 %v164
    %v361 = vpop.f32.mrb[0].mxu0
    %v362 = vadd.f32 0.0, %v361
    %v363 = vpop.f32.mrb[0].mxu0
    %v364 = vadd.f32 0.0, %v363
    %365 = vmatprep.mubr.f32.mxu0 0.0
    %366 = vmatmul.mubr.f32.gmra.mrb[0].mxu0 %v167
    %v367 = vpop.f32.mrb[0].mxu0
    %v368 = vadd.f32 0.0, %v367
    %v369 = vpop.f32.mrb[0].mxu0
    %v370 = vadd.f32 0.0, %v369
    %371 = vmatprep.mubr.f32.mxu0 0.0
    %372 = vmatmul.mubr.f32.gmra.mrb[0].mxu0 %v170
    %v373 = vpop.f32.mrb[0].mxu0
    %v374 = vadd.f32 0.0, %v373
    %v375 = vpop.f32.mrb[0].mxu0
    %v376 = vadd.f32 0.0, %v375
    %377 = vmatprep.mubr.f32.mxu0 0.0
    %378 = vmatmul.mubr.f32.gmra.mrb[0].mxu0 %v173
    %v379 = vpop.f32.mrb[0].mxu0
    %v380 = vadd.f32 0.0, %v379
    %v381 = vpop.f32.mrb[0].mxu0
    %v382 = vadd.f32 0.0, %v381
    %383 = vmatprep.mubr.f32.mxu0 0.0
    %384 = vmatmul.mubr.f32.gmra.mrb[0].mxu0 %v176
    %v385 = vpop.f32.mrb[0].mxu0
    %v386 = vadd.f32 0.0, %v385
    %v387 = vpop.f32.mrb[0].mxu0
    %v388 = vadd.f32 0.0, %v387
    %389 = vmatprep.mubr.f32.mxu0 0.0
    %390 = vmatmul.mubr.f32.gmra.mrb[0].mxu0 %v179
    %v391 = vpop.f32.mrb[0].mxu0
    %v392 = vadd.f32 0.0, %v391
    %v393 = vpop.f32.mrb[0].mxu0
    %v394 = vadd.f32 0.0, %v393
    %395 = vmatprep.mubr.f32.mxu0 0.0
    %396 = vmatmul.mubr.f32.gmra.mrb[0].mxu0 %v182
    %v397 = vpop.f32.mrb[0].mxu0
    %v398 = vadd.f32 0.0, %v397
    %v399 = vpop.f32.mrb[0].mxu0
    %v400 = vadd.f32 0.0, %v399
    %401 = vmatprep.mubr.f32.mxu0 0.0
    %402 = vmatmul.mubr.f32.gmra.mrb[0].mxu0 %v185
    %v403 = vpop.f32.mrb[0].mxu0
    %v404 = vadd.f32 0.0, %v403
    %v405 = vpop.f32.mrb[0].mxu0
    %v406 = vadd.f32 0.0, %v405
    %407 = vmatprep.mubr.f32.mxu0 0.0
    %408 = vmatmul.mubr.f32.gmra.mrb[0].mxu0 %v188
    %v409 = vpop.f32.mrb[0].mxu0
    %v410 = vadd.f32 0.0, %v409
    %v411 = vpop.f32.mrb[0].mxu0
    %v412 = vadd.f32 0.0, %v411
    %413 = vmatprep.mubr.f32.mxu0 0.0
    %414 = vmatmul.mubr.f32.gmra.mrb[0].mxu0 %v191
    %v415 = vpop.f32.mrb[0].mxu0
    %v416 = vadd.f32 0.0, %v415
    %v417 = vpop.f32.mrb[0].mxu0
    %v418 = vadd.f32 0.0, %v417
    %419 = vmatprep.mubr.f32.mxu0 0.0
    %420 = vmatmul.mubr.f32.gmra.mrb[0].mxu0 %v194
    %v421 = vpop.f32.mrb[0].mxu0
    %v422 = vadd.f32 0.0, %v421
    %v423 = vpop.f32.mrb[0].mxu0
    %v424 = vadd.f32 0.0, %v423
    %425 = vmatprep.mubr.f32.mxu0 0.0
    %426 = vmatmul.mubr.f32.gmra.mrb[0].mxu0 %v197
    %v427 = vpop.f32.mrb[0].mxu0
    %v428 = vadd.f32 0.0, %v427
    %v429 = vpop.f32.mrb[0].mxu0
    %v430 = vadd.f32 0.0, %v429
    %431 = vmatprep.mubr.f32.mxu0 0.0
    %432 = vmatmul.mubr.f32.gmra.mrb[0].mxu0 %v200
    %v433 = vpop.f32.mrb[0].mxu0
    %v434 = vadd.f32 0.0, %v433
    %v435 = vpop.f32.mrb[0].mxu0
    %v436 = vadd.f32 0.0, %v435
    %437 = vmatprep.mubr.f32.mxu0 0.0
    %438 = vmatmul.mubr.f32.gmra.mrb[0].mxu0 %v203
    %v439 = vpop.f32.mrb[0].mxu0
    %v440 = vadd.f32 0.0, %v439
    %v441 = vpop.f32.mrb[0].mxu0
    %v442 = vadd.f32 0.0, %v441
    %443 = vmatprep.mubr.f32.mxu0 0.0
    %444 = vmatmul.mubr.f32.gmra.mrb[0].mxu0 %v206
    %v445 = vpop.f32.mrb[0].mxu0
    %v446 = vadd.f32 0.0, %v445
    %v447 = vpop.f32.mrb[0].mxu0
    %v448 = vadd.f32 0.0, %v447
    %449 = vmatprep.mubr.f32.mxu0 0.0
    %450 = vmatmul.mubr.f32.gmra.mrb[0].mxu0 %v209
    %v451 = vpop.f32.mrb[0].mxu0
    %v452 = vadd.f32 0.0, %v451
    %v453 = vpop.f32.mrb[0].mxu0
    %v454 = vadd.f32 0.0, %v453
    %455 = vmatprep.mubr.f32.mxu0 0.0
    %456 = vmatmul.mubr.f32.gmra.mrb[0].mxu0 %v212
    %v457 = vpop.f32.mrb[0].mxu0
    %v458 = vadd.f32 0.0, %v457
    %v459 = vpop.f32.mrb[0].mxu0
    %v460 = vadd.f32 0.0, %v459
    %461 = vmatprep.mubr.f32.mxu0 0.0
    %462 = vmatmul.mubr.f32.gmra.mrb[0].mxu0 %v215
    %v463 = vpop.f32.mrb[0].mxu0
    %v464 = vadd.f32 0.0, %v463
    %v465 = vpop.f32.mrb[0].mxu0
    %v466 = vadd.f32 0.0, %v465
    %467 = vmatprep.mubr.f32.mxu0 0.0
    %468 = vmatmul.mubr.f32.gmra.mrb[0].mxu0 %v218
    %v469 = vpop.f32.mrb[0].mxu0
    %v470 = vadd.f32 0.0, %v469
    %v471 = vpop.f32.mrb[0].mxu0
    %v472 = vadd.f32 0.0, %v471
    %473 = vmatprep.mubr.f32.mxu0 0.0
    %474 = vmatmul.mubr.f32.gmra.mrb[0].mxu0 %v221
    %v475 = vpop.f32.mrb[0].mxu0
    %v476 = vadd.f32 0.0, %v475
    %v477 = vpop.f32.mrb[0].mxu0
    %v478 = vadd.f32 0.0, %v477
    %479 = vdwg.mxu0
    %v480 = vrcp.pop 0.7
    %v481 = vmul.f32 %v290, %v480
    %v482 = vmul.f32 %v292, %v480
    %v483 = vmul.f32 %v296, %v480
    %v484 = vmul.f32 %v298, %v480
    %v485 = vmul.f32 %v302, %v480
    %v486 = vmul.f32 %v304, %v480
    %v487 = vmul.f32 %v308, %v480
    %v488 = vmul.f32 %v310, %v480
    %v489 = vmul.f32 %v314, %v480
    %v490 = vmul.f32 %v316, %v480
    %v491 = vmul.f32 %v320, %v480
    %v492 = vmul.f32 %v322, %v480
    %v493 = vmul.f32 %v326, %v480
    %v494 = vmul.f32 %v328, %v480
    %v495 = vmul.f32 %v332, %v480
    %v496 = vmul.f32 %v334, %v480
    %v497 = vmul.f32 %v338, %v480
    %v498 = vmul.f32 %v340, %v480
    %v499 = vmul.f32 %v344, %v480
    %v500 = vmul.f32 %v346, %v480
    %v501 = vmul.f32 %v350, %v480
    %v502 = vmul.f32 %v352, %v480
    %v503 = vmul.f32 %v356, %v480
    %v504 = vmul.f32 %v358, %v480
    %v505 = vmul.f32 %v362, %v480
    %v506 = vmul.f32 %v364, %v480
    %v507 = vmul.f32 %v368, %v480
    %v508 = vmul.f32 %v370, %v480
    %v509 = vmul.f32 %v374, %v480
    %v510 = vmul.f32 %v376, %v480
    %v511 = vmul.f32 %v380, %v480
    %v512 = vmul.f32 %v382, %v480
    %v513 = vmul.f32 %v386, %v480
    %v514 = vmul.f32 %v388, %v480
    %v515 = vmul.f32 %v392, %v480
    %v516 = vmul.f32 %v394, %v480
    %v517 = vmul.f32 %v398, %v480
    %v518 = vmul.f32 %v400, %v480
    %v519 = vmul.f32 %v404, %v480
    %v520 = vmul.f32 %v406, %v480
    %v521 = vmul.f32 %v410, %v480
    %v522 = vmul.f32 %v412, %v480
    %v523 = vmul.f32 %v416, %v480
    %v524 = vmul.f32 %v418, %v480
    %v525 = vmul.f32 %v422, %v480
    %v526 = vmul.f32 %v424, %v480
    %v527 = vmul.f32 %v428, %v480
    %v528 = vmul.f32 %v430, %v480
    %v529 = vmul.f32 %v434, %v480
    %v530 = vmul.f32 %v436, %v480
    %v531 = vmul.f32 %v440, %v480
    %v532 = vmul.f32 %v442, %v480
    %v533 = vmul.f32 %v446, %v480
    %v534 = vmul.f32 %v448, %v480
    %v535 = vmul.f32 %v452, %v480
    %v536 = vmul.f32 %v454, %v480
    %v537 = vmul.f32 %v458, %v480
    %v538 = vmul.f32 %v460, %v480
    %v539 = vmul.f32 %v464, %v480
    %v540 = vmul.f32 %v466, %v480
    %v541 = vmul.f32 %v470, %v480
    %v542 = vmul.f32 %v472, %v480
    %v543 = vmul.f32 %v476, %v480
    %v544 = vmul.f32 %v478, %v480
    %v545 = vlaneseq
    %v546 = vshrl.u32 %v545, 7
    %v547 = vadd.s32 %v546, 8
    %v548 = vadd.s32 %v546, 16
    %v549 = vadd.s32 %v546, 24
    %v550 = vadd.s32 %v546, 32
    %v551 = vadd.s32 %v546, 40
    %v552 = vadd.s32 %v546, 48
    %v553 = vadd.s32 %v546, 56
    %v554 = vadd.s32 %v546, 64
    %v555 = vadd.s32 %v546, 72
    %v556 = vadd.s32 %v546, 80
    %v557 = vadd.s32 %v546, 88
    %v558 = vadd.s32 %v546, 96
    %v559 = vadd.s32 %v546, 104
    %v560 = vadd.s32 %v546, 112
    %v561 = vadd.s32 %v546, 120
    %v562 = vadd.s32 %v546, 128
    %v563 = vadd.s32 %v546, 136
    %v564 = vadd.s32 %v546, 144
    %v565 = vadd.s32 %v546, 152
    %v566 = vadd.s32 %v546, 160
    %v567 = vadd.s32 %v546, 168
    %v568 = vadd.s32 %v546, 176
    %v569 = vadd.s32 %v546, 184
    %v570 = vadd.s32 %v546, 192
    %v571 = vadd.s32 %v546, 200
    %v572 = vadd.s32 %v546, 208
    %v573 = vadd.s32 %v546, 216
    %v574 = vadd.s32 %v546, 224
    %v575 = vadd.s32 %v546, 232
    %v576 = vadd.s32 %v546, 240
    %v577 = vadd.s32 %v546, 248
    %v578 = vlaneseq
    %v579 = vand.u32 %v578, 127
    %v580 = vadd.s32 %v579, 128
    %vm581 = vcmp.ne.s32.totalorder %v546, %v579
    %vm582 = vcmp.ne.s32.totalorder %v546, %v580
    %vm583 = vcmp.ne.s32.totalorder %v547, %v579
    %vm584 = vcmp.ne.s32.totalorder %v547, %v580
    %vm585 = vcmp.ne.s32.totalorder %v548, %v579
    %vm586 = vcmp.ne.s32.totalorder %v548, %v580
    %vm587 = vcmp.ne.s32.totalorder %v549, %v579
    %vm588 = vcmp.ne.s32.totalorder %v549, %v580
    %vm589 = vcmp.ne.s32.totalorder %v550, %v579
    %vm590 = vcmp.ne.s32.totalorder %v550, %v580
    %vm591 = vcmp.ne.s32.totalorder %v551, %v579
    %vm592 = vcmp.ne.s32.totalorder %v551, %v580
    %vm593 = vcmp.ne.s32.totalorder %v552, %v579
    %vm594 = vcmp.ne.s32.totalorder %v552, %v580
    %vm595 = vcmp.ne.s32.totalorder %v553, %v579
    %vm596 = vcmp.ne.s32.totalorder %v553, %v580
    %vm597 = vcmp.ne.s32.totalorder %v554, %v579
    %vm598 = vcmp.ne.s32.totalorder %v554, %v580
    %vm599 = vcmp.ne.s32.totalorder %v555, %v579
    %vm600 = vcmp.ne.s32.totalorder %v555, %v580
    %vm601 = vcmp.ne.s32.totalorder %v556, %v579
    %vm602 = vcmp.ne.s32.totalorder %v556, %v580
    %vm603 = vcmp.ne.s32.totalorder %v557, %v579
    %vm604 = vcmp.ne.s32.totalorder %v557, %v580
    %vm605 = vcmp.ne.s32.totalorder %v558, %v579
    %vm606 = vcmp.ne.s32.totalorder %v558, %v580
    %vm607 = vcmp.ne.s32.totalorder %v559, %v579
    %vm608 = vcmp.ne.s32.totalorder %v559, %v580
    %vm609 = vcmp.ne.s32.totalorder %v560, %v579
    %vm610 = vcmp.ne.s32.totalorder %v560, %v580
    %vm611 = vcmp.ne.s32.totalorder %v561, %v579
    %vm612 = vcmp.ne.s32.totalorder %v561, %v580
    %vm613 = vcmp.ne.s32.totalorder %v562, %v579
    %vm614 = vcmp.ne.s32.totalorder %v562, %v580
    %vm615 = vcmp.ne.s32.totalorder %v563, %v579
    %vm616 = vcmp.ne.s32.totalorder %v563, %v580
    %vm617 = vcmp.ne.s32.totalorder %v564, %v579
    %vm618 = vcmp.ne.s32.totalorder %v564, %v580
    %vm619 = vcmp.ne.s32.totalorder %v565, %v579
    %vm620 = vcmp.ne.s32.totalorder %v565, %v580
    %vm621 = vcmp.ne.s32.totalorder %v566, %v579
    %vm622 = vcmp.ne.s32.totalorder %v566, %v580
    %vm623 = vcmp.ne.s32.totalorder %v567, %v579
    %vm624 = vcmp.ne.s32.totalorder %v567, %v580
    %vm625 = vcmp.ne.s32.totalorder %v568, %v579
    %vm626 = vcmp.ne.s32.totalorder %v568, %v580
    %vm627 = vcmp.ne.s32.totalorder %v569, %v579
    %vm628 = vcmp.ne.s32.totalorder %v569, %v580
    %vm629 = vcmp.ne.s32.totalorder %v570, %v579
    %vm630 = vcmp.ne.s32.totalorder %v570, %v580
    %vm631 = vcmp.ne.s32.totalorder %v571, %v579
    %vm632 = vcmp.ne.s32.totalorder %v571, %v580
    %vm633 = vcmp.ne.s32.totalorder %v572, %v579
    %vm634 = vcmp.ne.s32.totalorder %v572, %v580
    %vm635 = vcmp.ne.s32.totalorder %v573, %v579
    %vm636 = vcmp.ne.s32.totalorder %v573, %v580
    %vm637 = vcmp.ne.s32.totalorder %v574, %v579
    %vm638 = vcmp.ne.s32.totalorder %v574, %v580
    %vm639 = vcmp.ne.s32.totalorder %v575, %v579
    %vm640 = vcmp.ne.s32.totalorder %v575, %v580
    %vm641 = vcmp.ne.s32.totalorder %v576, %v579
    %vm642 = vcmp.ne.s32.totalorder %v576, %v580
    %vm643 = vcmp.ne.s32.totalorder %v577, %v579
    %vm644 = vcmp.ne.s32.totalorder %v577, %v580
    %v645 = vsel %vm581, 1.0, 0.0
    %v646 = vsel %vm582, 1.0, 0.0
    %v647 = vsel %vm583, 1.0, 0.0
    %v648 = vsel %vm584, 1.0, 0.0
    %v649 = vsel %vm585, 1.0, 0.0
    %v650 = vsel %vm586, 1.0, 0.0
    %v651 = vsel %vm587, 1.0, 0.0
    %v652 = vsel %vm588, 1.0, 0.0
    %v653 = vsel %vm589, 1.0, 0.0
    %v654 = vsel %vm590, 1.0, 0.0
    %v655 = vsel %vm591, 1.0, 0.0
    %v656 = vsel %vm592, 1.0, 0.0
    %v657 = vsel %vm593, 1.0, 0.0
    %v658 = vsel %vm594, 1.0, 0.0
    %v659 = vsel %vm595, 1.0, 0.0
    %v660 = vsel %vm596, 1.0, 0.0
    %v661 = vsel %vm597, 1.0, 0.0
    %v662 = vsel %vm598, 1.0, 0.0
    %v663 = vsel %vm599, 1.0, 0.0
    %v664 = vsel %vm600, 1.0, 0.0
    %v665 = vsel %vm601, 1.0, 0.0
    %v666 = vsel %vm602, 1.0, 0.0
    %v667 = vsel %vm603, 1.0, 0.0
    %v668 = vsel %vm604, 1.0, 0.0
    %v669 = vsel %vm605, 1.0, 0.0
    %v670 = vsel %vm606, 1.0, 0.0
    %v671 = vsel %vm607, 1.0, 0.0
    %v672 = vsel %vm608, 1.0, 0.0
    %v673 = vsel %vm609, 1.0, 0.0
    %v674 = vsel %vm610, 1.0, 0.0
    %v675 = vsel %vm611, 1.0, 0.0
    %v676 = vsel %vm612, 1.0, 0.0
    %v677 = vsel %vm613, 1.0, 0.0
    %v678 = vsel %vm614, 1.0, 0.0
    %v679 = vsel %vm615, 1.0, 0.0
    %v680 = vsel %vm616, 1.0, 0.0
    %v681 = vsel %vm617, 1.0, 0.0
    %v682 = vsel %vm618, 1.0, 0.0
    %v683 = vsel %vm619, 1.0, 0.0
    %v684 = vsel %vm620, 1.0, 0.0
    %v685 = vsel %vm621, 1.0, 0.0
    %v686 = vsel %vm622, 1.0, 0.0
    %v687 = vsel %vm623, 1.0, 0.0
    %v688 = vsel %vm624, 1.0, 0.0
    %v689 = vsel %vm625, 1.0, 0.0
    %v690 = vsel %vm626, 1.0, 0.0
    %v691 = vsel %vm627, 1.0, 0.0
    %v692 = vsel %vm628, 1.0, 0.0
    %v693 = vsel %vm629, 1.0, 0.0
    %v694 = vsel %vm630, 1.0, 0.0
    %v695 = vsel %vm631, 1.0, 0.0
    %v696 = vsel %vm632, 1.0, 0.0
    %v697 = vsel %vm633, 1.0, 0.0
    %v698 = vsel %vm634, 1.0, 0.0
    %v699 = vsel %vm635, 1.0, 0.0
    %v700 = vsel %vm636, 1.0, 0.0
    %v701 = vsel %vm637, 1.0, 0.0
    %v702 = vsel %vm638, 1.0, 0.0
    %v703 = vsel %vm639, 1.0, 0.0
    %v704 = vsel %vm640, 1.0, 0.0
    %v705 = vsel %vm641, 1.0, 0.0
    %v706 = vsel %vm642, 1.0, 0.0
    %v707 = vsel %vm643, 1.0, 0.0
    %v708 = vsel %vm644, 1.0, 0.0
    %710 = vset.pattern.permute.xlu0 0
    %711 = vperm.xlu0 %710, %v60
    %v712 = vpop.permute.xlu0 %711
    %715 = vset.pattern.permute.xlu0 0
    %716 = vperm.xlu0 %715, %v61
    %v717 = vpop.permute.xlu0 %716
    %720 = vset.pattern.permute.xlu0 0
    %721 = vperm.xlu0 %720, %v62
    %v722 = vpop.permute.xlu0 %721
    %725 = vset.pattern.permute.xlu0 0
    %726 = vperm.xlu0 %725, %v63
    %v727 = vpop.permute.xlu0 %726
    %730 = vset.pattern.permute.xlu0 0
    %731 = vperm.xlu0 %730, %v64
    %v732 = vpop.permute.xlu0 %731
    %735 = vset.pattern.permute.xlu0 0
    %736 = vperm.xlu0 %735, %v65
    %v737 = vpop.permute.xlu0 %736
    %740 = vset.pattern.permute.xlu0 0
    %741 = vperm.xlu0 %740, %v66
    %v742 = vpop.permute.xlu0 %741
    %745 = vset.pattern.permute.xlu0 0
    %746 = vperm.xlu0 %745, %v67
    %v747 = vpop.permute.xlu0 %746
    %750 = vset.pattern.permute.xlu0 0
    %751 = vperm.xlu0 %750, %v68
    %v752 = vpop.permute.xlu0 %751
    %755 = vset.pattern.permute.xlu0 0
    %756 = vperm.xlu0 %755, %v69
    %v757 = vpop.permute.xlu0 %756
    %760 = vset.pattern.permute.xlu0 0
    %761 = vperm.xlu0 %760, %v70
    %v762 = vpop.permute.xlu0 %761
    %765 = vset.pattern.permute.xlu0 0
    %766 = vperm.xlu0 %765, %v71
    %v767 = vpop.permute.xlu0 %766
    %770 = vset.pattern.permute.xlu0 0
    %771 = vperm.xlu0 %770, %v72
    %v772 = vpop.permute.xlu0 %771
    %775 = vset.pattern.permute.xlu0 0
    %776 = vperm.xlu0 %775, %v73
    %v777 = vpop.permute.xlu0 %776
    %780 = vset.pattern.permute.xlu0 0
    %781 = vperm.xlu0 %780, %v74
    %v782 = vpop.permute.xlu0 %781
    %785 = vset.pattern.permute.xlu0 0
    %786 = vperm.xlu0 %785, %v75
    %v787 = vpop.permute.xlu0 %786
    %790 = vset.pattern.permute.xlu0 0
    %791 = vperm.xlu0 %790, %v76
    %v792 = vpop.permute.xlu0 %791
    %795 = vset.pattern.permute.xlu0 0
    %796 = vperm.xlu0 %795, %v77
    %v797 = vpop.permute.xlu0 %796
    %800 = vset.pattern.permute.xlu0 0
    %801 = vperm.xlu0 %800, %v78
    %v802 = vpop.permute.xlu0 %801
    %805 = vset.pattern.permute.xlu0 0
    %806 = vperm.xlu0 %805, %v79
    %v807 = vpop.permute.xlu0 %806
    %810 = vset.pattern.permute.xlu0 0
    %811 = vperm.xlu0 %810, %v80
    %v812 = vpop.permute.xlu0 %811
    %815 = vset.pattern.permute.xlu0 0
    %816 = vperm.xlu0 %815, %v81
    %v817 = vpop.permute.xlu0 %816
    %820 = vset.pattern.permute.xlu0 0
    %821 = vperm.xlu0 %820, %v82
    %v822 = vpop.permute.xlu0 %821
    %825 = vset.pattern.permute.xlu0 0
    %826 = vperm.xlu0 %825, %v83
    %v827 = vpop.permute.xlu0 %826
    %830 = vset.pattern.permute.xlu0 0
    %831 = vperm.xlu0 %830, %v84
    %v832 = vpop.permute.xlu0 %831
    %835 = vset.pattern.permute.xlu0 0
    %836 = vperm.xlu0 %835, %v85
    %v837 = vpop.permute.xlu0 %836
    %840 = vset.pattern.permute.xlu0 0
    %841 = vperm.xlu0 %840, %v86
    %v842 = vpop.permute.xlu0 %841
    %845 = vset.pattern.permute.xlu0 0
    %846 = vperm.xlu0 %845, %v87
    %v847 = vpop.permute.xlu0 %846
    %850 = vset.pattern.permute.xlu0 0
    %851 = vperm.xlu0 %850, %v88
    %v852 = vpop.permute.xlu0 %851
    %855 = vset.pattern.permute.xlu0 0
    %856 = vperm.xlu0 %855, %v89
    %v857 = vpop.permute.xlu0 %856
    %860 = vset.pattern.permute.xlu0 0
    %861 = vperm.xlu0 %860, %v90
    %v862 = vpop.permute.xlu0 %861
    %865 = vset.pattern.permute.xlu0 0
    %866 = vperm.xlu0 %865, %v91
    %v867 = vpop.permute.xlu0 %866
    %v870 = vlaneseq
    %v871 = vshrl.u32 %v870, 7
    %v872 = vsub.s32 0, %v871
    %v873 = vrot.slane %v92, %v872
    %v874 = vlaneseq
    %v875 = vshrl.u32 %v874, 7
    %v876 = vsub.s32 1, %v875
    %v877 = vrot.slane %v92, %v876
    %vm880 = vcmp.eq.f32.partialorder %v712, %v873
    %vm881 = vcmp.eq.f32.partialorder %v712, %v877
    %vm882 = vcmp.eq.f32.partialorder %v717, %v873
    %vm883 = vcmp.eq.f32.partialorder %v717, %v877
    %vm884 = vcmp.eq.f32.partialorder %v722, %v873
    %vm885 = vcmp.eq.f32.partialorder %v722, %v877
    %vm886 = vcmp.eq.f32.partialorder %v727, %v873
    %vm887 = vcmp.eq.f32.partialorder %v727, %v877
    %vm888 = vcmp.eq.f32.partialorder %v732, %v873
    %vm889 = vcmp.eq.f32.partialorder %v732, %v877
    %vm890 = vcmp.eq.f32.partialorder %v737, %v873
    %vm891 = vcmp.eq.f32.partialorder %v737, %v877
    %vm892 = vcmp.eq.f32.partialorder %v742, %v873
    %vm893 = vcmp.eq.f32.partialorder %v742, %v877
    %vm894 = vcmp.eq.f32.partialorder %v747, %v873
    %vm895 = vcmp.eq.f32.partialorder %v747, %v877
    %vm896 = vcmp.eq.f32.partialorder %v752, %v873
    %vm897 = vcmp.eq.f32.partialorder %v752, %v877
    %vm898 = vcmp.eq.f32.partialorder %v757, %v873
    %vm899 = vcmp.eq.f32.partialorder %v757, %v877
    %vm900 = vcmp.eq.f32.partialorder %v762, %v873
    %vm901 = vcmp.eq.f32.partialorder %v762, %v877
    %vm902 = vcmp.eq.f32.partialorder %v767, %v873
    %vm903 = vcmp.eq.f32.partialorder %v767, %v877
    %vm904 = vcmp.eq.f32.partialorder %v772, %v873
    %vm905 = vcmp.eq.f32.partialorder %v772, %v877
    %vm906 = vcmp.eq.f32.partialorder %v777, %v873
    %vm907 = vcmp.eq.f32.partialorder %v777, %v877
    %vm908 = vcmp.eq.f32.partialorder %v782, %v873
    %vm909 = vcmp.eq.f32.partialorder %v782, %v877
    %vm910 = vcmp.eq.f32.partialorder %v787, %v873
    %vm911 = vcmp.eq.f32.partialorder %v787, %v877
    %vm912 = vcmp.eq.f32.partialorder %v792, %v873
    %vm913 = vcmp.eq.f32.partialorder %v792, %v877
    %vm914 = vcmp.eq.f32.partialorder %v797, %v873
    %vm915 = vcmp.eq.f32.partialorder %v797, %v877
    %vm916 = vcmp.eq.f32.partialorder %v802, %v873
    %vm917 = vcmp.eq.f32.partialorder %v802, %v877
    %vm918 = vcmp.eq.f32.partialorder %v807, %v873
    %vm919 = vcmp.eq.f32.partialorder %v807, %v877
    %vm920 = vcmp.eq.f32.partialorder %v812, %v873
    %vm921 = vcmp.eq.f32.partialorder %v812, %v877
    %vm922 = vcmp.eq.f32.partialorder %v817, %v873
    %vm923 = vcmp.eq.f32.partialorder %v817, %v877
    %vm924 = vcmp.eq.f32.partialorder %v822, %v873
    %vm925 = vcmp.eq.f32.partialorder %v822, %v877
    %vm926 = vcmp.eq.f32.partialorder %v827, %v873
    %vm927 = vcmp.eq.f32.partialorder %v827, %v877
    %vm928 = vcmp.eq.f32.partialorder %v832, %v873
    %vm929 = vcmp.eq.f32.partialorder %v832, %v877
    %vm930 = vcmp.eq.f32.partialorder %v837, %v873
    %vm931 = vcmp.eq.f32.partialorder %v837, %v877
    %vm932 = vcmp.eq.f32.partialorder %v842, %v873
    %vm933 = vcmp.eq.f32.partialorder %v842, %v877
    %vm934 = vcmp.eq.f32.partialorder %v847, %v873
    %vm935 = vcmp.eq.f32.partialorder %v847, %v877
    %vm936 = vcmp.eq.f32.partialorder %v852, %v873
    %vm937 = vcmp.eq.f32.partialorder %v852, %v877
    %vm938 = vcmp.eq.f32.partialorder %v857, %v873
    %vm939 = vcmp.eq.f32.partialorder %v857, %v877
    %vm940 = vcmp.eq.f32.partialorder %v862, %v873
    %vm941 = vcmp.eq.f32.partialorder %v862, %v877
    %vm942 = vcmp.eq.f32.partialorder %v867, %v873
    %vm943 = vcmp.eq.f32.partialorder %v867, %v877
    %vm944 = vmand %vm880, %vm581
    %vm945 = vmand %vm881, %vm582
    %vm946 = vmand %vm882, %vm583
    %vm947 = vmand %vm883, %vm584
    %vm948 = vmand %vm884, %vm585
    %vm949 = vmand %vm885, %vm586
    %vm950 = vmand %vm886, %vm587
    %vm951 = vmand %vm887, %vm588
    %vm952 = vmand %vm888, %vm589
    %vm953 = vmand %vm889, %vm590
    %vm954 = vmand %vm890, %vm591
    %vm955 = vmand %vm891, %vm592
    %vm956 = vmand %vm892, %vm593
    %vm957 = vmand %vm893, %vm594
    %vm958 = vmand %vm894, %vm595
    %vm959 = vmand %vm895, %vm596
    %vm960 = vmand %vm896, %vm597
    %vm961 = vmand %vm897, %vm598
    %vm962 = vmand %vm898, %vm599
    %vm963 = vmand %vm899, %vm600
    %vm964 = vmand %vm900, %vm601
    %vm965 = vmand %vm901, %vm602
    %vm966 = vmand %vm902, %vm603
    %vm967 = vmand %vm903, %vm604
    %vm968 = vmand %vm904, %vm605
    %vm969 = vmand %vm905, %vm606
    %vm970 = vmand %vm906, %vm607
    %vm971 = vmand %vm907, %vm608
    %vm972 = vmand %vm908, %vm609
    %vm973 = vmand %vm909, %vm610
    %vm974 = vmand %vm910, %vm611
    %vm975 = vmand %vm911, %vm612
    %vm976 = vmand %vm912, %vm613
    %vm977 = vmand %vm913, %vm614
    %vm978 = vmand %vm914, %vm615
    %vm979 = vmand %vm915, %vm616
    %vm980 = vmand %vm916, %vm617
    %vm981 = vmand %vm917, %vm618
    %vm982 = vmand %vm918, %vm619
    %vm983 = vmand %vm919, %vm620
    %vm984 = vmand %vm920, %vm621
    %vm985 = vmand %vm921, %vm622
    %vm986 = vmand %vm922, %vm623
    %vm987 = vmand %vm923, %vm624
    %vm988 = vmand %vm924, %vm625
    %vm989 = vmand %vm925, %vm626
    %vm990 = vmand %vm926, %vm627
    %vm991 = vmand %vm927, %vm628
    %vm992 = vmand %vm928, %vm629
    %vm993 = vmand %vm929, %vm630
    %vm994 = vmand %vm930, %vm631
    %vm995 = vmand %vm931, %vm632
    %vm996 = vmand %vm932, %vm633
    %vm997 = vmand %vm933, %vm634
    %vm998 = vmand %vm934, %vm635
    %vm999 = vmand %vm935, %vm636
    %vm1000 = vmand %vm936, %vm637
    %vm1001 = vmand %vm937, %vm638
    %vm1002 = vmand %vm938, %vm639
    %vm1003 = vmand %vm939, %vm640
    %vm1004 = vmand %vm940, %vm641
    %vm1005 = vmand %vm941, %vm642
    %vm1006 = vmand %vm942, %vm643
    %vm1007 = vmand %vm943, %vm644
    %v1008 = vsel %vm944, 1.0, 0.0
    %v1009 = vsel %vm945, 1.0, 0.0
    %v1010 = vsel %vm946, 1.0, 0.0
    %v1011 = vsel %vm947, 1.0, 0.0
    %v1012 = vsel %vm948, 1.0, 0.0
    %v1013 = vsel %vm949, 1.0, 0.0
    %v1014 = vsel %vm950, 1.0, 0.0
    %v1015 = vsel %vm951, 1.0, 0.0
    %v1016 = vsel %vm952, 1.0, 0.0
    %v1017 = vsel %vm953, 1.0, 0.0
    %v1018 = vsel %vm954, 1.0, 0.0
    %v1019 = vsel %vm955, 1.0, 0.0
    %v1020 = vsel %vm956, 1.0, 0.0
    %v1021 = vsel %vm957, 1.0, 0.0
    %v1022 = vsel %vm958, 1.0, 0.0
    %v1023 = vsel %vm959, 1.0, 0.0
    %v1024 = vsel %vm960, 1.0, 0.0
    %v1025 = vsel %vm961, 1.0, 0.0
    %v1026 = vsel %vm962, 1.0, 0.0
    %v1027 = vsel %vm963, 1.0, 0.0
    %v1028 = vsel %vm964, 1.0, 0.0
    %v1029 = vsel %vm965, 1.0, 0.0
    %v1030 = vsel %vm966, 1.0, 0.0
    %v1031 = vsel %vm967, 1.0, 0.0
    %v1032 = vsel %vm968, 1.0, 0.0
    %v1033 = vsel %vm969, 1.0, 0.0
    %v1034 = vsel %vm970, 1.0, 0.0
    %v1035 = vsel %vm971, 1.0, 0.0
    %v1036 = vsel %vm972, 1.0, 0.0
    %v1037 = vsel %vm973, 1.0, 0.0
    %v1038 = vsel %vm974, 1.0, 0.0
    %v1039 = vsel %vm975, 1.0, 0.0
    %v1040 = vsel %vm976, 1.0, 0.0
    %v1041 = vsel %vm977, 1.0, 0.0
    %v1042 = vsel %vm978, 1.0, 0.0
    %v1043 = vsel %vm979, 1.0, 0.0
    %v1044 = vsel %vm980, 1.0, 0.0
    %v1045 = vsel %vm981, 1.0, 0.0
    %v1046 = vsel %vm982, 1.0, 0.0
    %v1047 = vsel %vm983, 1.0, 0.0
    %v1048 = vsel %vm984, 1.0, 0.0
    %v1049 = vsel %vm985, 1.0, 0.0
    %v1050 = vsel %vm986, 1.0, 0.0
    %v1051 = vsel %vm987, 1.0, 0.0
    %v1052 = vsel %vm988, 1.0, 0.0
    %v1053 = vsel %vm989, 1.0, 0.0
    %v1054 = vsel %vm990, 1.0, 0.0
    %v1055 = vsel %vm991, 1.0, 0.0
    %v1056 = vsel %vm992, 1.0, 0.0
    %v1057 = vsel %vm993, 1.0, 0.0
    %v1058 = vsel %vm994, 1.0, 0.0
    %v1059 = vsel %vm995, 1.0, 0.0
    %v1060 = vsel %vm996, 1.0, 0.0
    %v1061 = vsel %vm997, 1.0, 0.0
    %v1062 = vsel %vm998, 1.0, 0.0
    %v1063 = vsel %vm999, 1.0, 0.0
    %v1064 = vsel %vm1000, 1.0, 0.0
    %v1065 = vsel %vm1001, 1.0, 0.0
    %v1066 = vsel %vm1002, 1.0, 0.0
    %v1067 = vsel %vm1003, 1.0, 0.0
    %v1068 = vsel %vm1004, 1.0, 0.0
    %v1069 = vsel %vm1005, 1.0, 0.0
    %v1070 = vsel %vm1006, 1.0, 0.0
    %v1071 = vsel %vm1007, 1.0, 0.0
    %v1072 = vsub.f32 1.0, %v1008
    %v1073 = vsub.f32 1.0, %v1009
    %v1074 = vsub.f32 1.0, %v1010
    %v1075 = vsub.f32 1.0, %v1011
    %v1076 = vsub.f32 1.0, %v1012
    %v1077 = vsub.f32 1.0, %v1013
    %v1078 = vsub.f32 1.0, %v1014
    %v1079 = vsub.f32 1.0, %v1015
    %v1080 = vsub.f32 1.0, %v1016
    %v1081 = vsub.f32 1.0, %v1017
    %v1082 = vsub.f32 1.0, %v1018
    %v1083 = vsub.f32 1.0, %v1019
    %v1084 = vsub.f32 1.0, %v1020
    %v1085 = vsub.f32 1.0, %v1021
    %v1086 = vsub.f32 1.0, %v1022
    %v1087 = vsub.f32 1.0, %v1023
    %v1088 = vsub.f32 1.0, %v1024
    %v1089 = vsub.f32 1.0, %v1025
    %v1090 = vsub.f32 1.0, %v1026
    %v1091 = vsub.f32 1.0, %v1027
    %v1092 = vsub.f32 1.0, %v1028
    %v1093 = vsub.f32 1.0, %v1029
    %v1094 = vsub.f32 1.0, %v1030
    %v1095 = vsub.f32 1.0, %v1031
    %v1096 = vsub.f32 1.0, %v1032
    %v1097 = vsub.f32 1.0, %v1033
    %v1098 = vsub.f32 1.0, %v1034
    %v1099 = vsub.f32 1.0, %v1035
    %v1100 = vsub.f32 1.0, %v1036
    %v1101 = vsub.f32 1.0, %v1037
    %v1102 = vsub.f32 1.0, %v1038
    %v1103 = vsub.f32 1.0, %v1039
    %v1104 = vsub.f32 1.0, %v1040
    %v1105 = vsub.f32 1.0, %v1041
    %v1106 = vsub.f32 1.0, %v1042
    %v1107 = vsub.f32 1.0, %v1043
    %v1108 = vsub.f32 1.0, %v1044
    %v1109 = vsub.f32 1.0, %v1045
    %v1110 = vsub.f32 1.0, %v1046
    %v1111 = vsub.f32 1.0, %v1047
    %v1112 = vsub.f32 1.0, %v1048
    %v1113 = vsub.f32 1.0, %v1049
    %v1114 = vsub.f32 1.0, %v1050
    %v1115 = vsub.f32 1.0, %v1051
    %v1116 = vsub.f32 1.0, %v1052
    %v1117 = vsub.f32 1.0, %v1053
    %v1118 = vsub.f32 1.0, %v1054
    %v1119 = vsub.f32 1.0, %v1055
    %v1120 = vsub.f32 1.0, %v1056
    %v1121 = vsub.f32 1.0, %v1057
    %v1122 = vsub.f32 1.0, %v1058
    %v1123 = vsub.f32 1.0, %v1059
    %v1124 = vsub.f32 1.0, %v1060
    %v1125 = vsub.f32 1.0, %v1061
    %v1126 = vsub.f32 1.0, %v1062
    %v1127 = vsub.f32 1.0, %v1063
    %v1128 = vsub.f32 1.0, %v1064
    %v1129 = vsub.f32 1.0, %v1065
    %v1130 = vsub.f32 1.0, %v1066
    %v1131 = vsub.f32 1.0, %v1067
    %v1132 = vsub.f32 1.0, %v1068
    %v1133 = vsub.f32 1.0, %v1069
    %v1134 = vsub.f32 1.0, %v1070
    %v1135 = vsub.f32 1.0, %v1071
    %v1136 = vrsqrt.pop %v60
    %v1137 = vmul.f32 %v60, %v1136
    %vm1138 = vcmp.eq.f32.partialorder %v60, inf
    %v1139 = vsel %vm1138, %v60, %v1137
    %vm1140 = vcmp.eq.f32.partialorder %v60, 0.0
    %v1141 = vand.u32 %v60, 2147483648
    %v1142 = vsel %vm1140, %v1141, %v1139
    %v1143 = vrsqrt.pop %v61
    %v1144 = vmul.f32 %v61, %v1143
    %vm1145 = vcmp.eq.f32.partialorder %v61, inf
    %v1146 = vsel %vm1145, %v61, %v1144
    %vm1147 = vcmp.eq.f32.partialorder %v61, 0.0
    %v1148 = vand.u32 %v61, 2147483648
    %v1149 = vsel %vm1147, %v1148, %v1146
    %v1150 = vrsqrt.pop %v62
    %v1151 = vmul.f32 %v62, %v1150
    %vm1152 = vcmp.eq.f32.partialorder %v62, inf
    %v1153 = vsel %vm1152, %v62, %v1151
    %vm1154 = vcmp.eq.f32.partialorder %v62, 0.0
    %v1155 = vand.u32 %v62, 2147483648
    %v1156 = vsel %vm1154, %v1155, %v1153
    %v1157 = vrsqrt.pop %v63
    %v1158 = vmul.f32 %v63, %v1157
    %vm1159 = vcmp.eq.f32.partialorder %v63, inf
    %v1160 = vsel %vm1159, %v63, %v1158
    %vm1161 = vcmp.eq.f32.partialorder %v63, 0.0
    %v1162 = vand.u32 %v63, 2147483648
    %v1163 = vsel %vm1161, %v1162, %v1160
    %v1164 = vrsqrt.pop %v64
    %v1165 = vmul.f32 %v64, %v1164
    %vm1166 = vcmp.eq.f32.partialorder %v64, inf
    %v1167 = vsel %vm1166, %v64, %v1165
    %vm1168 = vcmp.eq.f32.partialorder %v64, 0.0
    %v1169 = vand.u32 %v64, 2147483648
    %v1170 = vsel %vm1168, %v1169, %v1167
    %v1171 = vrsqrt.pop %v65
    %v1172 = vmul.f32 %v65, %v1171
    %vm1173 = vcmp.eq.f32.partialorder %v65, inf
    %v1174 = vsel %vm1173, %v65, %v1172
    %vm1175 = vcmp.eq.f32.partialorder %v65, 0.0
    %v1176 = vand.u32 %v65, 2147483648
    %v1177 = vsel %vm1175, %v1176, %v1174
    %v1178 = vrsqrt.pop %v66
    %v1179 = vmul.f32 %v66, %v1178
    %vm1180 = vcmp.eq.f32.partialorder %v66, inf
    %v1181 = vsel %vm1180, %v66, %v1179
    %vm1182 = vcmp.eq.f32.partialorder %v66, 0.0
    %v1183 = vand.u32 %v66, 2147483648
    %v1184 = vsel %vm1182, %v1183, %v1181
    %v1185 = vrsqrt.pop %v67
    %v1186 = vmul.f32 %v67, %v1185
    %vm1187 = vcmp.eq.f32.partialorder %v67, inf
    %v1188 = vsel %vm1187, %v67, %v1186
    %vm1189 = vcmp.eq.f32.partialorder %v67, 0.0
    %v1190 = vand.u32 %v67, 2147483648
    %v1191 = vsel %vm1189, %v1190, %v1188
    %v1192 = vrsqrt.pop %v68
    %v1193 = vmul.f32 %v68, %v1192
    %vm1194 = vcmp.eq.f32.partialorder %v68, inf
    %v1195 = vsel %vm1194, %v68, %v1193
    %vm1196 = vcmp.eq.f32.partialorder %v68, 0.0
    %v1197 = vand.u32 %v68, 2147483648
    %v1198 = vsel %vm1196, %v1197, %v1195
    %v1199 = vrsqrt.pop %v69
    %v1200 = vmul.f32 %v69, %v1199
    %vm1201 = vcmp.eq.f32.partialorder %v69, inf
    %v1202 = vsel %vm1201, %v69, %v1200
    %vm1203 = vcmp.eq.f32.partialorder %v69, 0.0
    %v1204 = vand.u32 %v69, 2147483648
    %v1205 = vsel %vm1203, %v1204, %v1202
    %v1206 = vrsqrt.pop %v70
    %v1207 = vmul.f32 %v70, %v1206
    %vm1208 = vcmp.eq.f32.partialorder %v70, inf
    %v1209 = vsel %vm1208, %v70, %v1207
    %vm1210 = vcmp.eq.f32.partialorder %v70, 0.0
    %v1211 = vand.u32 %v70, 2147483648
    %v1212 = vsel %vm1210, %v1211, %v1209
    %v1213 = vrsqrt.pop %v71
    %v1214 = vmul.f32 %v71, %v1213
    %vm1215 = vcmp.eq.f32.partialorder %v71, inf
    %v1216 = vsel %vm1215, %v71, %v1214
    %vm1217 = vcmp.eq.f32.partialorder %v71, 0.0
    %v1218 = vand.u32 %v71, 2147483648
    %v1219 = vsel %vm1217, %v1218, %v1216
    %v1220 = vrsqrt.pop %v72
    %v1221 = vmul.f32 %v72, %v1220
    %vm1222 = vcmp.eq.f32.partialorder %v72, inf
    %v1223 = vsel %vm1222, %v72, %v1221
    %vm1224 = vcmp.eq.f32.partialorder %v72, 0.0
    %v1225 = vand.u32 %v72, 2147483648
    %v1226 = vsel %vm1224, %v1225, %v1223
    %v1227 = vrsqrt.pop %v73
    %v1228 = vmul.f32 %v73, %v1227
    %vm1229 = vcmp.eq.f32.partialorder %v73, inf
    %v1230 = vsel %vm1229, %v73, %v1228
    %vm1231 = vcmp.eq.f32.partialorder %v73, 0.0
    %v1232 = vand.u32 %v73, 2147483648
    %v1233 = vsel %vm1231, %v1232, %v1230
    %v1234 = vrsqrt.pop %v74
    %v1235 = vmul.f32 %v74, %v1234
    %vm1236 = vcmp.eq.f32.partialorder %v74, inf
    %v1237 = vsel %vm1236, %v74, %v1235
    %vm1238 = vcmp.eq.f32.partialorder %v74, 0.0
    %v1239 = vand.u32 %v74, 2147483648
    %v1240 = vsel %vm1238, %v1239, %v1237
    %v1241 = vrsqrt.pop %v75
    %v1242 = vmul.f32 %v75, %v1241
    %vm1243 = vcmp.eq.f32.partialorder %v75, inf
    %v1244 = vsel %vm1243, %v75, %v1242
    %vm1245 = vcmp.eq.f32.partialorder %v75, 0.0
    %v1246 = vand.u32 %v75, 2147483648
    %v1247 = vsel %vm1245, %v1246, %v1244
    %v1248 = vrsqrt.pop %v76
    %v1249 = vmul.f32 %v76, %v1248
    %vm1250 = vcmp.eq.f32.partialorder %v76, inf
    %v1251 = vsel %vm1250, %v76, %v1249
    %vm1252 = vcmp.eq.f32.partialorder %v76, 0.0
    %v1253 = vand.u32 %v76, 2147483648
    %v1254 = vsel %vm1252, %v1253, %v1251
    %v1255 = vrsqrt.pop %v77
    %v1256 = vmul.f32 %v77, %v1255
    %vm1257 = vcmp.eq.f32.partialorder %v77, inf
    %v1258 = vsel %vm1257, %v77, %v1256
    %vm1259 = vcmp.eq.f32.partialorder %v77, 0.0
    %v1260 = vand.u32 %v77, 2147483648
    %v1261 = vsel %vm1259, %v1260, %v1258
    %v1262 = vrsqrt.pop %v78
    %v1263 = vmul.f32 %v78, %v1262
    %vm1264 = vcmp.eq.f32.partialorder %v78, inf
    %v1265 = vsel %vm1264, %v78, %v1263
    %vm1266 = vcmp.eq.f32.partialorder %v78, 0.0
    %v1267 = vand.u32 %v78, 2147483648
    %v1268 = vsel %vm1266, %v1267, %v1265
    %v1269 = vrsqrt.pop %v79
    %v1270 = vmul.f32 %v79, %v1269
    %vm1271 = vcmp.eq.f32.partialorder %v79, inf
    %v1272 = vsel %vm1271, %v79, %v1270
    %vm1273 = vcmp.eq.f32.partialorder %v79, 0.0
    %v1274 = vand.u32 %v79, 2147483648
    %v1275 = vsel %vm1273, %v1274, %v1272
    %v1276 = vrsqrt.pop %v80
    %v1277 = vmul.f32 %v80, %v1276
    %vm1278 = vcmp.eq.f32.partialorder %v80, inf
    %v1279 = vsel %vm1278, %v80, %v1277
    %vm1280 = vcmp.eq.f32.partialorder %v80, 0.0
    %v1281 = vand.u32 %v80, 2147483648
    %v1282 = vsel %vm1280, %v1281, %v1279
    %v1283 = vrsqrt.pop %v81
    %v1284 = vmul.f32 %v81, %v1283
    %vm1285 = vcmp.eq.f32.partialorder %v81, inf
    %v1286 = vsel %vm1285, %v81, %v1284
    %vm1287 = vcmp.eq.f32.partialorder %v81, 0.0
    %v1288 = vand.u32 %v81, 2147483648
    %v1289 = vsel %vm1287, %v1288, %v1286
    %v1290 = vrsqrt.pop %v82
    %v1291 = vmul.f32 %v82, %v1290
    %vm1292 = vcmp.eq.f32.partialorder %v82, inf
    %v1293 = vsel %vm1292, %v82, %v1291
    %vm1294 = vcmp.eq.f32.partialorder %v82, 0.0
    %v1295 = vand.u32 %v82, 2147483648
    %v1296 = vsel %vm1294, %v1295, %v1293
    %v1297 = vrsqrt.pop %v83
    %v1298 = vmul.f32 %v83, %v1297
    %vm1299 = vcmp.eq.f32.partialorder %v83, inf
    %v1300 = vsel %vm1299, %v83, %v1298
    %vm1301 = vcmp.eq.f32.partialorder %v83, 0.0
    %v1302 = vand.u32 %v83, 2147483648
    %v1303 = vsel %vm1301, %v1302, %v1300
    %v1304 = vrsqrt.pop %v84
    %v1305 = vmul.f32 %v84, %v1304
    %vm1306 = vcmp.eq.f32.partialorder %v84, inf
    %v1307 = vsel %vm1306, %v84, %v1305
    %vm1308 = vcmp.eq.f32.partialorder %v84, 0.0
    %v1309 = vand.u32 %v84, 2147483648
    %v1310 = vsel %vm1308, %v1309, %v1307
    %v1311 = vrsqrt.pop %v85
    %v1312 = vmul.f32 %v85, %v1311
    %vm1313 = vcmp.eq.f32.partialorder %v85, inf
    %v1314 = vsel %vm1313, %v85, %v1312
    %vm1315 = vcmp.eq.f32.partialorder %v85, 0.0
    %v1316 = vand.u32 %v85, 2147483648
    %v1317 = vsel %vm1315, %v1316, %v1314
    %v1318 = vrsqrt.pop %v86
    %v1319 = vmul.f32 %v86, %v1318
    %vm1320 = vcmp.eq.f32.partialorder %v86, inf
    %v1321 = vsel %vm1320, %v86, %v1319
    %vm1322 = vcmp.eq.f32.partialorder %v86, 0.0
    %v1323 = vand.u32 %v86, 2147483648
    %v1324 = vsel %vm1322, %v1323, %v1321
    %v1325 = vrsqrt.pop %v87
    %v1326 = vmul.f32 %v87, %v1325
    %vm1327 = vcmp.eq.f32.partialorder %v87, inf
    %v1328 = vsel %vm1327, %v87, %v1326
    %vm1329 = vcmp.eq.f32.partialorder %v87, 0.0
    %v1330 = vand.u32 %v87, 2147483648
    %v1331 = vsel %vm1329, %v1330, %v1328
    %v1332 = vrsqrt.pop %v88
    %v1333 = vmul.f32 %v88, %v1332
    %vm1334 = vcmp.eq.f32.partialorder %v88, inf
    %v1335 = vsel %vm1334, %v88, %v1333
    %vm1336 = vcmp.eq.f32.partialorder %v88, 0.0
    %v1337 = vand.u32 %v88, 2147483648
    %v1338 = vsel %vm1336, %v1337, %v1335
    %v1339 = vrsqrt.pop %v89
    %v1340 = vmul.f32 %v89, %v1339
    %vm1341 = vcmp.eq.f32.partialorder %v89, inf
    %v1342 = vsel %vm1341, %v89, %v1340
    %vm1343 = vcmp.eq.f32.partialorder %v89, 0.0
    %v1344 = vand.u32 %v89, 2147483648
    %v1345 = vsel %vm1343, %v1344, %v1342
    %v1346 = vrsqrt.pop %v90
    %v1347 = vmul.f32 %v90, %v1346
    %vm1348 = vcmp.eq.f32.partialorder %v90, inf
    %v1349 = vsel %vm1348, %v90, %v1347
    %vm1350 = vcmp.eq.f32.partialorder %v90, 0.0
    %v1351 = vand.u32 %v90, 2147483648
    %v1352 = vsel %vm1350, %v1351, %v1349
    %v1353 = vrsqrt.pop %v91
    %v1354 = vmul.f32 %v91, %v1353
    %vm1355 = vcmp.eq.f32.partialorder %v91, inf
    %v1356 = vsel %vm1355, %v91, %v1354
    %vm1357 = vcmp.eq.f32.partialorder %v91, 0.0
    %v1358 = vand.u32 %v91, 2147483648
    %v1359 = vsel %vm1357, %v1358, %v1356
    %v1360 = vrsqrt.pop %v92
    %v1361 = vmul.f32 %v92, %v1360
    %vm1362 = vcmp.eq.f32.partialorder %v92, inf
    %v1363 = vsel %vm1362, %v92, %v1361
    %vm1364 = vcmp.eq.f32.partialorder %v92, 0.0
    %v1365 = vand.u32 %v92, 2147483648
    %v1366 = vsel %vm1364, %v1365, %v1363
    %1368 = vset.pattern.permute.xlu0 0
    %1369 = vperm.xlu0 %1368, %v1142
    %v1370 = vpop.permute.xlu0 %1369
    %1373 = vset.pattern.permute.xlu0 0
    %1374 = vperm.xlu0 %1373, %v1149
    %v1375 = vpop.permute.xlu0 %1374
    %1378 = vset.pattern.permute.xlu0 0
    %1379 = vperm.xlu0 %1378, %v1156
    %v1380 = vpop.permute.xlu0 %1379
    %1383 = vset.pattern.permute.xlu0 0
    %1384 = vperm.xlu0 %1383, %v1163
    %v1385 = vpop.permute.xlu0 %1384
    %1388 = vset.pattern.permute.xlu0 0
    %1389 = vperm.xlu0 %1388, %v1170
    %v1390 = vpop.permute.xlu0 %1389
    %1393 = vset.pattern.permute.xlu0 0
    %1394 = vperm.xlu0 %1393, %v1177
    %v1395 = vpop.permute.xlu0 %1394
    %1398 = vset.pattern.permute.xlu0 0
    %1399 = vperm.xlu0 %1398, %v1184
    %v1400 = vpop.permute.xlu0 %1399
    %1403 = vset.pattern.permute.xlu0 0
    %1404 = vperm.xlu0 %1403, %v1191
    %v1405 = vpop.permute.xlu0 %1404
    %1408 = vset.pattern.permute.xlu0 0
    %1409 = vperm.xlu0 %1408, %v1198
    %v1410 = vpop.permute.xlu0 %1409
    %1413 = vset.pattern.permute.xlu0 0
    %1414 = vperm.xlu0 %1413, %v1205
    %v1415 = vpop.permute.xlu0 %1414
    %1418 = vset.pattern.permute.xlu0 0
    %1419 = vperm.xlu0 %1418, %v1212
    %v1420 = vpop.permute.xlu0 %1419
    %1423 = vset.pattern.permute.xlu0 0
    %1424 = vperm.xlu0 %1423, %v1219
    %v1425 = vpop.permute.xlu0 %1424
    %1428 = vset.pattern.permute.xlu0 0
    %1429 = vperm.xlu0 %1428, %v1226
    %v1430 = vpop.permute.xlu0 %1429
    %1433 = vset.pattern.permute.xlu0 0
    %1434 = vperm.xlu0 %1433, %v1233
    %v1435 = vpop.permute.xlu0 %1434
    %1438 = vset.pattern.permute.xlu0 0
    %1439 = vperm.xlu0 %1438, %v1240
    %v1440 = vpop.permute.xlu0 %1439
    %1443 = vset.pattern.permute.xlu0 0
    %1444 = vperm.xlu0 %1443, %v1247
    %v1445 = vpop.permute.xlu0 %1444
    %1448 = vset.pattern.permute.xlu0 0
    %1449 = vperm.xlu0 %1448, %v1254
    %v1450 = vpop.permute.xlu0 %1449
    %1453 = vset.pattern.permute.xlu0 0
    %1454 = vperm.xlu0 %1453, %v1261
    %v1455 = vpop.permute.xlu0 %1454
    %1458 = vset.pattern.permute.xlu0 0
    %1459 = vperm.xlu0 %1458, %v1268
    %v1460 = vpop.permute.xlu0 %1459
    %1463 = vset.pattern.permute.xlu0 0
    %1464 = vperm.xlu0 %1463, %v1275
    %v1465 = vpop.permute.xlu0 %1464
    %1468 = vset.pattern.permute.xlu0 0
    %1469 = vperm.xlu0 %1468, %v1282
    %v1470 = vpop.permute.xlu0 %1469
    %1473 = vset.pattern.permute.xlu0 0
    %1474 = vperm.xlu0 %1473, %v1289
    %v1475 = vpop.permute.xlu0 %1474
    %1478 = vset.pattern.permute.xlu0 0
    %1479 = vperm.xlu0 %1478, %v1296
    %v1480 = vpop.permute.xlu0 %1479
    %1483 = vset.pattern.permute.xlu0 0
    %1484 = vperm.xlu0 %1483, %v1303
    %v1485 = vpop.permute.xlu0 %1484
    %1488 = vset.pattern.permute.xlu0 0
    %1489 = vperm.xlu0 %1488, %v1310
    %v1490 = vpop.permute.xlu0 %1489
    %1493 = vset.pattern.permute.xlu0 0
    %1494 = vperm.xlu0 %1493, %v1317
    %v1495 = vpop.permute.xlu0 %1494
    %1498 = vset.pattern.permute.xlu0 0
    %1499 = vperm.xlu0 %1498, %v1324
    %v1500 = vpop.permute.xlu0 %1499
    %1503 = vset.pattern.permute.xlu0 0
    %1504 = vperm.xlu0 %1503, %v1331
    %v1505 = vpop.permute.xlu0 %1504
    %1508 = vset.pattern.permute.xlu0 0
    %1509 = vperm.xlu0 %1508, %v1338
    %v1510 = vpop.permute.xlu0 %1509
    %1513 = vset.pattern.permute.xlu0 0
    %1514 = vperm.xlu0 %1513, %v1345
    %v1515 = vpop.permute.xlu0 %1514
    %1518 = vset.pattern.permute.xlu0 0
    %1519 = vperm.xlu0 %1518, %v1352
    %v1520 = vpop.permute.xlu0 %1519
    %1523 = vset.pattern.permute.xlu0 0
    %1524 = vperm.xlu0 %1523, %v1359
    %v1525 = vpop.permute.xlu0 %1524
    %v1528 = vlaneseq
    %v1529 = vshrl.u32 %v1528, 7
    %v1530 = vsub.s32 0, %v1529
    %v1531 = vrot.slane %v1366, %v1530
    %v1532 = vlaneseq
    %v1533 = vshrl.u32 %v1532, 7
    %v1534 = vsub.s32 1, %v1533
    %v1535 = vrot.slane %v1366, %v1534
    %v1538 = vmul.f32 %v1370, %v1531
    %v1539 = vmul.f32 %v1370, %v1535
    %v1540 = vmul.f32 %v1375, %v1531
    %v1541 = vmul.f32 %v1375, %v1535
    %v1542 = vmul.f32 %v1380, %v1531
    %v1543 = vmul.f32 %v1380, %v1535
    %v1544 = vmul.f32 %v1385, %v1531
    %v1545 = vmul.f32 %v1385, %v1535
    %v1546 = vmul.f32 %v1390, %v1531
    %v1547 = vmul.f32 %v1390, %v1535
    %v1548 = vmul.f32 %v1395, %v1531
    %v1549 = vmul.f32 %v1395, %v1535
    %v1550 = vmul.f32 %v1400, %v1531
    %v1551 = vmul.f32 %v1400, %v1535
    %v1552 = vmul.f32 %v1405, %v1531
    %v1553 = vmul.f32 %v1405, %v1535
    %v1554 = vmul.f32 %v1410, %v1531
    %v1555 = vmul.f32 %v1410, %v1535
    %v1556 = vmul.f32 %v1415, %v1531
    %v1557 = vmul.f32 %v1415, %v1535
    %v1558 = vmul.f32 %v1420, %v1531
    %v1559 = vmul.f32 %v1420, %v1535
    %v1560 = vmul.f32 %v1425, %v1531
    %v1561 = vmul.f32 %v1425, %v1535
    %v1562 = vmul.f32 %v1430, %v1531
    %v1563 = vmul.f32 %v1430, %v1535
    %v1564 = vmul.f32 %v1435, %v1531
    %v1565 = vmul.f32 %v1435, %v1535
    %v1566 = vmul.f32 %v1440, %v1531
    %v1567 = vmul.f32 %v1440, %v1535
    %v1568 = vmul.f32 %v1445, %v1531
    %v1569 = vmul.f32 %v1445, %v1535
    %v1570 = vmul.f32 %v1450, %v1531
    %v1571 = vmul.f32 %v1450, %v1535
    %v1572 = vmul.f32 %v1455, %v1531
    %v1573 = vmul.f32 %v1455, %v1535
    %v1574 = vmul.f32 %v1460, %v1531
    %v1575 = vmul.f32 %v1460, %v1535
    %v1576 = vmul.f32 %v1465, %v1531
    %v1577 = vmul.f32 %v1465, %v1535
    %v1578 = vmul.f32 %v1470, %v1531
    %v1579 = vmul.f32 %v1470, %v1535
    %v1580 = vmul.f32 %v1475, %v1531
    %v1581 = vmul.f32 %v1475, %v1535
    %v1582 = vmul.f32 %v1480, %v1531
    %v1583 = vmul.f32 %v1480, %v1535
    %v1584 = vmul.f32 %v1485, %v1531
    %v1585 = vmul.f32 %v1485, %v1535
    %v1586 = vmul.f32 %v1490, %v1531
    %v1587 = vmul.f32 %v1490, %v1535
    %v1588 = vmul.f32 %v1495, %v1531
    %v1589 = vmul.f32 %v1495, %v1535
    %v1590 = vmul.f32 %v1500, %v1531
    %v1591 = vmul.f32 %v1500, %v1535
    %v1592 = vmul.f32 %v1505, %v1531
    %v1593 = vmul.f32 %v1505, %v1535
    %v1594 = vmul.f32 %v1510, %v1531
    %v1595 = vmul.f32 %v1510, %v1535
    %v1596 = vmul.f32 %v1515, %v1531
    %v1597 = vmul.f32 %v1515, %v1535
    %v1598 = vmul.f32 %v1520, %v1531
    %v1599 = vmul.f32 %v1520, %v1535
    %v1600 = vmul.f32 %v1525, %v1531
    %v1601 = vmul.f32 %v1525, %v1535
    %v1602 = vmul.f32 %v1008, %v1538
    %v1603 = vmul.f32 %v1009, %v1539
    %v1604 = vmul.f32 %v1010, %v1540
    %v1605 = vmul.f32 %v1011, %v1541
    %v1606 = vmul.f32 %v1012, %v1542
    %v1607 = vmul.f32 %v1013, %v1543
    %v1608 = vmul.f32 %v1014, %v1544
    %v1609 = vmul.f32 %v1015, %v1545
    %v1610 = vmul.f32 %v1016, %v1546
    %v1611 = vmul.f32 %v1017, %v1547
    %v1612 = vmul.f32 %v1018, %v1548
    %v1613 = vmul.f32 %v1019, %v1549
    %v1614 = vmul.f32 %v1020, %v1550
    %v1615 = vmul.f32 %v1021, %v1551
    %v1616 = vmul.f32 %v1022, %v1552
    %v1617 = vmul.f32 %v1023, %v1553
    %v1618 = vmul.f32 %v1024, %v1554
    %v1619 = vmul.f32 %v1025, %v1555
    %v1620 = vmul.f32 %v1026, %v1556
    %v1621 = vmul.f32 %v1027, %v1557
    %v1622 = vmul.f32 %v1028, %v1558
    %v1623 = vmul.f32 %v1029, %v1559
    %v1624 = vmul.f32 %v1030, %v1560
    %v1625 = vmul.f32 %v1031, %v1561
    %v1626 = vmul.f32 %v1032, %v1562
    %v1627 = vmul.f32 %v1033, %v1563
    %v1628 = vmul.f32 %v1034, %v1564
    %v1629 = vmul.f32 %v1035, %v1565
    %v1630 = vmul.f32 %v1036, %v1566
    %v1631 = vmul.f32 %v1037, %v1567
    %v1632 = vmul.f32 %v1038, %v1568
    %v1633 = vmul.f32 %v1039, %v1569
    %v1634 = vmul.f32 %v1040, %v1570
    %v1635 = vmul.f32 %v1041, %v1571
    %v1636 = vmul.f32 %v1042, %v1572
    %v1637 = vmul.f32 %v1043, %v1573
    %v1638 = vmul.f32 %v1044, %v1574
    %v1639 = vmul.f32 %v1045, %v1575
    %v1640 = vmul.f32 %v1046, %v1576
    %v1641 = vmul.f32 %v1047, %v1577
    %v1642 = vmul.f32 %v1048, %v1578
    %v1643 = vmul.f32 %v1049, %v1579
    %v1644 = vmul.f32 %v1050, %v1580
    %v1645 = vmul.f32 %v1051, %v1581
    %v1646 = vmul.f32 %v1052, %v1582
    %v1647 = vmul.f32 %v1053, %v1583
    %v1648 = vmul.f32 %v1054, %v1584
    %v1649 = vmul.f32 %v1055, %v1585
    %v1650 = vmul.f32 %v1056, %v1586
    %v1651 = vmul.f32 %v1057, %v1587
    %v1652 = vmul.f32 %v1058, %v1588
    %v1653 = vmul.f32 %v1059, %v1589
    %v1654 = vmul.f32 %v1060, %v1590
    %v1655 = vmul.f32 %v1061, %v1591
    %v1656 = vmul.f32 %v1062, %v1592
    %v1657 = vmul.f32 %v1063, %v1593
    %v1658 = vmul.f32 %v1064, %v1594
    %v1659 = vmul.f32 %v1065, %v1595
    %v1660 = vmul.f32 %v1066, %v1596
    %v1661 = vmul.f32 %v1067, %v1597
    %v1662 = vmul.f32 %v1068, %v1598
    %v1663 = vmul.f32 %v1069, %v1599
    %v1664 = vmul.f32 %v1070, %v1600
    %v1665 = vmul.f32 %v1071, %v1601
    %1667 = vset.pattern.permute.xlu0 0
    %1668 = vperm.xlu0 %1667, %v93
    %v1669 = vpop.permute.xlu0 %1668
    %1672 = vset.pattern.permute.xlu0 0
    %1673 = vperm.xlu0 %1672, %v94
    %v1674 = vpop.permute.xlu0 %1673
    %1677 = vset.pattern.permute.xlu0 0
    %1678 = vperm.xlu0 %1677, %v95
    %v1679 = vpop.permute.xlu0 %1678
    %1682 = vset.pattern.permute.xlu0 0
    %1683 = vperm.xlu0 %1682, %v96
    %v1684 = vpop.permute.xlu0 %1683
    %1687 = vset.pattern.permute.xlu0 0
    %1688 = vperm.xlu0 %1687, %v97
    %v1689 = vpop.permute.xlu0 %1688
    %1692 = vset.pattern.permute.xlu0 0
    %1693 = vperm.xlu0 %1692, %v98
    %v1694 = vpop.permute.xlu0 %1693
    %1697 = vset.pattern.permute.xlu0 0
    %1698 = vperm.xlu0 %1697, %v99
    %v1699 = vpop.permute.xlu0 %1698
    %1702 = vset.pattern.permute.xlu0 0
    %1703 = vperm.xlu0 %1702, %v100
    %v1704 = vpop.permute.xlu0 %1703
    %1707 = vset.pattern.permute.xlu0 0
    %1708 = vperm.xlu0 %1707, %v101
    %v1709 = vpop.permute.xlu0 %1708
    %1712 = vset.pattern.permute.xlu0 0
    %1713 = vperm.xlu0 %1712, %v102
    %v1714 = vpop.permute.xlu0 %1713
    %1717 = vset.pattern.permute.xlu0 0
    %1718 = vperm.xlu0 %1717, %v103
    %v1719 = vpop.permute.xlu0 %1718
    %1722 = vset.pattern.permute.xlu0 0
    %1723 = vperm.xlu0 %1722, %v104
    %v1724 = vpop.permute.xlu0 %1723
    %1727 = vset.pattern.permute.xlu0 0
    %1728 = vperm.xlu0 %1727, %v105
    %v1729 = vpop.permute.xlu0 %1728
    %1732 = vset.pattern.permute.xlu0 0
    %1733 = vperm.xlu0 %1732, %v106
    %v1734 = vpop.permute.xlu0 %1733
    %1737 = vset.pattern.permute.xlu0 0
    %1738 = vperm.xlu0 %1737, %v107
    %v1739 = vpop.permute.xlu0 %1738
    %1742 = vset.pattern.permute.xlu0 0
    %1743 = vperm.xlu0 %1742, %v108
    %v1744 = vpop.permute.xlu0 %1743
    %1747 = vset.pattern.permute.xlu0 0
    %1748 = vperm.xlu0 %1747, %v109
    %v1749 = vpop.permute.xlu0 %1748
    %1752 = vset.pattern.permute.xlu0 0
    %1753 = vperm.xlu0 %1752, %v110
    %v1754 = vpop.permute.xlu0 %1753
    %1757 = vset.pattern.permute.xlu0 0
    %1758 = vperm.xlu0 %1757, %v111
    %v1759 = vpop.permute.xlu0 %1758
    %1762 = vset.pattern.permute.xlu0 0
    %1763 = vperm.xlu0 %1762, %v112
    %v1764 = vpop.permute.xlu0 %1763
    %1767 = vset.pattern.permute.xlu0 0
    %1768 = vperm.xlu0 %1767, %v113
    %v1769 = vpop.permute.xlu0 %1768
    %1772 = vset.pattern.permute.xlu0 0
    %1773 = vperm.xlu0 %1772, %v114
    %v1774 = vpop.permute.xlu0 %1773
    %1777 = vset.pattern.permute.xlu0 0
    %1778 = vperm.xlu0 %1777, %v115
    %v1779 = vpop.permute.xlu0 %1778
    %1782 = vset.pattern.permute.xlu0 0
    %1783 = vperm.xlu0 %1782, %v116
    %v1784 = vpop.permute.xlu0 %1783
    %1787 = vset.pattern.permute.xlu0 0
    %1788 = vperm.xlu0 %1787, %v117
    %v1789 = vpop.permute.xlu0 %1788
    %1792 = vset.pattern.permute.xlu0 0
    %1793 = vperm.xlu0 %1792, %v118
    %v1794 = vpop.permute.xlu0 %1793
    %1797 = vset.pattern.permute.xlu0 0
    %1798 = vperm.xlu0 %1797, %v119
    %v1799 = vpop.permute.xlu0 %1798
    %1802 = vset.pattern.permute.xlu0 0
    %1803 = vperm.xlu0 %1802, %v120
    %v1804 = vpop.permute.xlu0 %1803
    %1807 = vset.pattern.permute.xlu0 0
    %1808 = vperm.xlu0 %1807, %v121
    %v1809 = vpop.permute.xlu0 %1808
    %1812 = vset.pattern.permute.xlu0 0
    %1813 = vperm.xlu0 %1812, %v122
    %v1814 = vpop.permute.xlu0 %1813
    %1817 = vset.pattern.permute.xlu0 0
    %1818 = vperm.xlu0 %1817, %v123
    %v1819 = vpop.permute.xlu0 %1818
    %1822 = vset.pattern.permute.xlu0 0
    %1823 = vperm.xlu0 %1822, %v124
    %v1824 = vpop.permute.xlu0 %1823
    %v1827 = vlaneseq
    %v1828 = vshrl.u32 %v1827, 7
    %v1829 = vsub.s32 0, %v1828
    %v1830 = vrot.slane %v125, %v1829
    %v1831 = vlaneseq
    %v1832 = vshrl.u32 %v1831, 7
    %v1833 = vsub.s32 1, %v1832
    %v1834 = vrot.slane %v125, %v1833
    %v1837 = vmul.f32 %v1669, %v1830
    %v1838 = vmul.f32 %v1669, %v1834
    %v1839 = vmul.f32 %v1674, %v1830
    %v1840 = vmul.f32 %v1674, %v1834
    %v1841 = vmul.f32 %v1679, %v1830
    %v1842 = vmul.f32 %v1679, %v1834
    %v1843 = vmul.f32 %v1684, %v1830
    %v1844 = vmul.f32 %v1684, %v1834
    %v1845 = vmul.f32 %v1689, %v1830
    %v1846 = vmul.f32 %v1689, %v1834
    %v1847 = vmul.f32 %v1694, %v1830
    %v1848 = vmul.f32 %v1694, %v1834
    %v1849 = vmul.f32 %v1699, %v1830
    %v1850 = vmul.f32 %v1699, %v1834
    %v1851 = vmul.f32 %v1704, %v1830
    %v1852 = vmul.f32 %v1704, %v1834
    %v1853 = vmul.f32 %v1709, %v1830
    %v1854 = vmul.f32 %v1709, %v1834
    %v1855 = vmul.f32 %v1714, %v1830
    %v1856 = vmul.f32 %v1714, %v1834
    %v1857 = vmul.f32 %v1719, %v1830
    %v1858 = vmul.f32 %v1719, %v1834
    %v1859 = vmul.f32 %v1724, %v1830
    %v1860 = vmul.f32 %v1724, %v1834
    %v1861 = vmul.f32 %v1729, %v1830
    %v1862 = vmul.f32 %v1729, %v1834
    %v1863 = vmul.f32 %v1734, %v1830
    %v1864 = vmul.f32 %v1734, %v1834
    %v1865 = vmul.f32 %v1739, %v1830
    %v1866 = vmul.f32 %v1739, %v1834
    %v1867 = vmul.f32 %v1744, %v1830
    %v1868 = vmul.f32 %v1744, %v1834
    %v1869 = vmul.f32 %v1749, %v1830
    %v1870 = vmul.f32 %v1749, %v1834
    %v1871 = vmul.f32 %v1754, %v1830
    %v1872 = vmul.f32 %v1754, %v1834
    %v1873 = vmul.f32 %v1759, %v1830
    %v1874 = vmul.f32 %v1759, %v1834
    %v1875 = vmul.f32 %v1764, %v1830
    %v1876 = vmul.f32 %v1764, %v1834
    %v1877 = vmul.f32 %v1769, %v1830
    %v1878 = vmul.f32 %v1769, %v1834
    %v1879 = vmul.f32 %v1774, %v1830
    %v1880 = vmul.f32 %v1774, %v1834
    %v1881 = vmul.f32 %v1779, %v1830
    %v1882 = vmul.f32 %v1779, %v1834
    %v1883 = vmul.f32 %v1784, %v1830
    %v1884 = vmul.f32 %v1784, %v1834
    %v1885 = vmul.f32 %v1789, %v1830
    %v1886 = vmul.f32 %v1789, %v1834
    %v1887 = vmul.f32 %v1794, %v1830
    %v1888 = vmul.f32 %v1794, %v1834
    %v1889 = vmul.f32 %v1799, %v1830
    %v1890 = vmul.f32 %v1799, %v1834
    %v1891 = vmul.f32 %v1804, %v1830
    %v1892 = vmul.f32 %v1804, %v1834
    %v1893 = vmul.f32 %v1809, %v1830
    %v1894 = vmul.f32 %v1809, %v1834
    %v1895 = vmul.f32 %v1814, %v1830
    %v1896 = vmul.f32 %v1814, %v1834
    %v1897 = vmul.f32 %v1819, %v1830
    %v1898 = vmul.f32 %v1819, %v1834
    %v1899 = vmul.f32 %v1824, %v1830
    %v1900 = vmul.f32 %v1824, %v1834
    %v1901 = vrsqrt.pop %v1837
    %v1902 = vmul.f32 %v1837, %v1901
    %vm1903 = vcmp.eq.f32.partialorder %v1837, inf
    %v1904 = vsel %vm1903, %v1837, %v1902
    %vm1905 = vcmp.eq.f32.partialorder %v1837, 0.0
    %v1906 = vand.u32 %v1837, 2147483648
    %v1907 = vsel %vm1905, %v1906, %v1904
    %v1908 = vrsqrt.pop %v1838
    %v1909 = vmul.f32 %v1838, %v1908
    %vm1910 = vcmp.eq.f32.partialorder %v1838, inf
    %v1911 = vsel %vm1910, %v1838, %v1909
    %vm1912 = vcmp.eq.f32.partialorder %v1838, 0.0
    %v1913 = vand.u32 %v1838, 2147483648
    %v1914 = vsel %vm1912, %v1913, %v1911
    %v1915 = vrsqrt.pop %v1839
    %v1916 = vmul.f32 %v1839, %v1915
    %vm1917 = vcmp.eq.f32.partialorder %v1839, inf
    %v1918 = vsel %vm1917, %v1839, %v1916
    %vm1919 = vcmp.eq.f32.partialorder %v1839, 0.0
    %v1920 = vand.u32 %v1839, 2147483648
    %v1921 = vsel %vm1919, %v1920, %v1918
    %v1922 = vrsqrt.pop %v1840
    %v1923 = vmul.f32 %v1840, %v1922
    %vm1924 = vcmp.eq.f32.partialorder %v1840, inf
    %v1925 = vsel %vm1924, %v1840, %v1923
    %vm1926 = vcmp.eq.f32.partialorder %v1840, 0.0
    %v1927 = vand.u32 %v1840, 2147483648
    %v1928 = vsel %vm1926, %v1927, %v1925
    %v1929 = vrsqrt.pop %v1841
    %v1930 = vmul.f32 %v1841, %v1929
    %vm1931 = vcmp.eq.f32.partialorder %v1841, inf
    %v1932 = vsel %vm1931, %v1841, %v1930
    %vm1933 = vcmp.eq.f32.partialorder %v1841, 0.0
    %v1934 = vand.u32 %v1841, 2147483648
    %v1935 = vsel %vm1933, %v1934, %v1932
    %v1936 = vrsqrt.pop %v1842
    %v1937 = vmul.f32 %v1842, %v1936
    %vm1938 = vcmp.eq.f32.partialorder %v1842, inf
    %v1939 = vsel %vm1938, %v1842, %v1937
    %vm1940 = vcmp.eq.f32.partialorder %v1842, 0.0
    %v1941 = vand.u32 %v1842, 2147483648
    %v1942 = vsel %vm1940, %v1941, %v1939
    %v1943 = vrsqrt.pop %v1843
    %v1944 = vmul.f32 %v1843, %v1943
    %vm1945 = vcmp.eq.f32.partialorder %v1843, inf
    %v1946 = vsel %vm1945, %v1843, %v1944
    %vm1947 = vcmp.eq.f32.partialorder %v1843, 0.0
    %v1948 = vand.u32 %v1843, 2147483648
    %v1949 = vsel %vm1947, %v1948, %v1946
    %v1950 = vrsqrt.pop %v1844
    %v1951 = vmul.f32 %v1844, %v1950
    %vm1952 = vcmp.eq.f32.partialorder %v1844, inf
    %v1953 = vsel %vm1952, %v1844, %v1951
    %vm1954 = vcmp.eq.f32.partialorder %v1844, 0.0
    %v1955 = vand.u32 %v1844, 2147483648
    %v1956 = vsel %vm1954, %v1955, %v1953
    %v1957 = vrsqrt.pop %v1845
    %v1958 = vmul.f32 %v1845, %v1957
    %vm1959 = vcmp.eq.f32.partialorder %v1845, inf
    %v1960 = vsel %vm1959, %v1845, %v1958
    %vm1961 = vcmp.eq.f32.partialorder %v1845, 0.0
    %v1962 = vand.u32 %v1845, 2147483648
    %v1963 = vsel %vm1961, %v1962, %v1960
    %v1964 = vrsqrt.pop %v1846
    %v1965 = vmul.f32 %v1846, %v1964
    %vm1966 = vcmp.eq.f32.partialorder %v1846, inf
    %v1967 = vsel %vm1966, %v1846, %v1965
    %vm1968 = vcmp.eq.f32.partialorder %v1846, 0.0
    %v1969 = vand.u32 %v1846, 2147483648
    %v1970 = vsel %vm1968, %v1969, %v1967
    %v1971 = vrsqrt.pop %v1847
    %v1972 = vmul.f32 %v1847, %v1971
    %vm1973 = vcmp.eq.f32.partialorder %v1847, inf
    %v1974 = vsel %vm1973, %v1847, %v1972
    %vm1975 = vcmp.eq.f32.partialorder %v1847, 0.0
    %v1976 = vand.u32 %v1847, 2147483648
    %v1977 = vsel %vm1975, %v1976, %v1974
    %v1978 = vrsqrt.pop %v1848
    %v1979 = vmul.f32 %v1848, %v1978
    %vm1980 = vcmp.eq.f32.partialorder %v1848, inf
    %v1981 = vsel %vm1980, %v1848, %v1979
    %vm1982 = vcmp.eq.f32.partialorder %v1848, 0.0
    %v1983 = vand.u32 %v1848, 2147483648
    %v1984 = vsel %vm1982, %v1983, %v1981
    %v1985 = vrsqrt.pop %v1849
    %v1986 = vmul.f32 %v1849, %v1985
    %vm1987 = vcmp.eq.f32.partialorder %v1849, inf
    %v1988 = vsel %vm1987, %v1849, %v1986
    %vm1989 = vcmp.eq.f32.partialorder %v1849, 0.0
    %v1990 = vand.u32 %v1849, 2147483648
    %v1991 = vsel %vm1989, %v1990, %v1988
    %v1992 = vrsqrt.pop %v1850
    %v1993 = vmul.f32 %v1850, %v1992
    %vm1994 = vcmp.eq.f32.partialorder %v1850, inf
    %v1995 = vsel %vm1994, %v1850, %v1993
    %vm1996 = vcmp.eq.f32.partialorder %v1850, 0.0
    %v1997 = vand.u32 %v1850, 2147483648
    %v1998 = vsel %vm1996, %v1997, %v1995
    %v1999 = vrsqrt.pop %v1851
    %v2000 = vmul.f32 %v1851, %v1999
    %vm2001 = vcmp.eq.f32.partialorder %v1851, inf
    %v2002 = vsel %vm2001, %v1851, %v2000
    %vm2003 = vcmp.eq.f32.partialorder %v1851, 0.0
    %v2004 = vand.u32 %v1851, 2147483648
    %v2005 = vsel %vm2003, %v2004, %v2002
    %v2006 = vrsqrt.pop %v1852
    %v2007 = vmul.f32 %v1852, %v2006
    %vm2008 = vcmp.eq.f32.partialorder %v1852, inf
    %v2009 = vsel %vm2008, %v1852, %v2007
    %vm2010 = vcmp.eq.f32.partialorder %v1852, 0.0
    %v2011 = vand.u32 %v1852, 2147483648
    %v2012 = vsel %vm2010, %v2011, %v2009
    %v2013 = vrsqrt.pop %v1853
    %v2014 = vmul.f32 %v1853, %v2013
    %vm2015 = vcmp.eq.f32.partialorder %v1853, inf
    %v2016 = vsel %vm2015, %v1853, %v2014
    %vm2017 = vcmp.eq.f32.partialorder %v1853, 0.0
    %v2018 = vand.u32 %v1853, 2147483648
    %v2019 = vsel %vm2017, %v2018, %v2016
    %v2020 = vrsqrt.pop %v1854
    %v2021 = vmul.f32 %v1854, %v2020
    %vm2022 = vcmp.eq.f32.partialorder %v1854, inf
    %v2023 = vsel %vm2022, %v1854, %v2021
    %vm2024 = vcmp.eq.f32.partialorder %v1854, 0.0
    %v2025 = vand.u32 %v1854, 2147483648
    %v2026 = vsel %vm2024, %v2025, %v2023
    %v2027 = vrsqrt.pop %v1855
    %v2028 = vmul.f32 %v1855, %v2027
    %vm2029 = vcmp.eq.f32.partialorder %v1855, inf
    %v2030 = vsel %vm2029, %v1855, %v2028
    %vm2031 = vcmp.eq.f32.partialorder %v1855, 0.0
    %v2032 = vand.u32 %v1855, 2147483648
    %v2033 = vsel %vm2031, %v2032, %v2030
    %v2034 = vrsqrt.pop %v1856
    %v2035 = vmul.f32 %v1856, %v2034
    %vm2036 = vcmp.eq.f32.partialorder %v1856, inf
    %v2037 = vsel %vm2036, %v1856, %v2035
    %vm2038 = vcmp.eq.f32.partialorder %v1856, 0.0
    %v2039 = vand.u32 %v1856, 2147483648
    %v2040 = vsel %vm2038, %v2039, %v2037
    %v2041 = vrsqrt.pop %v1857
    %v2042 = vmul.f32 %v1857, %v2041
    %vm2043 = vcmp.eq.f32.partialorder %v1857, inf
    %v2044 = vsel %vm2043, %v1857, %v2042
    %vm2045 = vcmp.eq.f32.partialorder %v1857, 0.0
    %v2046 = vand.u32 %v1857, 2147483648
    %v2047 = vsel %vm2045, %v2046, %v2044
    %v2048 = vrsqrt.pop %v1858
    %v2049 = vmul.f32 %v1858, %v2048
    %vm2050 = vcmp.eq.f32.partialorder %v1858, inf
    %v2051 = vsel %vm2050, %v1858, %v2049
    %vm2052 = vcmp.eq.f32.partialorder %v1858, 0.0
    %v2053 = vand.u32 %v1858, 2147483648
    %v2054 = vsel %vm2052, %v2053, %v2051
    %v2055 = vrsqrt.pop %v1859
    %v2056 = vmul.f32 %v1859, %v2055
    %vm2057 = vcmp.eq.f32.partialorder %v1859, inf
    %v2058 = vsel %vm2057, %v1859, %v2056
    %vm2059 = vcmp.eq.f32.partialorder %v1859, 0.0
    %v2060 = vand.u32 %v1859, 2147483648
    %v2061 = vsel %vm2059, %v2060, %v2058
    %v2062 = vrsqrt.pop %v1860
    %v2063 = vmul.f32 %v1860, %v2062
    %vm2064 = vcmp.eq.f32.partialorder %v1860, inf
    %v2065 = vsel %vm2064, %v1860, %v2063
    %vm2066 = vcmp.eq.f32.partialorder %v1860, 0.0
    %v2067 = vand.u32 %v1860, 2147483648
    %v2068 = vsel %vm2066, %v2067, %v2065
    %v2069 = vrsqrt.pop %v1861
    %v2070 = vmul.f32 %v1861, %v2069
    %vm2071 = vcmp.eq.f32.partialorder %v1861, inf
    %v2072 = vsel %vm2071, %v1861, %v2070
    %vm2073 = vcmp.eq.f32.partialorder %v1861, 0.0
    %v2074 = vand.u32 %v1861, 2147483648
    %v2075 = vsel %vm2073, %v2074, %v2072
    %v2076 = vrsqrt.pop %v1862
    %v2077 = vmul.f32 %v1862, %v2076
    %vm2078 = vcmp.eq.f32.partialorder %v1862, inf
    %v2079 = vsel %vm2078, %v1862, %v2077
    %vm2080 = vcmp.eq.f32.partialorder %v1862, 0.0
    %v2081 = vand.u32 %v1862, 2147483648
    %v2082 = vsel %vm2080, %v2081, %v2079
    %v2083 = vrsqrt.pop %v1863
    %v2084 = vmul.f32 %v1863, %v2083
    %vm2085 = vcmp.eq.f32.partialorder %v1863, inf
    %v2086 = vsel %vm2085, %v1863, %v2084
    %vm2087 = vcmp.eq.f32.partialorder %v1863, 0.0
    %v2088 = vand.u32 %v1863, 2147483648
    %v2089 = vsel %vm2087, %v2088, %v2086
    %v2090 = vrsqrt.pop %v1864
    %v2091 = vmul.f32 %v1864, %v2090
    %vm2092 = vcmp.eq.f32.partialorder %v1864, inf
    %v2093 = vsel %vm2092, %v1864, %v2091
    %vm2094 = vcmp.eq.f32.partialorder %v1864, 0.0
    %v2095 = vand.u32 %v1864, 2147483648
    %v2096 = vsel %vm2094, %v2095, %v2093
    %v2097 = vrsqrt.pop %v1865
    %v2098 = vmul.f32 %v1865, %v2097
    %vm2099 = vcmp.eq.f32.partialorder %v1865, inf
    %v2100 = vsel %vm2099, %v1865, %v2098
    %vm2101 = vcmp.eq.f32.partialorder %v1865, 0.0
    %v2102 = vand.u32 %v1865, 2147483648
    %v2103 = vsel %vm2101, %v2102, %v2100
    %v2104 = vrsqrt.pop %v1866
    %v2105 = vmul.f32 %v1866, %v2104
    %vm2106 = vcmp.eq.f32.partialorder %v1866, inf
    %v2107 = vsel %vm2106, %v1866, %v2105
    %vm2108 = vcmp.eq.f32.partialorder %v1866, 0.0
    %v2109 = vand.u32 %v1866, 2147483648
    %v2110 = vsel %vm2108, %v2109, %v2107
    %v2111 = vrsqrt.pop %v1867
    %v2112 = vmul.f32 %v1867, %v2111
    %vm2113 = vcmp.eq.f32.partialorder %v1867, inf
    %v2114 = vsel %vm2113, %v1867, %v2112
    %vm2115 = vcmp.eq.f32.partialorder %v1867, 0.0
    %v2116 = vand.u32 %v1867, 2147483648
    %v2117 = vsel %vm2115, %v2116, %v2114
    %v2118 = vrsqrt.pop %v1868
    %v2119 = vmul.f32 %v1868, %v2118
    %vm2120 = vcmp.eq.f32.partialorder %v1868, inf
    %v2121 = vsel %vm2120, %v1868, %v2119
    %vm2122 = vcmp.eq.f32.partialorder %v1868, 0.0
    %v2123 = vand.u32 %v1868, 2147483648
    %v2124 = vsel %vm2122, %v2123, %v2121
    %v2125 = vrsqrt.pop %v1869
    %v2126 = vmul.f32 %v1869, %v2125
    %vm2127 = vcmp.eq.f32.partialorder %v1869, inf
    %v2128 = vsel %vm2127, %v1869, %v2126
    %vm2129 = vcmp.eq.f32.partialorder %v1869, 0.0
    %v2130 = vand.u32 %v1869, 2147483648
    %v2131 = vsel %vm2129, %v2130, %v2128
    %v2132 = vrsqrt.pop %v1870
    %v2133 = vmul.f32 %v1870, %v2132
    %vm2134 = vcmp.eq.f32.partialorder %v1870, inf
    %v2135 = vsel %vm2134, %v1870, %v2133
    %vm2136 = vcmp.eq.f32.partialorder %v1870, 0.0
    %v2137 = vand.u32 %v1870, 2147483648
    %v2138 = vsel %vm2136, %v2137, %v2135
    %v2139 = vrsqrt.pop %v1871
    %v2140 = vmul.f32 %v1871, %v2139
    %vm2141 = vcmp.eq.f32.partialorder %v1871, inf
    %v2142 = vsel %vm2141, %v1871, %v2140
    %vm2143 = vcmp.eq.f32.partialorder %v1871, 0.0
    %v2144 = vand.u32 %v1871, 2147483648
    %v2145 = vsel %vm2143, %v2144, %v2142
    %v2146 = vrsqrt.pop %v1872
    %v2147 = vmul.f32 %v1872, %v2146
    %vm2148 = vcmp.eq.f32.partialorder %v1872, inf
    %v2149 = vsel %vm2148, %v1872, %v2147
    %vm2150 = vcmp.eq.f32.partialorder %v1872, 0.0
    %v2151 = vand.u32 %v1872, 2147483648
    %v2152 = vsel %vm2150, %v2151, %v2149
    %v2153 = vrsqrt.pop %v1873
    %v2154 = vmul.f32 %v1873, %v2153
    %vm2155 = vcmp.eq.f32.partialorder %v1873, inf
    %v2156 = vsel %vm2155, %v1873, %v2154
    %vm2157 = vcmp.eq.f32.partialorder %v1873, 0.0
    %v2158 = vand.u32 %v1873, 2147483648
    %v2159 = vsel %vm2157, %v2158, %v2156
    %v2160 = vrsqrt.pop %v1874
    %v2161 = vmul.f32 %v1874, %v2160
    %vm2162 = vcmp.eq.f32.partialorder %v1874, inf
    %v2163 = vsel %vm2162, %v1874, %v2161
    %vm2164 = vcmp.eq.f32.partialorder %v1874, 0.0
    %v2165 = vand.u32 %v1874, 2147483648
    %v2166 = vsel %vm2164, %v2165, %v2163
    %v2167 = vrsqrt.pop %v1875
    %v2168 = vmul.f32 %v1875, %v2167
    %vm2169 = vcmp.eq.f32.partialorder %v1875, inf
    %v2170 = vsel %vm2169, %v1875, %v2168
    %vm2171 = vcmp.eq.f32.partialorder %v1875, 0.0
    %v2172 = vand.u32 %v1875, 2147483648
    %v2173 = vsel %vm2171, %v2172, %v2170
    %v2174 = vrsqrt.pop %v1876
    %v2175 = vmul.f32 %v1876, %v2174
    %vm2176 = vcmp.eq.f32.partialorder %v1876, inf
    %v2177 = vsel %vm2176, %v1876, %v2175
    %vm2178 = vcmp.eq.f32.partialorder %v1876, 0.0
    %v2179 = vand.u32 %v1876, 2147483648
    %v2180 = vsel %vm2178, %v2179, %v2177
    %v2181 = vrsqrt.pop %v1877
    %v2182 = vmul.f32 %v1877, %v2181
    %vm2183 = vcmp.eq.f32.partialorder %v1877, inf
    %v2184 = vsel %vm2183, %v1877, %v2182
    %vm2185 = vcmp.eq.f32.partialorder %v1877, 0.0
    %v2186 = vand.u32 %v1877, 2147483648
    %v2187 = vsel %vm2185, %v2186, %v2184
    %v2188 = vrsqrt.pop %v1878
    %v2189 = vmul.f32 %v1878, %v2188
    %vm2190 = vcmp.eq.f32.partialorder %v1878, inf
    %v2191 = vsel %vm2190, %v1878, %v2189
    %vm2192 = vcmp.eq.f32.partialorder %v1878, 0.0
    %v2193 = vand.u32 %v1878, 2147483648
    %v2194 = vsel %vm2192, %v2193, %v2191
    %v2195 = vrsqrt.pop %v1879
    %v2196 = vmul.f32 %v1879, %v2195
    %vm2197 = vcmp.eq.f32.partialorder %v1879, inf
    %v2198 = vsel %vm2197, %v1879, %v2196
    %vm2199 = vcmp.eq.f32.partialorder %v1879, 0.0
    %v2200 = vand.u32 %v1879, 2147483648
    %v2201 = vsel %vm2199, %v2200, %v2198
    %v2202 = vrsqrt.pop %v1880
    %v2203 = vmul.f32 %v1880, %v2202
    %vm2204 = vcmp.eq.f32.partialorder %v1880, inf
    %v2205 = vsel %vm2204, %v1880, %v2203
    %vm2206 = vcmp.eq.f32.partialorder %v1880, 0.0
    %v2207 = vand.u32 %v1880, 2147483648
    %v2208 = vsel %vm2206, %v2207, %v2205
    %v2209 = vrsqrt.pop %v1881
    %v2210 = vmul.f32 %v1881, %v2209
    %vm2211 = vcmp.eq.f32.partialorder %v1881, inf
    %v2212 = vsel %vm2211, %v1881, %v2210
    %vm2213 = vcmp.eq.f32.partialorder %v1881, 0.0
    %v2214 = vand.u32 %v1881, 2147483648
    %v2215 = vsel %vm2213, %v2214, %v2212
    %v2216 = vrsqrt.pop %v1882
    %v2217 = vmul.f32 %v1882, %v2216
    %vm2218 = vcmp.eq.f32.partialorder %v1882, inf
    %v2219 = vsel %vm2218, %v1882, %v2217
    %vm2220 = vcmp.eq.f32.partialorder %v1882, 0.0
    %v2221 = vand.u32 %v1882, 2147483648
    %v2222 = vsel %vm2220, %v2221, %v2219
    %v2223 = vrsqrt.pop %v1883
    %v2224 = vmul.f32 %v1883, %v2223
    %vm2225 = vcmp.eq.f32.partialorder %v1883, inf
    %v2226 = vsel %vm2225, %v1883, %v2224
    %vm2227 = vcmp.eq.f32.partialorder %v1883, 0.0
    %v2228 = vand.u32 %v1883, 2147483648
    %v2229 = vsel %vm2227, %v2228, %v2226
    %v2230 = vrsqrt.pop %v1884
    %v2231 = vmul.f32 %v1884, %v2230
    %vm2232 = vcmp.eq.f32.partialorder %v1884, inf
    %v2233 = vsel %vm2232, %v1884, %v2231
    %vm2234 = vcmp.eq.f32.partialorder %v1884, 0.0
    %v2235 = vand.u32 %v1884, 2147483648
    %v2236 = vsel %vm2234, %v2235, %v2233
    %v2237 = vrsqrt.pop %v1885
    %v2238 = vmul.f32 %v1885, %v2237
    %vm2239 = vcmp.eq.f32.partialorder %v1885, inf
    %v2240 = vsel %vm2239, %v1885, %v2238
    %vm2241 = vcmp.eq.f32.partialorder %v1885, 0.0
    %v2242 = vand.u32 %v1885, 2147483648
    %v2243 = vsel %vm2241, %v2242, %v2240
    %v2244 = vrsqrt.pop %v1886
    %v2245 = vmul.f32 %v1886, %v2244
    %vm2246 = vcmp.eq.f32.partialorder %v1886, inf
    %v2247 = vsel %vm2246, %v1886, %v2245
    %vm2248 = vcmp.eq.f32.partialorder %v1886, 0.0
    %v2249 = vand.u32 %v1886, 2147483648
    %v2250 = vsel %vm2248, %v2249, %v2247
    %v2251 = vrsqrt.pop %v1887
    %v2252 = vmul.f32 %v1887, %v2251
    %vm2253 = vcmp.eq.f32.partialorder %v1887, inf
    %v2254 = vsel %vm2253, %v1887, %v2252
    %vm2255 = vcmp.eq.f32.partialorder %v1887, 0.0
    %v2256 = vand.u32 %v1887, 2147483648
    %v2257 = vsel %vm2255, %v2256, %v2254
    %v2258 = vrsqrt.pop %v1888
    %v2259 = vmul.f32 %v1888, %v2258
    %vm2260 = vcmp.eq.f32.partialorder %v1888, inf
    %v2261 = vsel %vm2260, %v1888, %v2259
    %vm2262 = vcmp.eq.f32.partialorder %v1888, 0.0
    %v2263 = vand.u32 %v1888, 2147483648
    %v2264 = vsel %vm2262, %v2263, %v2261
    %v2265 = vrsqrt.pop %v1889
    %v2266 = vmul.f32 %v1889, %v2265
    %vm2267 = vcmp.eq.f32.partialorder %v1889, inf
    %v2268 = vsel %vm2267, %v1889, %v2266
    %vm2269 = vcmp.eq.f32.partialorder %v1889, 0.0
    %v2270 = vand.u32 %v1889, 2147483648
    %v2271 = vsel %vm2269, %v2270, %v2268
    %v2272 = vrsqrt.pop %v1890
    %v2273 = vmul.f32 %v1890, %v2272
    %vm2274 = vcmp.eq.f32.partialorder %v1890, inf
    %v2275 = vsel %vm2274, %v1890, %v2273
    %vm2276 = vcmp.eq.f32.partialorder %v1890, 0.0
    %v2277 = vand.u32 %v1890, 2147483648
    %v2278 = vsel %vm2276, %v2277, %v2275
    %v2279 = vrsqrt.pop %v1891
    %v2280 = vmul.f32 %v1891, %v2279
    %vm2281 = vcmp.eq.f32.partialorder %v1891, inf
    %v2282 = vsel %vm2281, %v1891, %v2280
    %vm2283 = vcmp.eq.f32.partialorder %v1891, 0.0
    %v2284 = vand.u32 %v1891, 2147483648
    %v2285 = vsel %vm2283, %v2284, %v2282
    %v2286 = vrsqrt.pop %v1892
    %v2287 = vmul.f32 %v1892, %v2286
    %vm2288 = vcmp.eq.f32.partialorder %v1892, inf
    %v2289 = vsel %vm2288, %v1892, %v2287
    %vm2290 = vcmp.eq.f32.partialorder %v1892, 0.0
    %v2291 = vand.u32 %v1892, 2147483648
    %v2292 = vsel %vm2290, %v2291, %v2289
    %v2293 = vrsqrt.pop %v1893
    %v2294 = vmul.f32 %v1893, %v2293
    %vm2295 = vcmp.eq.f32.partialorder %v1893, inf
    %v2296 = vsel %vm2295, %v1893, %v2294
    %vm2297 = vcmp.eq.f32.partialorder %v1893, 0.0
    %v2298 = vand.u32 %v1893, 2147483648
    %v2299 = vsel %vm2297, %v2298, %v2296
    %v2300 = vrsqrt.pop %v1894
    %v2301 = vmul.f32 %v1894, %v2300
    %vm2302 = vcmp.eq.f32.partialorder %v1894, inf
    %v2303 = vsel %vm2302, %v1894, %v2301
    %vm2304 = vcmp.eq.f32.partialorder %v1894, 0.0
    %v2305 = vand.u32 %v1894, 2147483648
    %v2306 = vsel %vm2304, %v2305, %v2303
    %v2307 = vrsqrt.pop %v1895
    %v2308 = vmul.f32 %v1895, %v2307
    %vm2309 = vcmp.eq.f32.partialorder %v1895, inf
    %v2310 = vsel %vm2309, %v1895, %v2308
    %vm2311 = vcmp.eq.f32.partialorder %v1895, 0.0
    %v2312 = vand.u32 %v1895, 2147483648
    %v2313 = vsel %vm2311, %v2312, %v2310
    %v2314 = vrsqrt.pop %v1896
    %v2315 = vmul.f32 %v1896, %v2314
    %vm2316 = vcmp.eq.f32.partialorder %v1896, inf
    %v2317 = vsel %vm2316, %v1896, %v2315
    %vm2318 = vcmp.eq.f32.partialorder %v1896, 0.0
    %v2319 = vand.u32 %v1896, 2147483648
    %v2320 = vsel %vm2318, %v2319, %v2317
    %v2321 = vrsqrt.pop %v1897
    %v2322 = vmul.f32 %v1897, %v2321
    %vm2323 = vcmp.eq.f32.partialorder %v1897, inf
    %v2324 = vsel %vm2323, %v1897, %v2322
    %vm2325 = vcmp.eq.f32.partialorder %v1897, 0.0
    %v2326 = vand.u32 %v1897, 2147483648
    %v2327 = vsel %vm2325, %v2326, %v2324
    %v2328 = vrsqrt.pop %v1898
    %v2329 = vmul.f32 %v1898, %v2328
    %vm2330 = vcmp.eq.f32.partialorder %v1898, inf
    %v2331 = vsel %vm2330, %v1898, %v2329
    %vm2332 = vcmp.eq.f32.partialorder %v1898, 0.0
    %v2333 = vand.u32 %v1898, 2147483648
    %v2334 = vsel %vm2332, %v2333, %v2331
    %v2335 = vrsqrt.pop %v1899
    %v2336 = vmul.f32 %v1899, %v2335
    %vm2337 = vcmp.eq.f32.partialorder %v1899, inf
    %v2338 = vsel %vm2337, %v1899, %v2336
    %vm2339 = vcmp.eq.f32.partialorder %v1899, 0.0
    %v2340 = vand.u32 %v1899, 2147483648
    %v2341 = vsel %vm2339, %v2340, %v2338
    %v2342 = vrsqrt.pop %v1900
    %v2343 = vmul.f32 %v1900, %v2342
    %vm2344 = vcmp.eq.f32.partialorder %v1900, inf
    %v2345 = vsel %vm2344, %v1900, %v2343
    %vm2346 = vcmp.eq.f32.partialorder %v1900, 0.0
    %v2347 = vand.u32 %v1900, 2147483648
    %v2348 = vsel %vm2346, %v2347, %v2345
    %v2349 = vmul.f32 %v1008, %v1907
    %v2350 = vmul.f32 %v1009, %v1914
    %v2351 = vmul.f32 %v1010, %v1921
    %v2352 = vmul.f32 %v1011, %v1928
    %v2353 = vmul.f32 %v1012, %v1935
    %v2354 = vmul.f32 %v1013, %v1942
    %v2355 = vmul.f32 %v1014, %v1949
    %v2356 = vmul.f32 %v1015, %v1956
    %v2357 = vmul.f32 %v1016, %v1963
    %v2358 = vmul.f32 %v1017, %v1970
    %v2359 = vmul.f32 %v1018, %v1977
    %v2360 = vmul.f32 %v1019, %v1984
    %v2361 = vmul.f32 %v1020, %v1991
    %v2362 = vmul.f32 %v1021, %v1998
    %v2363 = vmul.f32 %v1022, %v2005
    %v2364 = vmul.f32 %v1023, %v2012
    %v2365 = vmul.f32 %v1024, %v2019
    %v2366 = vmul.f32 %v1025, %v2026
    %v2367 = vmul.f32 %v1026, %v2033
    %v2368 = vmul.f32 %v1027, %v2040
    %v2369 = vmul.f32 %v1028, %v2047
    %v2370 = vmul.f32 %v1029, %v2054
    %v2371 = vmul.f32 %v1030, %v2061
    %v2372 = vmul.f32 %v1031, %v2068
    %v2373 = vmul.f32 %v1032, %v2075
    %v2374 = vmul.f32 %v1033, %v2082
    %v2375 = vmul.f32 %v1034, %v2089
    %v2376 = vmul.f32 %v1035, %v2096
    %v2377 = vmul.f32 %v1036, %v2103
    %v2378 = vmul.f32 %v1037, %v2110
    %v2379 = vmul.f32 %v1038, %v2117
    %v2380 = vmul.f32 %v1039, %v2124
    %v2381 = vmul.f32 %v1040, %v2131
    %v2382 = vmul.f32 %v1041, %v2138
    %v2383 = vmul.f32 %v1042, %v2145
    %v2384 = vmul.f32 %v1043, %v2152
    %v2385 = vmul.f32 %v1044, %v2159
    %v2386 = vmul.f32 %v1045, %v2166
    %v2387 = vmul.f32 %v1046, %v2173
    %v2388 = vmul.f32 %v1047, %v2180
    %v2389 = vmul.f32 %v1048, %v2187
    %v2390 = vmul.f32 %v1049, %v2194
    %v2391 = vmul.f32 %v1050, %v2201
    %v2392 = vmul.f32 %v1051, %v2208
    %v2393 = vmul.f32 %v1052, %v2215
    %v2394 = vmul.f32 %v1053, %v2222
    %v2395 = vmul.f32 %v1054, %v2229
    %v2396 = vmul.f32 %v1055, %v2236
    %v2397 = vmul.f32 %v1056, %v2243
    %v2398 = vmul.f32 %v1057, %v2250
    %v2399 = vmul.f32 %v1058, %v2257
    %v2400 = vmul.f32 %v1059, %v2264
    %v2401 = vmul.f32 %v1060, %v2271
    %v2402 = vmul.f32 %v1061, %v2278
    %v2403 = vmul.f32 %v1062, %v2285
    %v2404 = vmul.f32 %v1063, %v2292
    %v2405 = vmul.f32 %v1064, %v2299
    %v2406 = vmul.f32 %v1065, %v2306
    %v2407 = vmul.f32 %v1066, %v2313
    %v2408 = vmul.f32 %v1067, %v2320
    %v2409 = vmul.f32 %v1068, %v2327
    %v2410 = vmul.f32 %v1069, %v2334
    %v2411 = vmul.f32 %v1070, %v2341
    %v2412 = vmul.f32 %v1071, %v2348
    %v2413 = vmul.f32 %v2349, 0.1
    %v2414 = vmul.f32 %v2350, 0.1
    %v2415 = vmul.f32 %v2351, 0.1
    %v2416 = vmul.f32 %v2352, 0.1
    %v2417 = vmul.f32 %v2353, 0.1
    %v2418 = vmul.f32 %v2354, 0.1
    %v2419 = vmul.f32 %v2355, 0.1
    %v2420 = vmul.f32 %v2356, 0.1
    %v2421 = vmul.f32 %v2357, 0.1
    %v2422 = vmul.f32 %v2358, 0.1
    %v2423 = vmul.f32 %v2359, 0.1
    %v2424 = vmul.f32 %v2360, 0.1
    %v2425 = vmul.f32 %v2361, 0.1
    %v2426 = vmul.f32 %v2362, 0.1
    %v2427 = vmul.f32 %v2363, 0.1
    %v2428 = vmul.f32 %v2364, 0.1
    %v2429 = vmul.f32 %v2365, 0.1
    %v2430 = vmul.f32 %v2366, 0.1
    %v2431 = vmul.f32 %v2367, 0.1
    %v2432 = vmul.f32 %v2368, 0.1
    %v2433 = vmul.f32 %v2369, 0.1
    %v2434 = vmul.f32 %v2370, 0.1
    %v2435 = vmul.f32 %v2371, 0.1
    %v2436 = vmul.f32 %v2372, 0.1
    %v2437 = vmul.f32 %v2373, 0.1
    %v2438 = vmul.f32 %v2374, 0.1
    %v2439 = vmul.f32 %v2375, 0.1
    %v2440 = vmul.f32 %v2376, 0.1
    %v2441 = vmul.f32 %v2377, 0.1
    %v2442 = vmul.f32 %v2378, 0.1
    %v2443 = vmul.f32 %v2379, 0.1
    %v2444 = vmul.f32 %v2380, 0.1
    %v2445 = vmul.f32 %v2381, 0.1
    %v2446 = vmul.f32 %v2382, 0.1
    %v2447 = vmul.f32 %v2383, 0.1
    %v2448 = vmul.f32 %v2384, 0.1
    %v2449 = vmul.f32 %v2385, 0.1
    %v2450 = vmul.f32 %v2386, 0.1
    %v2451 = vmul.f32 %v2387, 0.1
    %v2452 = vmul.f32 %v2388, 0.1
    %v2453 = vmul.f32 %v2389, 0.1
    %v2454 = vmul.f32 %v2390, 0.1
    %v2455 = vmul.f32 %v2391, 0.1
    %v2456 = vmul.f32 %v2392, 0.1
    %v2457 = vmul.f32 %v2393, 0.1
    %v2458 = vmul.f32 %v2394, 0.1
    %v2459 = vmul.f32 %v2395, 0.1
    %v2460 = vmul.f32 %v2396, 0.1
    %v2461 = vmul.f32 %v2397, 0.1
    %v2462 = vmul.f32 %v2398, 0.1
    %v2463 = vmul.f32 %v2399, 0.1
    %v2464 = vmul.f32 %v2400, 0.1
    %v2465 = vmul.f32 %v2401, 0.1
    %v2466 = vmul.f32 %v2402, 0.1
    %v2467 = vmul.f32 %v2403, 0.1
    %v2468 = vmul.f32 %v2404, 0.1
    %v2469 = vmul.f32 %v2405, 0.1
    %v2470 = vmul.f32 %v2406, 0.1
    %v2471 = vmul.f32 %v2407, 0.1
    %v2472 = vmul.f32 %v2408, 0.1
    %v2473 = vmul.f32 %v2409, 0.1
    %v2474 = vmul.f32 %v2410, 0.1
    %v2475 = vmul.f32 %v2411, 0.1
    %v2476 = vmul.f32 %v2412, 0.1
    %v2477 = vsub.f32 %v481, %v2413
    %v2478 = vsub.f32 %v482, %v2414
    %v2479 = vsub.f32 %v483, %v2415
    %v2480 = vsub.f32 %v484, %v2416
    %v2481 = vsub.f32 %v485, %v2417
    %v2482 = vsub.f32 %v486, %v2418
    %v2483 = vsub.f32 %v487, %v2419
    %v2484 = vsub.f32 %v488, %v2420
    %v2485 = vsub.f32 %v489, %v2421
    %v2486 = vsub.f32 %v490, %v2422
    %v2487 = vsub.f32 %v491, %v2423
    %v2488 = vsub.f32 %v492, %v2424
    %v2489 = vsub.f32 %v493, %v2425
    %v2490 = vsub.f32 %v494, %v2426
    %v2491 = vsub.f32 %v495, %v2427
    %v2492 = vsub.f32 %v496, %v2428
    %v2493 = vsub.f32 %v497, %v2429
    %v2494 = vsub.f32 %v498, %v2430
    %v2495 = vsub.f32 %v499, %v2431
    %v2496 = vsub.f32 %v500, %v2432
    %v2497 = vsub.f32 %v501, %v2433
    %v2498 = vsub.f32 %v502, %v2434
    %v2499 = vsub.f32 %v503, %v2435
    %v2500 = vsub.f32 %v504, %v2436
    %v2501 = vsub.f32 %v505, %v2437
    %v2502 = vsub.f32 %v506, %v2438
    %v2503 = vsub.f32 %v507, %v2439
    %v2504 = vsub.f32 %v508, %v2440
    %v2505 = vsub.f32 %v509, %v2441
    %v2506 = vsub.f32 %v510, %v2442
    %v2507 = vsub.f32 %v511, %v2443
    %v2508 = vsub.f32 %v512, %v2444
    %v2509 = vsub.f32 %v513, %v2445
    %v2510 = vsub.f32 %v514, %v2446
    %v2511 = vsub.f32 %v515, %v2447
    %v2512 = vsub.f32 %v516, %v2448
    %v2513 = vsub.f32 %v517, %v2449
    %v2514 = vsub.f32 %v518, %v2450
    %v2515 = vsub.f32 %v519, %v2451
    %v2516 = vsub.f32 %v520, %v2452
    %v2517 = vsub.f32 %v521, %v2453
    %v2518 = vsub.f32 %v522, %v2454
    %v2519 = vsub.f32 %v523, %v2455
    %v2520 = vsub.f32 %v524, %v2456
    %v2521 = vsub.f32 %v525, %v2457
    %v2522 = vsub.f32 %v526, %v2458
    %v2523 = vsub.f32 %v527, %v2459
    %v2524 = vsub.f32 %v528, %v2460
    %v2525 = vsub.f32 %v529, %v2461
    %v2526 = vsub.f32 %v530, %v2462
    %v2527 = vsub.f32 %v531, %v2463
    %v2528 = vsub.f32 %v532, %v2464
    %v2529 = vsub.f32 %v533, %v2465
    %v2530 = vsub.f32 %v534, %v2466
    %v2531 = vsub.f32 %v535, %v2467
    %v2532 = vsub.f32 %v536, %v2468
    %v2533 = vsub.f32 %v537, %v2469
    %v2534 = vsub.f32 %v538, %v2470
    %v2535 = vsub.f32 %v539, %v2471
    %v2536 = vsub.f32 %v540, %v2472
    %v2537 = vsub.f32 %v541, %v2473
    %v2538 = vsub.f32 %v542, %v2474
    %v2539 = vsub.f32 %v543, %v2475
    %v2540 = vsub.f32 %v544, %v2476
    %v2541 = vmul.f32 %v2477, 1.442695
    %v2542 = vpow.pop %v2541
    %v2543 = vmul.f32 %v2478, 1.442695
    %v2544 = vpow.pop %v2543
    %v2545 = vmul.f32 %v2479, 1.442695
    %v2546 = vpow.pop %v2545
    %v2547 = vmul.f32 %v2480, 1.442695
    %v2548 = vpow.pop %v2547
    %v2549 = vmul.f32 %v2481, 1.442695
    %v2550 = vpow.pop %v2549
    %v2551 = vmul.f32 %v2482, 1.442695
    %v2552 = vpow.pop %v2551
    %v2553 = vmul.f32 %v2483, 1.442695
    %v2554 = vpow.pop %v2553
    %v2555 = vmul.f32 %v2484, 1.442695
    %v2556 = vpow.pop %v2555
    %v2557 = vmul.f32 %v2485, 1.442695
    %v2558 = vpow.pop %v2557
    %v2559 = vmul.f32 %v2486, 1.442695
    %v2560 = vpow.pop %v2559
    %v2561 = vmul.f32 %v2487, 1.442695
    %v2562 = vpow.pop %v2561
    %v2563 = vmul.f32 %v2488, 1.442695
    %v2564 = vpow.pop %v2563
    %v2565 = vmul.f32 %v2489, 1.442695
    %v2566 = vpow.pop %v2565
    %v2567 = vmul.f32 %v2490, 1.442695
    %v2568 = vpow.pop %v2567
    %v2569 = vmul.f32 %v2491, 1.442695
    %v2570 = vpow.pop %v2569
    %v2571 = vmul.f32 %v2492, 1.442695
    %v2572 = vpow.pop %v2571
    %v2573 = vmul.f32 %v2493, 1.442695
    %v2574 = vpow.pop %v2573
    %v2575 = vmul.f32 %v2494, 1.442695
    %v2576 = vpow.pop %v2575
    %v2577 = vmul.f32 %v2495, 1.442695
    %v2578 = vpow.pop %v2577
    %v2579 = vmul.f32 %v2496, 1.442695
    %v2580 = vpow.pop %v2579
    %v2581 = vmul.f32 %v2497, 1.442695
    %v2582 = vpow.pop %v2581
    %v2583 = vmul.f32 %v2498, 1.442695
    %v2584 = vpow.pop %v2583
    %v2585 = vmul.f32 %v2499, 1.442695
    %v2586 = vpow.pop %v2585
    %v2587 = vmul.f32 %v2500, 1.442695
    %v2588 = vpow.pop %v2587
    %v2589 = vmul.f32 %v2501, 1.442695
    %v2590 = vpow.pop %v2589
    %v2591 = vmul.f32 %v2502, 1.442695
    %v2592 = vpow.pop %v2591
    %v2593 = vmul.f32 %v2503, 1.442695
    %v2594 = vpow.pop %v2593
    %v2595 = vmul.f32 %v2504, 1.442695
    %v2596 = vpow.pop %v2595
    %v2597 = vmul.f32 %v2505, 1.442695
    %v2598 = vpow.pop %v2597
    %v2599 = vmul.f32 %v2506, 1.442695
    %v2600 = vpow.pop %v2599
    %v2601 = vmul.f32 %v2507, 1.442695
    %v2602 = vpow.pop %v2601
    %v2603 = vmul.f32 %v2508, 1.442695
    %v2604 = vpow.pop %v2603
    %v2605 = vmul.f32 %v2509, 1.442695
    %v2606 = vpow.pop %v2605
    %v2607 = vmul.f32 %v2510, 1.442695
    %v2608 = vpow.pop %v2607
    %v2609 = vmul.f32 %v2511, 1.442695
    %v2610 = vpow.pop %v2609
    %v2611 = vmul.f32 %v2512, 1.442695
    %v2612 = vpow.pop %v2611
    %v2613 = vmul.f32 %v2513, 1.442695
    %v2614 = vpow.pop %v2613
    %v2615 = vmul.f32 %v2514, 1.442695
    %v2616 = vpow.pop %v2615
    %v2617 = vmul.f32 %v2515, 1.442695
    %v2618 = vpow.pop %v2617
    %v2619 = vmul.f32 %v2516, 1.442695
    %v2620 = vpow.pop %v2619
    %v2621 = vmul.f32 %v2517, 1.442695
    %v2622 = vpow.pop %v2621
    %v2623 = vmul.f32 %v2518, 1.442695
    %v2624 = vpow.pop %v2623
    %v2625 = vmul.f32 %v2519, 1.442695
    %v2626 = vpow.pop %v2625
    %v2627 = vmul.f32 %v2520, 1.442695
    %v2628 = vpow.pop %v2627
    %v2629 = vmul.f32 %v2521, 1.442695
    %v2630 = vpow.pop %v2629
    %v2631 = vmul.f32 %v2522, 1.442695
    %v2632 = vpow.pop %v2631
    %v2633 = vmul.f32 %v2523, 1.442695
    %v2634 = vpow.pop %v2633
    %v2635 = vmul.f32 %v2524, 1.442695
    %v2636 = vpow.pop %v2635
    %v2637 = vmul.f32 %v2525, 1.442695
    %v2638 = vpow.pop %v2637
    %v2639 = vmul.f32 %v2526, 1.442695
    %v2640 = vpow.pop %v2639
    %v2641 = vmul.f32 %v2527, 1.442695
    %v2642 = vpow.pop %v2641
    %v2643 = vmul.f32 %v2528, 1.442695
    %v2644 = vpow.pop %v2643
    %v2645 = vmul.f32 %v2529, 1.442695
    %v2646 = vpow.pop %v2645
    %v2647 = vmul.f32 %v2530, 1.442695
    %v2648 = vpow.pop %v2647
    %v2649 = vmul.f32 %v2531, 1.442695
    %v2650 = vpow.pop %v2649
    %v2651 = vmul.f32 %v2532, 1.442695
    %v2652 = vpow.pop %v2651
    %v2653 = vmul.f32 %v2533, 1.442695
    %v2654 = vpow.pop %v2653
    %v2655 = vmul.f32 %v2534, 1.442695
    %v2656 = vpow.pop %v2655
    %v2657 = vmul.f32 %v2535, 1.442695
    %v2658 = vpow.pop %v2657
    %v2659 = vmul.f32 %v2536, 1.442695
    %v2660 = vpow.pop %v2659
    %v2661 = vmul.f32 %v2537, 1.442695
    %v2662 = vpow.pop %v2661
    %v2663 = vmul.f32 %v2538, 1.442695
    %v2664 = vpow.pop %v2663
    %v2665 = vmul.f32 %v2539, 1.442695
    %v2666 = vpow.pop %v2665
    %v2667 = vmul.f32 %v2540, 1.442695
    %v2668 = vpow.pop %v2667
    %v2669 = vmul.f32 %v2542, %v645
    %v2670 = vmul.f32 %v2544, %v646
    %v2671 = vmul.f32 %v2546, %v647
    %v2672 = vmul.f32 %v2548, %v648
    %v2673 = vmul.f32 %v2550, %v649
    %v2674 = vmul.f32 %v2552, %v650
    %v2675 = vmul.f32 %v2554, %v651
    %v2676 = vmul.f32 %v2556, %v652
    %v2677 = vmul.f32 %v2558, %v653
    %v2678 = vmul.f32 %v2560, %v654
    %v2679 = vmul.f32 %v2562, %v655
    %v2680 = vmul.f32 %v2564, %v656
    %v2681 = vmul.f32 %v2566, %v657
    %v2682 = vmul.f32 %v2568, %v658
    %v2683 = vmul.f32 %v2570, %v659
    %v2684 = vmul.f32 %v2572, %v660
    %v2685 = vmul.f32 %v2574, %v661
    %v2686 = vmul.f32 %v2576, %v662
    %v2687 = vmul.f32 %v2578, %v663
    %v2688 = vmul.f32 %v2580, %v664
    %v2689 = vmul.f32 %v2582, %v665
    %v2690 = vmul.f32 %v2584, %v666
    %v2691 = vmul.f32 %v2586, %v667
    %v2692 = vmul.f32 %v2588, %v668
    %v2693 = vmul.f32 %v2590, %v669
    %v2694 = vmul.f32 %v2592, %v670
    %v2695 = vmul.f32 %v2594, %v671
    %v2696 = vmul.f32 %v2596, %v672
    %v2697 = vmul.f32 %v2598, %v673
    %v2698 = vmul.f32 %v2600, %v674
    %v2699 = vmul.f32 %v2602, %v675
    %v2700 = vmul.f32 %v2604, %v676
    %v2701 = vmul.f32 %v2606, %v677
    %v2702 = vmul.f32 %v2608, %v678
    %v2703 = vmul.f32 %v2610, %v679
    %v2704 = vmul.f32 %v2612, %v680
    %v2705 = vmul.f32 %v2614, %v681
    %v2706 = vmul.f32 %v2616, %v682
    %v2707 = vmul.f32 %v2618, %v683
    %v2708 = vmul.f32 %v2620, %v684
    %v2709 = vmul.f32 %v2622, %v685
    %v2710 = vmul.f32 %v2624, %v686
    %v2711 = vmul.f32 %v2626, %v687
    %v2712 = vmul.f32 %v2628, %v688
    %v2713 = vmul.f32 %v2630, %v689
    %v2714 = vmul.f32 %v2632, %v690
    %v2715 = vmul.f32 %v2634, %v691
    %v2716 = vmul.f32 %v2636, %v692
    %v2717 = vmul.f32 %v2638, %v693
    %v2718 = vmul.f32 %v2640, %v694
    %v2719 = vmul.f32 %v2642, %v695
    %v2720 = vmul.f32 %v2644, %v696
    %v2721 = vmul.f32 %v2646, %v697
    %v2722 = vmul.f32 %v2648, %v698
    %v2723 = vmul.f32 %v2650, %v699
    %v2724 = vmul.f32 %v2652, %v700
    %v2725 = vmul.f32 %v2654, %v701
    %v2726 = vmul.f32 %v2656, %v702
    %v2727 = vmul.f32 %v2658, %v703
    %v2728 = vmul.f32 %v2660, %v704
    %v2729 = vmul.f32 %v2662, %v705
    %v2730 = vmul.f32 %v2664, %v706
    %v2731 = vmul.f32 %v2666, %v707
    %v2732 = vmul.f32 %v2668, %v708
    %v2733 = vmul.f32 %v2542, %v1072
    %v2734 = vmul.f32 %v2544, %v1073
    %v2735 = vmul.f32 %v2546, %v1074
    %v2736 = vmul.f32 %v2548, %v1075
    %v2737 = vmul.f32 %v2550, %v1076
    %v2738 = vmul.f32 %v2552, %v1077
    %v2739 = vmul.f32 %v2554, %v1078
    %v2740 = vmul.f32 %v2556, %v1079
    %v2741 = vmul.f32 %v2558, %v1080
    %v2742 = vmul.f32 %v2560, %v1081
    %v2743 = vmul.f32 %v2562, %v1082
    %v2744 = vmul.f32 %v2564, %v1083
    %v2745 = vmul.f32 %v2566, %v1084
    %v2746 = vmul.f32 %v2568, %v1085
    %v2747 = vmul.f32 %v2570, %v1086
    %v2748 = vmul.f32 %v2572, %v1087
    %v2749 = vmul.f32 %v2574, %v1088
    %v2750 = vmul.f32 %v2576, %v1089
    %v2751 = vmul.f32 %v2578, %v1090
    %v2752 = vmul.f32 %v2580, %v1091
    %v2753 = vmul.f32 %v2582, %v1092
    %v2754 = vmul.f32 %v2584, %v1093
    %v2755 = vmul.f32 %v2586, %v1094
    %v2756 = vmul.f32 %v2588, %v1095
    %v2757 = vmul.f32 %v2590, %v1096
    %v2758 = vmul.f32 %v2592, %v1097
    %v2759 = vmul.f32 %v2594, %v1098
    %v2760 = vmul.f32 %v2596, %v1099
    %v2761 = vmul.f32 %v2598, %v1100
    %v2762 = vmul.f32 %v2600, %v1101
    %v2763 = vmul.f32 %v2602, %v1102
    %v2764 = vmul.f32 %v2604, %v1103
    %v2765 = vmul.f32 %v2606, %v1104
    %v2766 = vmul.f32 %v2608, %v1105
    %v2767 = vmul.f32 %v2610, %v1106
    %v2768 = vmul.f32 %v2612, %v1107
    %v2769 = vmul.f32 %v2614, %v1108
    %v2770 = vmul.f32 %v2616, %v1109
    %v2771 = vmul.f32 %v2618, %v1110
    %v2772 = vmul.f32 %v2620, %v1111
    %v2773 = vmul.f32 %v2622, %v1112
    %v2774 = vmul.f32 %v2624, %v1113
    %v2775 = vmul.f32 %v2626, %v1114
    %v2776 = vmul.f32 %v2628, %v1115
    %v2777 = vmul.f32 %v2630, %v1116
    %v2778 = vmul.f32 %v2632, %v1117
    %v2779 = vmul.f32 %v2634, %v1118
    %v2780 = vmul.f32 %v2636, %v1119
    %v2781 = vmul.f32 %v2638, %v1120
    %v2782 = vmul.f32 %v2640, %v1121
    %v2783 = vmul.f32 %v2642, %v1122
    %v2784 = vmul.f32 %v2644, %v1123
    %v2785 = vmul.f32 %v2646, %v1124
    %v2786 = vmul.f32 %v2648, %v1125
    %v2787 = vmul.f32 %v2650, %v1126
    %v2788 = vmul.f32 %v2652, %v1127
    %v2789 = vmul.f32 %v2654, %v1128
    %v2790 = vmul.f32 %v2656, %v1129
    %v2791 = vmul.f32 %v2658, %v1130
    %v2792 = vmul.f32 %v2660, %v1131
    %v2793 = vmul.f32 %v2662, %v1132
    %v2794 = vmul.f32 %v2664, %v1133
    %v2795 = vmul.f32 %v2666, %v1134
    %v2796 = vmul.f32 %v2668, %v1135
    %v2797 = vadd.f32 %v2733, %v2734
    %2798 = vadd.xlane.f32.xlu0 %v2797
    %v2799 = vpop.xlane.xlu0 %2798
    %v2800 = vadd.f32 %v2735, %v2736
    %2801 = vadd.xlane.f32.xlu0 %v2800
    %v2802 = vpop.xlane.xlu0 %2801
    %v2803 = vadd.f32 %v2737, %v2738
    %2804 = vadd.xlane.f32.xlu0 %v2803
    %v2805 = vpop.xlane.xlu0 %2804
    %v2806 = vadd.f32 %v2739, %v2740
    %2807 = vadd.xlane.f32.xlu0 %v2806
    %v2808 = vpop.xlane.xlu0 %2807
    %v2809 = vadd.f32 %v2741, %v2742
    %2810 = vadd.xlane.f32.xlu0 %v2809
    %v2811 = vpop.xlane.xlu0 %2810
    %v2812 = vadd.f32 %v2743, %v2744
    %2813 = vadd.xlane.f32.xlu0 %v2812
    %v2814 = vpop.xlane.xlu0 %2813
    %v2815 = vadd.f32 %v2745, %v2746
    %2816 = vadd.xlane.f32.xlu0 %v2815
    %v2817 = vpop.xlane.xlu0 %2816
    %v2818 = vadd.f32 %v2747, %v2748
    %2819 = vadd.xlane.f32.xlu0 %v2818
    %v2820 = vpop.xlane.xlu0 %2819
    %v2821 = vadd.f32 %v2749, %v2750
    %2822 = vadd.xlane.f32.xlu0 %v2821
    %v2823 = vpop.xlane.xlu0 %2822
    %v2824 = vadd.f32 %v2751, %v2752
    %2825 = vadd.xlane.f32.xlu0 %v2824
    %v2826 = vpop.xlane.xlu0 %2825
    %v2827 = vadd.f32 %v2753, %v2754
    %2828 = vadd.xlane.f32.xlu0 %v2827
    %v2829 = vpop.xlane.xlu0 %2828
    %v2830 = vadd.f32 %v2755, %v2756
    %2831 = vadd.xlane.f32.xlu0 %v2830
    %v2832 = vpop.xlane.xlu0 %2831
    %v2833 = vadd.f32 %v2757, %v2758
    %2834 = vadd.xlane.f32.xlu0 %v2833
    %v2835 = vpop.xlane.xlu0 %2834
    %v2836 = vadd.f32 %v2759, %v2760
    %2837 = vadd.xlane.f32.xlu0 %v2836
    %v2838 = vpop.xlane.xlu0 %2837
    %v2839 = vadd.f32 %v2761, %v2762
    %2840 = vadd.xlane.f32.xlu0 %v2839
    %v2841 = vpop.xlane.xlu0 %2840
    %v2842 = vadd.f32 %v2763, %v2764
    %2843 = vadd.xlane.f32.xlu0 %v2842
    %v2844 = vpop.xlane.xlu0 %2843
    %v2845 = vadd.f32 %v2765, %v2766
    %2846 = vadd.xlane.f32.xlu0 %v2845
    %v2847 = vpop.xlane.xlu0 %2846
    %v2848 = vadd.f32 %v2767, %v2768
    %2849 = vadd.xlane.f32.xlu0 %v2848
    %v2850 = vpop.xlane.xlu0 %2849
    %v2851 = vadd.f32 %v2769, %v2770
    %2852 = vadd.xlane.f32.xlu0 %v2851
    %v2853 = vpop.xlane.xlu0 %2852
    %v2854 = vadd.f32 %v2771, %v2772
    %2855 = vadd.xlane.f32.xlu0 %v2854
    %v2856 = vpop.xlane.xlu0 %2855
    %v2857 = vadd.f32 %v2773, %v2774
    %2858 = vadd.xlane.f32.xlu0 %v2857
    %v2859 = vpop.xlane.xlu0 %2858
    %v2860 = vadd.f32 %v2775, %v2776
    %2861 = vadd.xlane.f32.xlu0 %v2860
    %v2862 = vpop.xlane.xlu0 %2861
    %v2863 = vadd.f32 %v2777, %v2778
    %2864 = vadd.xlane.f32.xlu0 %v2863
    %v2865 = vpop.xlane.xlu0 %2864
    %v2866 = vadd.f32 %v2779, %v2780
    %2867 = vadd.xlane.f32.xlu0 %v2866
    %v2868 = vpop.xlane.xlu0 %2867
    %v2869 = vadd.f32 %v2781, %v2782
    %2870 = vadd.xlane.f32.xlu0 %v2869
    %v2871 = vpop.xlane.xlu0 %2870
    %v2872 = vadd.f32 %v2783, %v2784
    %2873 = vadd.xlane.f32.xlu0 %v2872
    %v2874 = vpop.xlane.xlu0 %2873
    %v2875 = vadd.f32 %v2785, %v2786
    %2876 = vadd.xlane.f32.xlu0 %v2875
    %v2877 = vpop.xlane.xlu0 %2876
    %v2878 = vadd.f32 %v2787, %v2788
    %2879 = vadd.xlane.f32.xlu0 %v2878
    %v2880 = vpop.xlane.xlu0 %2879
    %v2881 = vadd.f32 %v2789, %v2790
    %2882 = vadd.xlane.f32.xlu0 %v2881
    %v2883 = vpop.xlane.xlu0 %2882
    %v2884 = vadd.f32 %v2791, %v2792
    %2885 = vadd.xlane.f32.xlu0 %v2884
    %v2886 = vpop.xlane.xlu0 %2885
    %v2887 = vadd.f32 %v2793, %v2794
    %2888 = vadd.xlane.f32.xlu0 %v2887
    %v2889 = vpop.xlane.xlu0 %2888
    %v2890 = vadd.f32 %v2795, %v2796
    %2891 = vadd.xlane.f32.xlu0 %v2890
    %v2892 = vpop.xlane.xlu0 %2891
    %v2893 = vadd.f32 %v1008, %v1009
    %2894 = vadd.xlane.f32.xlu0 %v2893
    %v2895 = vpop.xlane.xlu0 %2894
    %v2896 = vadd.f32 %v1010, %v1011
    %2897 = vadd.xlane.f32.xlu0 %v2896
    %v2898 = vpop.xlane.xlu0 %2897
    %v2899 = vadd.f32 %v1012, %v1013
    %2900 = vadd.xlane.f32.xlu0 %v2899
    %v2901 = vpop.xlane.xlu0 %2900
    %v2902 = vadd.f32 %v1014, %v1015
    %2903 = vadd.xlane.f32.xlu0 %v2902
    %v2904 = vpop.xlane.xlu0 %2903
    %v2905 = vadd.f32 %v1016, %v1017
    %2906 = vadd.xlane.f32.xlu0 %v2905
    %v2907 = vpop.xlane.xlu0 %2906
    %v2908 = vadd.f32 %v1018, %v1019
    %2909 = vadd.xlane.f32.xlu0 %v2908
    %v2910 = vpop.xlane.xlu0 %2909
    %v2911 = vadd.f32 %v1020, %v1021
    %2912 = vadd.xlane.f32.xlu0 %v2911
    %v2913 = vpop.xlane.xlu0 %2912
    %v2914 = vadd.f32 %v1022, %v1023
    %2915 = vadd.xlane.f32.xlu0 %v2914
    %v2916 = vpop.xlane.xlu0 %2915
    %v2917 = vadd.f32 %v1024, %v1025
    %2918 = vadd.xlane.f32.xlu0 %v2917
    %v2919 = vpop.xlane.xlu0 %2918
    %v2920 = vadd.f32 %v1026, %v1027
    %2921 = vadd.xlane.f32.xlu0 %v2920
    %v2922 = vpop.xlane.xlu0 %2921
    %v2923 = vadd.f32 %v1028, %v1029
    %2924 = vadd.xlane.f32.xlu0 %v2923
    %v2925 = vpop.xlane.xlu0 %2924
    %v2926 = vadd.f32 %v1030, %v1031
    %2927 = vadd.xlane.f32.xlu0 %v2926
    %v2928 = vpop.xlane.xlu0 %2927
    %v2929 = vadd.f32 %v1032, %v1033
    %2930 = vadd.xlane.f32.xlu0 %v2929
    %v2931 = vpop.xlane.xlu0 %2930
    %v2932 = vadd.f32 %v1034, %v1035
    %2933 = vadd.xlane.f32.xlu0 %v2932
    %v2934 = vpop.xlane.xlu0 %2933
    %v2935 = vadd.f32 %v1036, %v1037
    %2936 = vadd.xlane.f32.xlu0 %v2935
    %v2937 = vpop.xlane.xlu0 %2936
    %v2938 = vadd.f32 %v1038, %v1039
    %2939 = vadd.xlane.f32.xlu0 %v2938
    %v2940 = vpop.xlane.xlu0 %2939
    %v2941 = vadd.f32 %v1040, %v1041
    %2942 = vadd.xlane.f32.xlu0 %v2941
    %v2943 = vpop.xlane.xlu0 %2942
    %v2944 = vadd.f32 %v1042, %v1043
    %2945 = vadd.xlane.f32.xlu0 %v2944
    %v2946 = vpop.xlane.xlu0 %2945
    %v2947 = vadd.f32 %v1044, %v1045
    %2948 = vadd.xlane.f32.xlu0 %v2947
    %v2949 = vpop.xlane.xlu0 %2948
    %v2950 = vadd.f32 %v1046, %v1047
    %2951 = vadd.xlane.f32.xlu0 %v2950
    %v2952 = vpop.xlane.xlu0 %2951
    %v2953 = vadd.f32 %v1048, %v1049
    %2954 = vadd.xlane.f32.xlu0 %v2953
    %v2955 = vpop.xlane.xlu0 %2954
    %v2956 = vadd.f32 %v1050, %v1051
    %2957 = vadd.xlane.f32.xlu0 %v2956
    %v2958 = vpop.xlane.xlu0 %2957
    %v2959 = vadd.f32 %v1052, %v1053
    %2960 = vadd.xlane.f32.xlu0 %v2959
    %v2961 = vpop.xlane.xlu0 %2960
    %v2962 = vadd.f32 %v1054, %v1055
    %2963 = vadd.xlane.f32.xlu0 %v2962
    %v2964 = vpop.xlane.xlu0 %2963
    %v2965 = vadd.f32 %v1056, %v1057
    %2966 = vadd.xlane.f32.xlu0 %v2965
    %v2967 = vpop.xlane.xlu0 %2966
    %v2968 = vadd.f32 %v1058, %v1059
    %2969 = vadd.xlane.f32.xlu0 %v2968
    %v2970 = vpop.xlane.xlu0 %2969
    %v2971 = vadd.f32 %v1060, %v1061
    %2972 = vadd.xlane.f32.xlu0 %v2971
    %v2973 = vpop.xlane.xlu0 %2972
    %v2974 = vadd.f32 %v1062, %v1063
    %2975 = vadd.xlane.f32.xlu0 %v2974
    %v2976 = vpop.xlane.xlu0 %2975
    %v2977 = vadd.f32 %v1064, %v1065
    %2978 = vadd.xlane.f32.xlu0 %v2977
    %v2979 = vpop.xlane.xlu0 %2978
    %v2980 = vadd.f32 %v1066, %v1067
    %2981 = vadd.xlane.f32.xlu0 %v2980
    %v2982 = vpop.xlane.xlu0 %2981
    %v2983 = vadd.f32 %v1068, %v1069
    %2984 = vadd.xlane.f32.xlu0 %v2983
    %v2985 = vpop.xlane.xlu0 %2984
    %v2986 = vadd.f32 %v1070, %v1071
    %2987 = vadd.xlane.f32.xlu0 %v2986
    %v2988 = vpop.xlane.xlu0 %2987
    %vm2989 = vcmp.ne.f32.partialorder %v60, 0.0
    %vm2990 = vcmp.ne.f32.partialorder %v61, 0.0
    %vm2991 = vcmp.ne.f32.partialorder %v62, 0.0
    %vm2992 = vcmp.ne.f32.partialorder %v63, 0.0
    %vm2993 = vcmp.ne.f32.partialorder %v64, 0.0
    %vm2994 = vcmp.ne.f32.partialorder %v65, 0.0
    %vm2995 = vcmp.ne.f32.partialorder %v66, 0.0
    %vm2996 = vcmp.ne.f32.partialorder %v67, 0.0
    %vm2997 = vcmp.ne.f32.partialorder %v68, 0.0
    %vm2998 = vcmp.ne.f32.partialorder %v69, 0.0
    %vm2999 = vcmp.ne.f32.partialorder %v70, 0.0
    %vm3000 = vcmp.ne.f32.partialorder %v71, 0.0
    %vm3001 = vcmp.ne.f32.partialorder %v72, 0.0
    %vm3002 = vcmp.ne.f32.partialorder %v73, 0.0
    %vm3003 = vcmp.ne.f32.partialorder %v74, 0.0
    %vm3004 = vcmp.ne.f32.partialorder %v75, 0.0
    %vm3005 = vcmp.ne.f32.partialorder %v76, 0.0
    %vm3006 = vcmp.ne.f32.partialorder %v77, 0.0
    %vm3007 = vcmp.ne.f32.partialorder %v78, 0.0
    %vm3008 = vcmp.ne.f32.partialorder %v79, 0.0
    %vm3009 = vcmp.ne.f32.partialorder %v80, 0.0
    %vm3010 = vcmp.ne.f32.partialorder %v81, 0.0
    %vm3011 = vcmp.ne.f32.partialorder %v82, 0.0
    %vm3012 = vcmp.ne.f32.partialorder %v83, 0.0
    %vm3013 = vcmp.ne.f32.partialorder %v84, 0.0
    %vm3014 = vcmp.ne.f32.partialorder %v85, 0.0
    %vm3015 = vcmp.ne.f32.partialorder %v86, 0.0
    %vm3016 = vcmp.ne.f32.partialorder %v87, 0.0
    %vm3017 = vcmp.ne.f32.partialorder %v88, 0.0
    %vm3018 = vcmp.ne.f32.partialorder %v89, 0.0
    %vm3019 = vcmp.ne.f32.partialorder %v90, 0.0
    %vm3020 = vcmp.ne.f32.partialorder %v91, 0.0
    %v3021 = vsel %vm2989, 1.0, 0.0
    %v3022 = vsel %vm2990, 1.0, 0.0
    %v3023 = vsel %vm2991, 1.0, 0.0
    %v3024 = vsel %vm2992, 1.0, 0.0
    %v3025 = vsel %vm2993, 1.0, 0.0
    %v3026 = vsel %vm2994, 1.0, 0.0
    %v3027 = vsel %vm2995, 1.0, 0.0
    %v3028 = vsel %vm2996, 1.0, 0.0
    %v3029 = vsel %vm2997, 1.0, 0.0
    %v3030 = vsel %vm2998, 1.0, 0.0
    %v3031 = vsel %vm2999, 1.0, 0.0
    %v3032 = vsel %vm3000, 1.0, 0.0
    %v3033 = vsel %vm3001, 1.0, 0.0
    %v3034 = vsel %vm3002, 1.0, 0.0
    %v3035 = vsel %vm3003, 1.0, 0.0
    %v3036 = vsel %vm3004, 1.0, 0.0
    %v3037 = vsel %vm3005, 1.0, 0.0
    %v3038 = vsel %vm3006, 1.0, 0.0
    %v3039 = vsel %vm3007, 1.0, 0.0
    %v3040 = vsel %vm3008, 1.0, 0.0
    %v3041 = vsel %vm3009, 1.0, 0.0
    %v3042 = vsel %vm3010, 1.0, 0.0
    %v3043 = vsel %vm3011, 1.0, 0.0
    %v3044 = vsel %vm3012, 1.0, 0.0
    %v3045 = vsel %vm3013, 1.0, 0.0
    %v3046 = vsel %vm3014, 1.0, 0.0
    %v3047 = vsel %vm3015, 1.0, 0.0
    %v3048 = vsel %vm3016, 1.0, 0.0
    %v3049 = vsel %vm3017, 1.0, 0.0
    %v3050 = vsel %vm3018, 1.0, 0.0
    %v3051 = vsel %vm3019, 1.0, 0.0
    %v3052 = vsel %vm3020, 1.0, 0.0
    %vm3053 = vcmask 7168
    %v3054 = vsel %vm3053, %v3021, 0.0
    %v3055 = vsel %vm3053, %v3022, 0.0
    %v3056 = vadd.f32 %v3054, %v3055
    %v3057 = vsel %vm3053, %v3023, 0.0
    %v3058 = vadd.f32 %v3056, %v3057
    %v3059 = vsel %vm3053, %v3024, 0.0
    %v3060 = vadd.f32 %v3058, %v3059
    %v3061 = vsel %vm3053, %v3025, 0.0
    %v3062 = vadd.f32 %v3060, %v3061
    %v3063 = vsel %vm3053, %v3026, 0.0
    %v3064 = vadd.f32 %v3062, %v3063
    %v3065 = vsel %vm3053, %v3027, 0.0
    %v3066 = vadd.f32 %v3064, %v3065
    %v3067 = vsel %vm3053, %v3028, 0.0
    %v3068 = vadd.f32 %v3066, %v3067
    %v3069 = vsel %vm3053, %v3029, 0.0
    %v3070 = vadd.f32 %v3068, %v3069
    %v3071 = vsel %vm3053, %v3030, 0.0
    %v3072 = vadd.f32 %v3070, %v3071
    %v3073 = vsel %vm3053, %v3031, 0.0
    %v3074 = vadd.f32 %v3072, %v3073
    %v3075 = vsel %vm3053, %v3032, 0.0
    %v3076 = vadd.f32 %v3074, %v3075
    %v3077 = vsel %vm3053, %v3033, 0.0
    %v3078 = vadd.f32 %v3076, %v3077
    %v3079 = vsel %vm3053, %v3034, 0.0
    %v3080 = vadd.f32 %v3078, %v3079
    %v3081 = vsel %vm3053, %v3035, 0.0
    %v3082 = vadd.f32 %v3080, %v3081
    %v3083 = vsel %vm3053, %v3036, 0.0
    %v3084 = vadd.f32 %v3082, %v3083
    %v3085 = vsel %vm3053, %v3037, 0.0
    %v3086 = vadd.f32 %v3084, %v3085
    %v3087 = vsel %vm3053, %v3038, 0.0
    %v3088 = vadd.f32 %v3086, %v3087
    %v3089 = vsel %vm3053, %v3039, 0.0
    %v3090 = vadd.f32 %v3088, %v3089
    %v3091 = vsel %vm3053, %v3040, 0.0
    %v3092 = vadd.f32 %v3090, %v3091
    %v3093 = vsel %vm3053, %v3041, 0.0
    %v3094 = vadd.f32 %v3092, %v3093
    %v3095 = vsel %vm3053, %v3042, 0.0
    %v3096 = vadd.f32 %v3094, %v3095
    %v3097 = vsel %vm3053, %v3043, 0.0
    %v3098 = vadd.f32 %v3096, %v3097
    %v3099 = vsel %vm3053, %v3044, 0.0
    %v3100 = vadd.f32 %v3098, %v3099
    %v3101 = vsel %vm3053, %v3045, 0.0
    %v3102 = vadd.f32 %v3100, %v3101
    %v3103 = vsel %vm3053, %v3046, 0.0
    %v3104 = vadd.f32 %v3102, %v3103
    %v3105 = vsel %vm3053, %v3047, 0.0
    %v3106 = vadd.f32 %v3104, %v3105
    %v3107 = vsel %vm3053, %v3048, 0.0
    %v3108 = vadd.f32 %v3106, %v3107
    %v3109 = vsel %vm3053, %v3049, 0.0
    %v3110 = vadd.f32 %v3108, %v3109
    %v3111 = vsel %vm3053, %v3050, 0.0
    %v3112 = vadd.f32 %v3110, %v3111
    %v3113 = vsel %vm3053, %v3051, 0.0
    %v3114 = vadd.f32 %v3112, %v3113
    %v3115 = vsel %vm3053, %v3052, 0.0
    %v3116 = vadd.f32 %v3114, %v3115
    %3117 = vadd.xlane.f32.xlu0 %v3116
    %v3118 = vpop.xlane.xlu0 %3117
    %v3119 = vrot.slane %v3118, 4
    %v3120 = vadd.f32 %v3118, %v3119
    %v3121 = vrot.slane %v3120, 2
    %v3122 = vadd.f32 %v3120, %v3121
    %v3123 = vrot.slane %v3122, 1
    %v3124 = vadd.f32 %v3122, %v3123
    %s3125 = vtos %v3124
    %v3126 = vstv %s3125
    %v3127 = vrcp.pop %v3126
    %s3128 = vtos %v3127
    %v3129 = vadd.f32 %v2799, 1.0
    %v3130 = vadd.f32 %v2802, 1.0
    %v3131 = vadd.f32 %v2805, 1.0
    %v3132 = vadd.f32 %v2808, 1.0
    %v3133 = vadd.f32 %v2811, 1.0
    %v3134 = vadd.f32 %v2814, 1.0
    %v3135 = vadd.f32 %v2817, 1.0
    %v3136 = vadd.f32 %v2820, 1.0
    %v3137 = vadd.f32 %v2823, 1.0
    %v3138 = vadd.f32 %v2826, 1.0
    %v3139 = vadd.f32 %v2829, 1.0
    %v3140 = vadd.f32 %v2832, 1.0
    %v3141 = vadd.f32 %v2835, 1.0
    %v3142 = vadd.f32 %v2838, 1.0
    %v3143 = vadd.f32 %v2841, 1.0
    %v3144 = vadd.f32 %v2844, 1.0
    %v3145 = vadd.f32 %v2847, 1.0
    %v3146 = vadd.f32 %v2850, 1.0
    %v3147 = vadd.f32 %v2853, 1.0
    %v3148 = vadd.f32 %v2856, 1.0
    %v3149 = vadd.f32 %v2859, 1.0
    %v3150 = vadd.f32 %v2862, 1.0
    %v3151 = vadd.f32 %v2865, 1.0
    %v3152 = vadd.f32 %v2868, 1.0
    %v3153 = vadd.f32 %v2871, 1.0
    %v3154 = vadd.f32 %v2874, 1.0
    %v3155 = vadd.f32 %v2877, 1.0
    %v3156 = vadd.f32 %v2880, 1.0
    %v3157 = vadd.f32 %v2883, 1.0
    %v3158 = vadd.f32 %v2886, 1.0
    %v3159 = vadd.f32 %v2889, 1.0
    %v3160 = vadd.f32 %v2892, 1.0
    %v3161 = vlog2.pop %v3129
    %v3162 = vmul.f32 %v3161, 0.6931472
    %v3163 = vlog2.pop %v3130
    %v3164 = vmul.f32 %v3163, 0.6931472
    %v3165 = vlog2.pop %v3131
    %v3166 = vmul.f32 %v3165, 0.6931472
    %v3167 = vlog2.pop %v3132
    %v3168 = vmul.f32 %v3167, 0.6931472
    %v3169 = vlog2.pop %v3133
    %v3170 = vmul.f32 %v3169, 0.6931472
    %v3171 = vlog2.pop %v3134
    %v3172 = vmul.f32 %v3171, 0.6931472
    %v3173 = vlog2.pop %v3135
    %v3174 = vmul.f32 %v3173, 0.6931472
    %v3175 = vlog2.pop %v3136
    %v3176 = vmul.f32 %v3175, 0.6931472
    %v3177 = vlog2.pop %v3137
    %v3178 = vmul.f32 %v3177, 0.6931472
    %v3179 = vlog2.pop %v3138
    %v3180 = vmul.f32 %v3179, 0.6931472
    %v3181 = vlog2.pop %v3139
    %v3182 = vmul.f32 %v3181, 0.6931472
    %v3183 = vlog2.pop %v3140
    %v3184 = vmul.f32 %v3183, 0.6931472
    %v3185 = vlog2.pop %v3141
    %v3186 = vmul.f32 %v3185, 0.6931472
    %v3187 = vlog2.pop %v3142
    %v3188 = vmul.f32 %v3187, 0.6931472
    %v3189 = vlog2.pop %v3143
    %v3190 = vmul.f32 %v3189, 0.6931472
    %v3191 = vlog2.pop %v3144
    %v3192 = vmul.f32 %v3191, 0.6931472
    %v3193 = vlog2.pop %v3145
    %v3194 = vmul.f32 %v3193, 0.6931472
    %v3195 = vlog2.pop %v3146
    %v3196 = vmul.f32 %v3195, 0.6931472
    %v3197 = vlog2.pop %v3147
    %v3198 = vmul.f32 %v3197, 0.6931472
    %v3199 = vlog2.pop %v3148
    %v3200 = vmul.f32 %v3199, 0.6931472
    %v3201 = vlog2.pop %v3149
    %v3202 = vmul.f32 %v3201, 0.6931472
    %v3203 = vlog2.pop %v3150
    %v3204 = vmul.f32 %v3203, 0.6931472
    %v3205 = vlog2.pop %v3151
    %v3206 = vmul.f32 %v3205, 0.6931472
    %v3207 = vlog2.pop %v3152
    %v3208 = vmul.f32 %v3207, 0.6931472
    %v3209 = vlog2.pop %v3153
    %v3210 = vmul.f32 %v3209, 0.6931472
    %v3211 = vlog2.pop %v3154
    %v3212 = vmul.f32 %v3211, 0.6931472
    %v3213 = vlog2.pop %v3155
    %v3214 = vmul.f32 %v3213, 0.6931472
    %v3215 = vlog2.pop %v3156
    %v3216 = vmul.f32 %v3215, 0.6931472
    %v3217 = vlog2.pop %v3157
    %v3218 = vmul.f32 %v3217, 0.6931472
    %v3219 = vlog2.pop %v3158
    %v3220 = vmul.f32 %v3219, 0.6931472
    %v3221 = vlog2.pop %v3159
    %v3222 = vmul.f32 %v3221, 0.6931472
    %v3223 = vlog2.pop %v3160
    %v3224 = vmul.f32 %v3223, 0.6931472
    %v3225 = vmul.f32 %v1602, %v481
    %v3226 = vmul.f32 %v1603, %v482
    %v3227 = vmul.f32 %v1604, %v483
    %v3228 = vmul.f32 %v1605, %v484
    %v3229 = vmul.f32 %v1606, %v485
    %v3230 = vmul.f32 %v1607, %v486
    %v3231 = vmul.f32 %v1608, %v487
    %v3232 = vmul.f32 %v1609, %v488
    %v3233 = vmul.f32 %v1610, %v489
    %v3234 = vmul.f32 %v1611, %v490
    %v3235 = vmul.f32 %v1612, %v491
    %v3236 = vmul.f32 %v1613, %v492
    %v3237 = vmul.f32 %v1614, %v493
    %v3238 = vmul.f32 %v1615, %v494
    %v3239 = vmul.f32 %v1616, %v495
    %v3240 = vmul.f32 %v1617, %v496
    %v3241 = vmul.f32 %v1618, %v497
    %v3242 = vmul.f32 %v1619, %v498
    %v3243 = vmul.f32 %v1620, %v499
    %v3244 = vmul.f32 %v1621, %v500
    %v3245 = vmul.f32 %v1622, %v501
    %v3246 = vmul.f32 %v1623, %v502
    %v3247 = vmul.f32 %v1624, %v503
    %v3248 = vmul.f32 %v1625, %v504
    %v3249 = vmul.f32 %v1626, %v505
    %v3250 = vmul.f32 %v1627, %v506
    %v3251 = vmul.f32 %v1628, %v507
    %v3252 = vmul.f32 %v1629, %v508
    %v3253 = vmul.f32 %v1630, %v509
    %v3254 = vmul.f32 %v1631, %v510
    %v3255 = vmul.f32 %v1632, %v511
    %v3256 = vmul.f32 %v1633, %v512
    %v3257 = vmul.f32 %v1634, %v513
    %v3258 = vmul.f32 %v1635, %v514
    %v3259 = vmul.f32 %v1636, %v515
    %v3260 = vmul.f32 %v1637, %v516
    %v3261 = vmul.f32 %v1638, %v517
    %v3262 = vmul.f32 %v1639, %v518
    %v3263 = vmul.f32 %v1640, %v519
    %v3264 = vmul.f32 %v1641, %v520
    %v3265 = vmul.f32 %v1642, %v521
    %v3266 = vmul.f32 %v1643, %v522
    %v3267 = vmul.f32 %v1644, %v523
    %v3268 = vmul.f32 %v1645, %v524
    %v3269 = vmul.f32 %v1646, %v525
    %v3270 = vmul.f32 %v1647, %v526
    %v3271 = vmul.f32 %v1648, %v527
    %v3272 = vmul.f32 %v1649, %v528
    %v3273 = vmul.f32 %v1650, %v529
    %v3274 = vmul.f32 %v1651, %v530
    %v3275 = vmul.f32 %v1652, %v531
    %v3276 = vmul.f32 %v1653, %v532
    %v3277 = vmul.f32 %v1654, %v533
    %v3278 = vmul.f32 %v1655, %v534
    %v3279 = vmul.f32 %v1656, %v535
    %v3280 = vmul.f32 %v1657, %v536
    %v3281 = vmul.f32 %v1658, %v537
    %v3282 = vmul.f32 %v1659, %v538
    %v3283 = vmul.f32 %v1660, %v539
    %v3284 = vmul.f32 %v1661, %v540
    %v3285 = vmul.f32 %v1662, %v541
    %v3286 = vmul.f32 %v1663, %v542
    %v3287 = vmul.f32 %v1664, %v543
    %v3288 = vmul.f32 %v1665, %v544
    %v3289 = vadd.f32 %v3225, %v3226
    %3290 = vadd.xlane.f32.xlu0 %v3289
    %v3291 = vpop.xlane.xlu0 %3290
    %v3292 = vadd.f32 %v3227, %v3228
    %3293 = vadd.xlane.f32.xlu0 %v3292
    %v3294 = vpop.xlane.xlu0 %3293
    %v3295 = vadd.f32 %v3229, %v3230
    %3296 = vadd.xlane.f32.xlu0 %v3295
    %v3297 = vpop.xlane.xlu0 %3296
    %v3298 = vadd.f32 %v3231, %v3232
    %3299 = vadd.xlane.f32.xlu0 %v3298
    %v3300 = vpop.xlane.xlu0 %3299
    %v3301 = vadd.f32 %v3233, %v3234
    %3302 = vadd.xlane.f32.xlu0 %v3301
    %v3303 = vpop.xlane.xlu0 %3302
    %v3304 = vadd.f32 %v3235, %v3236
    %3305 = vadd.xlane.f32.xlu0 %v3304
    %v3306 = vpop.xlane.xlu0 %3305
    %v3307 = vadd.f32 %v3237, %v3238
    %3308 = vadd.xlane.f32.xlu0 %v3307
    %v3309 = vpop.xlane.xlu0 %3308
    %v3310 = vadd.f32 %v3239, %v3240
    %3311 = vadd.xlane.f32.xlu0 %v3310
    %v3312 = vpop.xlane.xlu0 %3311
    %v3313 = vadd.f32 %v3241, %v3242
    %3314 = vadd.xlane.f32.xlu0 %v3313
    %v3315 = vpop.xlane.xlu0 %3314
    %v3316 = vadd.f32 %v3243, %v3244
    %3317 = vadd.xlane.f32.xlu0 %v3316
    %v3318 = vpop.xlane.xlu0 %3317
    %v3319 = vadd.f32 %v3245, %v3246
    %3320 = vadd.xlane.f32.xlu0 %v3319
    %v3321 = vpop.xlane.xlu0 %3320
    %v3322 = vadd.f32 %v3247, %v3248
    %3323 = vadd.xlane.f32.xlu0 %v3322
    %v3324 = vpop.xlane.xlu0 %3323
    %v3325 = vadd.f32 %v3249, %v3250
    %3326 = vadd.xlane.f32.xlu0 %v3325
    %v3327 = vpop.xlane.xlu0 %3326
    %v3328 = vadd.f32 %v3251, %v3252
    %3329 = vadd.xlane.f32.xlu0 %v3328
    %v3330 = vpop.xlane.xlu0 %3329
    %v3331 = vadd.f32 %v3253, %v3254
    %3332 = vadd.xlane.f32.xlu0 %v3331
    %v3333 = vpop.xlane.xlu0 %3332
    %v3334 = vadd.f32 %v3255, %v3256
    %3335 = vadd.xlane.f32.xlu0 %v3334
    %v3336 = vpop.xlane.xlu0 %3335
    %v3337 = vadd.f32 %v3257, %v3258
    %3338 = vadd.xlane.f32.xlu0 %v3337
    %v3339 = vpop.xlane.xlu0 %3338
    %v3340 = vadd.f32 %v3259, %v3260
    %3341 = vadd.xlane.f32.xlu0 %v3340
    %v3342 = vpop.xlane.xlu0 %3341
    %v3343 = vadd.f32 %v3261, %v3262
    %3344 = vadd.xlane.f32.xlu0 %v3343
    %v3345 = vpop.xlane.xlu0 %3344
    %v3346 = vadd.f32 %v3263, %v3264
    %3347 = vadd.xlane.f32.xlu0 %v3346
    %v3348 = vpop.xlane.xlu0 %3347
    %v3349 = vadd.f32 %v3265, %v3266
    %3350 = vadd.xlane.f32.xlu0 %v3349
    %v3351 = vpop.xlane.xlu0 %3350
    %v3352 = vadd.f32 %v3267, %v3268
    %3353 = vadd.xlane.f32.xlu0 %v3352
    %v3354 = vpop.xlane.xlu0 %3353
    %v3355 = vadd.f32 %v3269, %v3270
    %3356 = vadd.xlane.f32.xlu0 %v3355
    %v3357 = vpop.xlane.xlu0 %3356
    %v3358 = vadd.f32 %v3271, %v3272
    %3359 = vadd.xlane.f32.xlu0 %v3358
    %v3360 = vpop.xlane.xlu0 %3359
    %v3361 = vadd.f32 %v3273, %v3274
    %3362 = vadd.xlane.f32.xlu0 %v3361
    %v3363 = vpop.xlane.xlu0 %3362
    %v3364 = vadd.f32 %v3275, %v3276
    %3365 = vadd.xlane.f32.xlu0 %v3364
    %v3366 = vpop.xlane.xlu0 %3365
    %v3367 = vadd.f32 %v3277, %v3278
    %3368 = vadd.xlane.f32.xlu0 %v3367
    %v3369 = vpop.xlane.xlu0 %3368
    %v3370 = vadd.f32 %v3279, %v3280
    %3371 = vadd.xlane.f32.xlu0 %v3370
    %v3372 = vpop.xlane.xlu0 %3371
    %v3373 = vadd.f32 %v3281, %v3282
    %3374 = vadd.xlane.f32.xlu0 %v3373
    %v3375 = vpop.xlane.xlu0 %3374
    %v3376 = vadd.f32 %v3283, %v3284
    %3377 = vadd.xlane.f32.xlu0 %v3376
    %v3378 = vpop.xlane.xlu0 %3377
    %v3379 = vadd.f32 %v3285, %v3286
    %3380 = vadd.xlane.f32.xlu0 %v3379
    %v3381 = vpop.xlane.xlu0 %3380
    %v3382 = vadd.f32 %v3287, %v3288
    %3383 = vadd.xlane.f32.xlu0 %v3382
    %v3384 = vpop.xlane.xlu0 %3383
    %v3385 = vadd.f32 %v1602, %v1603
    %3386 = vadd.xlane.f32.xlu0 %v3385
    %v3387 = vpop.xlane.xlu0 %3386
    %v3388 = vadd.f32 %v1604, %v1605
    %3389 = vadd.xlane.f32.xlu0 %v3388
    %v3390 = vpop.xlane.xlu0 %3389
    %v3391 = vadd.f32 %v1606, %v1607
    %3392 = vadd.xlane.f32.xlu0 %v3391
    %v3393 = vpop.xlane.xlu0 %3392
    %v3394 = vadd.f32 %v1608, %v1609
    %3395 = vadd.xlane.f32.xlu0 %v3394
    %v3396 = vpop.xlane.xlu0 %3395
    %v3397 = vadd.f32 %v1610, %v1611
    %3398 = vadd.xlane.f32.xlu0 %v3397
    %v3399 = vpop.xlane.xlu0 %3398
    %v3400 = vadd.f32 %v1612, %v1613
    %3401 = vadd.xlane.f32.xlu0 %v3400
    %v3402 = vpop.xlane.xlu0 %3401
    %v3403 = vadd.f32 %v1614, %v1615
    %3404 = vadd.xlane.f32.xlu0 %v3403
    %v3405 = vpop.xlane.xlu0 %3404
    %v3406 = vadd.f32 %v1616, %v1617
    %3407 = vadd.xlane.f32.xlu0 %v3406
    %v3408 = vpop.xlane.xlu0 %3407
    %v3409 = vadd.f32 %v1618, %v1619
    %3410 = vadd.xlane.f32.xlu0 %v3409
    %v3411 = vpop.xlane.xlu0 %3410
    %v3412 = vadd.f32 %v1620, %v1621
    %3413 = vadd.xlane.f32.xlu0 %v3412
    %v3414 = vpop.xlane.xlu0 %3413
    %v3415 = vadd.f32 %v1622, %v1623
    %3416 = vadd.xlane.f32.xlu0 %v3415
    %v3417 = vpop.xlane.xlu0 %3416
    %v3418 = vadd.f32 %v1624, %v1625
    %3419 = vadd.xlane.f32.xlu0 %v3418
    %v3420 = vpop.xlane.xlu0 %3419
    %v3421 = vadd.f32 %v1626, %v1627
    %3422 = vadd.xlane.f32.xlu0 %v3421
    %v3423 = vpop.xlane.xlu0 %3422
    %v3424 = vadd.f32 %v1628, %v1629
    %3425 = vadd.xlane.f32.xlu0 %v3424
    %v3426 = vpop.xlane.xlu0 %3425
    %v3427 = vadd.f32 %v1630, %v1631
    %3428 = vadd.xlane.f32.xlu0 %v3427
    %v3429 = vpop.xlane.xlu0 %3428
    %v3430 = vadd.f32 %v1632, %v1633
    %3431 = vadd.xlane.f32.xlu0 %v3430
    %v3432 = vpop.xlane.xlu0 %3431
    %v3433 = vadd.f32 %v1634, %v1635
    %3434 = vadd.xlane.f32.xlu0 %v3433
    %v3435 = vpop.xlane.xlu0 %3434
    %v3436 = vadd.f32 %v1636, %v1637
    %3437 = vadd.xlane.f32.xlu0 %v3436
    %v3438 = vpop.xlane.xlu0 %3437
    %v3439 = vadd.f32 %v1638, %v1639
    %3440 = vadd.xlane.f32.xlu0 %v3439
    %v3441 = vpop.xlane.xlu0 %3440
    %v3442 = vadd.f32 %v1640, %v1641
    %3443 = vadd.xlane.f32.xlu0 %v3442
    %v3444 = vpop.xlane.xlu0 %3443
    %v3445 = vadd.f32 %v1642, %v1643
    %3446 = vadd.xlane.f32.xlu0 %v3445
    %v3447 = vpop.xlane.xlu0 %3446
    %v3448 = vadd.f32 %v1644, %v1645
    %3449 = vadd.xlane.f32.xlu0 %v3448
    %v3450 = vpop.xlane.xlu0 %3449
    %v3451 = vadd.f32 %v1646, %v1647
    %3452 = vadd.xlane.f32.xlu0 %v3451
    %v3453 = vpop.xlane.xlu0 %3452
    %v3454 = vadd.f32 %v1648, %v1649
    %3455 = vadd.xlane.f32.xlu0 %v3454
    %v3456 = vpop.xlane.xlu0 %3455
    %v3457 = vadd.f32 %v1650, %v1651
    %3458 = vadd.xlane.f32.xlu0 %v3457
    %v3459 = vpop.xlane.xlu0 %3458
    %v3460 = vadd.f32 %v1652, %v1653
    %3461 = vadd.xlane.f32.xlu0 %v3460
    %v3462 = vpop.xlane.xlu0 %3461
    %v3463 = vadd.f32 %v1654, %v1655
    %3464 = vadd.xlane.f32.xlu0 %v3463
    %v3465 = vpop.xlane.xlu0 %3464
    %v3466 = vadd.f32 %v1656, %v1657
    %3467 = vadd.xlane.f32.xlu0 %v3466
    %v3468 = vpop.xlane.xlu0 %3467
    %v3469 = vadd.f32 %v1658, %v1659
    %3470 = vadd.xlane.f32.xlu0 %v3469
    %v3471 = vpop.xlane.xlu0 %3470
    %v3472 = vadd.f32 %v1660, %v1661
    %3473 = vadd.xlane.f32.xlu0 %v3472
    %v3474 = vpop.xlane.xlu0 %3473
    %v3475 = vadd.f32 %v1662, %v1663
    %3476 = vadd.xlane.f32.xlu0 %v3475
    %v3477 = vpop.xlane.xlu0 %3476
    %v3478 = vadd.f32 %v1664, %v1665
    %3479 = vadd.xlane.f32.xlu0 %v3478
    %v3480 = vpop.xlane.xlu0 %3479
    %v3481 = vmul.f32 %v3387, %v3162
    %v3482 = vmul.f32 %v3390, %v3164
    %v3483 = vmul.f32 %v3393, %v3166
    %v3484 = vmul.f32 %v3396, %v3168
    %v3485 = vmul.f32 %v3399, %v3170
    %v3486 = vmul.f32 %v3402, %v3172
    %v3487 = vmul.f32 %v3405, %v3174
    %v3488 = vmul.f32 %v3408, %v3176
    %v3489 = vmul.f32 %v3411, %v3178
    %v3490 = vmul.f32 %v3414, %v3180
    %v3491 = vmul.f32 %v3417, %v3182
    %v3492 = vmul.f32 %v3420, %v3184
    %v3493 = vmul.f32 %v3423, %v3186
    %v3494 = vmul.f32 %v3426, %v3188
    %v3495 = vmul.f32 %v3429, %v3190
    %v3496 = vmul.f32 %v3432, %v3192
    %v3497 = vmul.f32 %v3435, %v3194
    %v3498 = vmul.f32 %v3438, %v3196
    %v3499 = vmul.f32 %v3441, %v3198
    %v3500 = vmul.f32 %v3444, %v3200
    %v3501 = vmul.f32 %v3447, %v3202
    %v3502 = vmul.f32 %v3450, %v3204
    %v3503 = vmul.f32 %v3453, %v3206
    %v3504 = vmul.f32 %v3456, %v3208
    %v3505 = vmul.f32 %v3459, %v3210
    %v3506 = vmul.f32 %v3462, %v3212
    %v3507 = vmul.f32 %v3465, %v3214
    %v3508 = vmul.f32 %v3468, %v3216
    %v3509 = vmul.f32 %v3471, %v3218
    %v3510 = vmul.f32 %v3474, %v3220
    %v3511 = vmul.f32 %v3477, %v3222
    %v3512 = vmul.f32 %v3480, %v3224
    %v3513 = vsub.f32 %v3291, %v3481
    %v3514 = vsub.f32 %v3294, %v3482
    %v3515 = vsub.f32 %v3297, %v3483
    %v3516 = vsub.f32 %v3300, %v3484
    %v3517 = vsub.f32 %v3303, %v3485
    %v3518 = vsub.f32 %v3306, %v3486
    %v3519 = vsub.f32 %v3309, %v3487
    %v3520 = vsub.f32 %v3312, %v3488
    %v3521 = vsub.f32 %v3315, %v3489
    %v3522 = vsub.f32 %v3318, %v3490
    %v3523 = vsub.f32 %v3321, %v3491
    %v3524 = vsub.f32 %v3324, %v3492
    %v3525 = vsub.f32 %v3327, %v3493
    %v3526 = vsub.f32 %v3330, %v3494
    %v3527 = vsub.f32 %v3333, %v3495
    %v3528 = vsub.f32 %v3336, %v3496
    %v3529 = vsub.f32 %v3339, %v3497
    %v3530 = vsub.f32 %v3342, %v3498
    %v3531 = vsub.f32 %v3345, %v3499
    %v3532 = vsub.f32 %v3348, %v3500
    %v3533 = vsub.f32 %v3351, %v3501
    %v3534 = vsub.f32 %v3354, %v3502
    %v3535 = vsub.f32 %v3357, %v3503
    %v3536 = vsub.f32 %v3360, %v3504
    %v3537 = vsub.f32 %v3363, %v3505
    %v3538 = vsub.f32 %v3366, %v3506
    %v3539 = vsub.f32 %v3369, %v3507
    %v3540 = vsub.f32 %v3372, %v3508
    %v3541 = vsub.f32 %v3375, %v3509
    %v3542 = vsub.f32 %v3378, %v3510
    %v3543 = vsub.f32 %v3381, %v3511
    %v3544 = vsub.f32 %v3384, %v3512
    %v3545 = vrcp.pop %v2895
    %v3546 = vmul.f32 %v3513, %v3545
    %v3547 = vrcp.pop %v2898
    %v3548 = vmul.f32 %v3514, %v3547
    %v3549 = vrcp.pop %v2901
    %v3550 = vmul.f32 %v3515, %v3549
    %v3551 = vrcp.pop %v2904
    %v3552 = vmul.f32 %v3516, %v3551
    %v3553 = vrcp.pop %v2907
    %v3554 = vmul.f32 %v3517, %v3553
    %v3555 = vrcp.pop %v2910
    %v3556 = vmul.f32 %v3518, %v3555
    %v3557 = vrcp.pop %v2913
    %v3558 = vmul.f32 %v3519, %v3557
    %v3559 = vrcp.pop %v2916
    %v3560 = vmul.f32 %v3520, %v3559
    %v3561 = vrcp.pop %v2919
    %v3562 = vmul.f32 %v3521, %v3561
    %v3563 = vrcp.pop %v2922
    %v3564 = vmul.f32 %v3522, %v3563
    %v3565 = vrcp.pop %v2925
    %v3566 = vmul.f32 %v3523, %v3565
    %v3567 = vrcp.pop %v2928
    %v3568 = vmul.f32 %v3524, %v3567
    %v3569 = vrcp.pop %v2931
    %v3570 = vmul.f32 %v3525, %v3569
    %v3571 = vrcp.pop %v2934
    %v3572 = vmul.f32 %v3526, %v3571
    %v3573 = vrcp.pop %v2937
    %v3574 = vmul.f32 %v3527, %v3573
    %v3575 = vrcp.pop %v2940
    %v3576 = vmul.f32 %v3528, %v3575
    %v3577 = vrcp.pop %v2943
    %v3578 = vmul.f32 %v3529, %v3577
    %v3579 = vrcp.pop %v2946
    %v3580 = vmul.f32 %v3530, %v3579
    %v3581 = vrcp.pop %v2949
    %v3582 = vmul.f32 %v3531, %v3581
    %v3583 = vrcp.pop %v2952
    %v3584 = vmul.f32 %v3532, %v3583
    %v3585 = vrcp.pop %v2955
    %v3586 = vmul.f32 %v3533, %v3585
    %v3587 = vrcp.pop %v2958
    %v3588 = vmul.f32 %v3534, %v3587
    %v3589 = vrcp.pop %v2961
    %v3590 = vmul.f32 %v3535, %v3589
    %v3591 = vrcp.pop %v2964
    %v3592 = vmul.f32 %v3536, %v3591
    %v3593 = vrcp.pop %v2967
    %v3594 = vmul.f32 %v3537, %v3593
    %v3595 = vrcp.pop %v2970
    %v3596 = vmul.f32 %v3538, %v3595
    %v3597 = vrcp.pop %v2973
    %v3598 = vmul.f32 %v3539, %v3597
    %v3599 = vrcp.pop %v2976
    %v3600 = vmul.f32 %v3540, %v3599
    %v3601 = vrcp.pop %v2979
    %v3602 = vmul.f32 %v3541, %v3601
    %v3603 = vrcp.pop %v2982
    %v3604 = vmul.f32 %v3542, %v3603
    %v3605 = vrcp.pop %v2985
    %v3606 = vmul.f32 %v3543, %v3605
    %v3607 = vrcp.pop %v2988
    %v3608 = vmul.f32 %v3544, %v3607
    %v3609 = vsub.f32 0.0, %v3546
    %v3610 = vsub.f32 0.0, %v3548
    %v3611 = vsub.f32 0.0, %v3550
    %v3612 = vsub.f32 0.0, %v3552
    %v3613 = vsub.f32 0.0, %v3554
    %v3614 = vsub.f32 0.0, %v3556
    %v3615 = vsub.f32 0.0, %v3558
    %v3616 = vsub.f32 0.0, %v3560
    %v3617 = vsub.f32 0.0, %v3562
    %v3618 = vsub.f32 0.0, %v3564
    %v3619 = vsub.f32 0.0, %v3566
    %v3620 = vsub.f32 0.0, %v3568
    %v3621 = vsub.f32 0.0, %v3570
    %v3622 = vsub.f32 0.0, %v3572
    %v3623 = vsub.f32 0.0, %v3574
    %v3624 = vsub.f32 0.0, %v3576
    %v3625 = vsub.f32 0.0, %v3578
    %v3626 = vsub.f32 0.0, %v3580
    %v3627 = vsub.f32 0.0, %v3582
    %v3628 = vsub.f32 0.0, %v3584
    %v3629 = vsub.f32 0.0, %v3586
    %v3630 = vsub.f32 0.0, %v3588
    %v3631 = vsub.f32 0.0, %v3590
    %v3632 = vsub.f32 0.0, %v3592
    %v3633 = vsub.f32 0.0, %v3594
    %v3634 = vsub.f32 0.0, %v3596
    %v3635 = vsub.f32 0.0, %v3598
    %v3636 = vsub.f32 0.0, %v3600
    %v3637 = vsub.f32 0.0, %v3602
    %v3638 = vsub.f32 0.0, %v3604
    %v3639 = vsub.f32 0.0, %v3606
    %v3640 = vsub.f32 0.0, %v3608
    %v3641 = vmul.f32 %v3609, %v3021
    %v3642 = vmul.f32 %v3610, %v3022
    %v3643 = vmul.f32 %v3611, %v3023
    %v3644 = vmul.f32 %v3612, %v3024
    %v3645 = vmul.f32 %v3613, %v3025
    %v3646 = vmul.f32 %v3614, %v3026
    %v3647 = vmul.f32 %v3615, %v3027
    %v3648 = vmul.f32 %v3616, %v3028
    %v3649 = vmul.f32 %v3617, %v3029
    %v3650 = vmul.f32 %v3618, %v3030
    %v3651 = vmul.f32 %v3619, %v3031
    %v3652 = vmul.f32 %v3620, %v3032
    %v3653 = vmul.f32 %v3621, %v3033
    %v3654 = vmul.f32 %v3622, %v3034
    %v3655 = vmul.f32 %v3623, %v3035
    %v3656 = vmul.f32 %v3624, %v3036
    %v3657 = vmul.f32 %v3625, %v3037
    %v3658 = vmul.f32 %v3626, %v3038
    %v3659 = vmul.f32 %v3627, %v3039
    %v3660 = vmul.f32 %v3628, %v3040
    %v3661 = vmul.f32 %v3629, %v3041
    %v3662 = vmul.f32 %v3630, %v3042
    %v3663 = vmul.f32 %v3631, %v3043
    %v3664 = vmul.f32 %v3632, %v3044
    %v3665 = vmul.f32 %v3633, %v3045
    %v3666 = vmul.f32 %v3634, %v3046
    %v3667 = vmul.f32 %v3635, %v3047
    %v3668 = vmul.f32 %v3636, %v3048
    %v3669 = vmul.f32 %v3637, %v3049
    %v3670 = vmul.f32 %v3638, %v3050
    %v3671 = vmul.f32 %v3639, %v3051
    %v3672 = vmul.f32 %v3640, %v3052
    %v3673 = vsel %vm3053, %v3641, 0.0
    %v3674 = vsel %vm3053, %v3642, 0.0
    %v3675 = vadd.f32 %v3673, %v3674
    %v3676 = vsel %vm3053, %v3643, 0.0
    %v3677 = vadd.f32 %v3675, %v3676
    %v3678 = vsel %vm3053, %v3644, 0.0
    %v3679 = vadd.f32 %v3677, %v3678
    %v3680 = vsel %vm3053, %v3645, 0.0
    %v3681 = vadd.f32 %v3679, %v3680
    %v3682 = vsel %vm3053, %v3646, 0.0
    %v3683 = vadd.f32 %v3681, %v3682
    %v3684 = vsel %vm3053, %v3647, 0.0
    %v3685 = vadd.f32 %v3683, %v3684
    %v3686 = vsel %vm3053, %v3648, 0.0
    %v3687 = vadd.f32 %v3685, %v3686
    %v3688 = vsel %vm3053, %v3649, 0.0
    %v3689 = vadd.f32 %v3687, %v3688
    %v3690 = vsel %vm3053, %v3650, 0.0
    %v3691 = vadd.f32 %v3689, %v3690
    %v3692 = vsel %vm3053, %v3651, 0.0
    %v3693 = vadd.f32 %v3691, %v3692
    %v3694 = vsel %vm3053, %v3652, 0.0
    %v3695 = vadd.f32 %v3693, %v3694
    %v3696 = vsel %vm3053, %v3653, 0.0
    %v3697 = vadd.f32 %v3695, %v3696
    %v3698 = vsel %vm3053, %v3654, 0.0
    %v3699 = vadd.f32 %v3697, %v3698
    %v3700 = vsel %vm3053, %v3655, 0.0
    %v3701 = vadd.f32 %v3699, %v3700
    %v3702 = vsel %vm3053, %v3656, 0.0
    %v3703 = vadd.f32 %v3701, %v3702
    %v3704 = vsel %vm3053, %v3657, 0.0
    %v3705 = vadd.f32 %v3703, %v3704
    %v3706 = vsel %vm3053, %v3658, 0.0
    %v3707 = vadd.f32 %v3705, %v3706
    %v3708 = vsel %vm3053, %v3659, 0.0
    %v3709 = vadd.f32 %v3707, %v3708
    %v3710 = vsel %vm3053, %v3660, 0.0
    %v3711 = vadd.f32 %v3709, %v3710
    %v3712 = vsel %vm3053, %v3661, 0.0
    %v3713 = vadd.f32 %v3711, %v3712
    %v3714 = vsel %vm3053, %v3662, 0.0
    %v3715 = vadd.f32 %v3713, %v3714
    %v3716 = vsel %vm3053, %v3663, 0.0
    %v3717 = vadd.f32 %v3715, %v3716
    %v3718 = vsel %vm3053, %v3664, 0.0
    %v3719 = vadd.f32 %v3717, %v3718
    %v3720 = vsel %vm3053, %v3665, 0.0
    %v3721 = vadd.f32 %v3719, %v3720
    %v3722 = vsel %vm3053, %v3666, 0.0
    %v3723 = vadd.f32 %v3721, %v3722
    %v3724 = vsel %vm3053, %v3667, 0.0
    %v3725 = vadd.f32 %v3723, %v3724
    %v3726 = vsel %vm3053, %v3668, 0.0
    %v3727 = vadd.f32 %v3725, %v3726
    %v3728 = vsel %vm3053, %v3669, 0.0
    %v3729 = vadd.f32 %v3727, %v3728
    %v3730 = vsel %vm3053, %v3670, 0.0
    %v3731 = vadd.f32 %v3729, %v3730
    %v3732 = vsel %vm3053, %v3671, 0.0
    %v3733 = vadd.f32 %v3731, %v3732
    %v3734 = vsel %vm3053, %v3672, 0.0
    %v3735 = vadd.f32 %v3733, %v3734
    %3736 = vadd.xlane.f32.xlu0 %v3735
    %v3737 = vpop.xlane.xlu0 %3736
    %v3738 = vrot.slane %v3737, 4
    %v3739 = vadd.f32 %v3737, %v3738
    %v3740 = vrot.slane %v3739, 2
    %v3741 = vadd.f32 %v3739, %v3740
    %v3742 = vrot.slane %v3741, 1
    %v3743 = vadd.f32 %v3741, %v3742
    %s3744 = vtos %v3743
    %s3745 = smul.f32 %s3744, %s3128
    %v3746 = vmul.f32 %v3021, %v3545
    %v3747 = vmul.f32 %v3022, %v3547
    %v3748 = vmul.f32 %v3023, %v3549
    %v3749 = vmul.f32 %v3024, %v3551
    %v3750 = vmul.f32 %v3025, %v3553
    %v3751 = vmul.f32 %v3026, %v3555
    %v3752 = vmul.f32 %v3027, %v3557
    %v3753 = vmul.f32 %v3028, %v3559
    %v3754 = vmul.f32 %v3029, %v3561
    %v3755 = vmul.f32 %v3030, %v3563
    %v3756 = vmul.f32 %v3031, %v3565
    %v3757 = vmul.f32 %v3032, %v3567
    %v3758 = vmul.f32 %v3033, %v3569
    %v3759 = vmul.f32 %v3034, %v3571
    %v3760 = vmul.f32 %v3035, %v3573
    %v3761 = vmul.f32 %v3036, %v3575
    %3762 = vadd.xlane.f32.xlu0 %v1602
    %v3763 = vpop.xlane.xlu0 %3762
    %3764 = vadd.xlane.f32.xlu0 %v1604
    %v3765 = vpop.xlane.xlu0 %3764
    %3766 = vadd.xlane.f32.xlu0 %v1606
    %v3767 = vpop.xlane.xlu0 %3766
    %3768 = vadd.xlane.f32.xlu0 %v1608
    %v3769 = vpop.xlane.xlu0 %3768
    %3770 = vadd.xlane.f32.xlu0 %v1610
    %v3771 = vpop.xlane.xlu0 %3770
    %3772 = vadd.xlane.f32.xlu0 %v1612
    %v3773 = vpop.xlane.xlu0 %3772
    %3774 = vadd.xlane.f32.xlu0 %v1614
    %v3775 = vpop.xlane.xlu0 %3774
    %3776 = vadd.xlane.f32.xlu0 %v1616
    %v3777 = vpop.xlane.xlu0 %3776
    %3778 = vadd.xlane.f32.xlu0 %v1618
    %v3779 = vpop.xlane.xlu0 %3778
    %3780 = vadd.xlane.f32.xlu0 %v1620
    %v3781 = vpop.xlane.xlu0 %3780
    %3782 = vadd.xlane.f32.xlu0 %v1622
    %v3783 = vpop.xlane.xlu0 %3782
    %3784 = vadd.xlane.f32.xlu0 %v1624
    %v3785 = vpop.xlane.xlu0 %3784
    %3786 = vadd.xlane.f32.xlu0 %v1626
    %v3787 = vpop.xlane.xlu0 %3786
    %3788 = vadd.xlane.f32.xlu0 %v1628
    %v3789 = vpop.xlane.xlu0 %3788
    %3790 = vadd.xlane.f32.xlu0 %v1630
    %v3791 = vpop.xlane.xlu0 %3790
    %3792 = vadd.xlane.f32.xlu0 %v1632
    %v3793 = vpop.xlane.xlu0 %3792
    %v3794 = vmul.f32 %v3763, %v3162
    %v3795 = vmul.f32 %v3765, %v3164
    %v3796 = vmul.f32 %v3767, %v3166
    %v3797 = vmul.f32 %v3769, %v3168
    %v3798 = vmul.f32 %v3771, %v3170
    %v3799 = vmul.f32 %v3773, %v3172
    %v3800 = vmul.f32 %v3775, %v3174
    %v3801 = vmul.f32 %v3777, %v3176
    %v3802 = vmul.f32 %v3779, %v3178
    %v3803 = vmul.f32 %v3781, %v3180
    %v3804 = vmul.f32 %v3783, %v3182
    %v3805 = vmul.f32 %v3785, %v3184
    %v3806 = vmul.f32 %v3787, %v3186
    %v3807 = vmul.f32 %v3789, %v3188
    %v3808 = vmul.f32 %v3791, %v3190
    %v3809 = vmul.f32 %v3793, %v3192
    %v3810 = vadd.f32 %v2669, %v2799
    %v3811 = vadd.f32 %v2671, %v2802
    %v3812 = vadd.f32 %v2673, %v2805
    %v3813 = vadd.f32 %v2675, %v2808
    %v3814 = vadd.f32 %v2677, %v2811
    %v3815 = vadd.f32 %v2679, %v2814
    %v3816 = vadd.f32 %v2681, %v2817
    %v3817 = vadd.f32 %v2683, %v2820
    %v3818 = vadd.f32 %v2685, %v2823
    %v3819 = vadd.f32 %v2687, %v2826
    %v3820 = vadd.f32 %v2689, %v2829
    %v3821 = vadd.f32 %v2691, %v2832
    %v3822 = vadd.f32 %v2693, %v2835
    %v3823 = vadd.f32 %v2695, %v2838
    %v3824 = vadd.f32 %v2697, %v2841
    %v3825 = vadd.f32 %v2699, %v2844
    %v3826 = vlog2.pop %v3810
    %v3827 = vmul.f32 %v3826, 0.6931472
    %v3828 = vlog2.pop %v3811
    %v3829 = vmul.f32 %v3828, 0.6931472
    %v3830 = vlog2.pop %v3812
    %v3831 = vmul.f32 %v3830, 0.6931472
    %v3832 = vlog2.pop %v3813
    %v3833 = vmul.f32 %v3832, 0.6931472
    %v3834 = vlog2.pop %v3814
    %v3835 = vmul.f32 %v3834, 0.6931472
    %v3836 = vlog2.pop %v3815
    %v3837 = vmul.f32 %v3836, 0.6931472
    %v3838 = vlog2.pop %v3816
    %v3839 = vmul.f32 %v3838, 0.6931472
    %v3840 = vlog2.pop %v3817
    %v3841 = vmul.f32 %v3840, 0.6931472
    %v3842 = vlog2.pop %v3818
    %v3843 = vmul.f32 %v3842, 0.6931472
    %v3844 = vlog2.pop %v3819
    %v3845 = vmul.f32 %v3844, 0.6931472
    %v3846 = vlog2.pop %v3820
    %v3847 = vmul.f32 %v3846, 0.6931472
    %v3848 = vlog2.pop %v3821
    %v3849 = vmul.f32 %v3848, 0.6931472
    %v3850 = vlog2.pop %v3822
    %v3851 = vmul.f32 %v3850, 0.6931472
    %v3852 = vlog2.pop %v3823
    %v3853 = vmul.f32 %v3852, 0.6931472
    %v3854 = vlog2.pop %v3824
    %v3855 = vmul.f32 %v3854, 0.6931472
    %v3856 = vlog2.pop %v3825
    %v3857 = vmul.f32 %v3856, 0.6931472
    %v3858 = vmul.f32 %v1602, %v3827
    %v3859 = vmul.f32 %v1604, %v3829
    %v3860 = vmul.f32 %v1606, %v3831
    %v3861 = vmul.f32 %v1608, %v3833
    %v3862 = vmul.f32 %v1610, %v3835
    %v3863 = vmul.f32 %v1612, %v3837
    %v3864 = vmul.f32 %v1614, %v3839
    %v3865 = vmul.f32 %v1616, %v3841
    %v3866 = vmul.f32 %v1618, %v3843
    %v3867 = vmul.f32 %v1620, %v3845
    %v3868 = vmul.f32 %v1622, %v3847
    %v3869 = vmul.f32 %v1624, %v3849
    %v3870 = vmul.f32 %v1626, %v3851
    %v3871 = vmul.f32 %v1628, %v3853
    %v3872 = vmul.f32 %v1630, %v3855
    %v3873 = vmul.f32 %v1632, %v3857
    %3874 = vadd.xlane.f32.xlu0 %v3858
    %v3875 = vpop.xlane.xlu0 %3874
    %3876 = vadd.xlane.f32.xlu0 %v3859
    %v3877 = vpop.xlane.xlu0 %3876
    %3878 = vadd.xlane.f32.xlu0 %v3860
    %v3879 = vpop.xlane.xlu0 %3878
    %3880 = vadd.xlane.f32.xlu0 %v3861
    %v3881 = vpop.xlane.xlu0 %3880
    %3882 = vadd.xlane.f32.xlu0 %v3862
    %v3883 = vpop.xlane.xlu0 %3882
    %3884 = vadd.xlane.f32.xlu0 %v3863
    %v3885 = vpop.xlane.xlu0 %3884
    %3886 = vadd.xlane.f32.xlu0 %v3864
    %v3887 = vpop.xlane.xlu0 %3886
    %3888 = vadd.xlane.f32.xlu0 %v3865
    %v3889 = vpop.xlane.xlu0 %3888
    %3890 = vadd.xlane.f32.xlu0 %v3866
    %v3891 = vpop.xlane.xlu0 %3890
    %3892 = vadd.xlane.f32.xlu0 %v3867
    %v3893 = vpop.xlane.xlu0 %3892
    %3894 = vadd.xlane.f32.xlu0 %v3868
    %v3895 = vpop.xlane.xlu0 %3894
    %3896 = vadd.xlane.f32.xlu0 %v3869
    %v3897 = vpop.xlane.xlu0 %3896
    %3898 = vadd.xlane.f32.xlu0 %v3870
    %v3899 = vpop.xlane.xlu0 %3898
    %3900 = vadd.xlane.f32.xlu0 %v3871
    %v3901 = vpop.xlane.xlu0 %3900
    %3902 = vadd.xlane.f32.xlu0 %v3872
    %v3903 = vpop.xlane.xlu0 %3902
    %3904 = vadd.xlane.f32.xlu0 %v3873
    %v3905 = vpop.xlane.xlu0 %3904
    %v3906 = vsub.f32 %v3794, %v3875
    %v3907 = vsub.f32 %v3795, %v3877
    %v3908 = vsub.f32 %v3796, %v3879
    %v3909 = vsub.f32 %v3797, %v3881
    %v3910 = vsub.f32 %v3798, %v3883
    %v3911 = vsub.f32 %v3799, %v3885
    %v3912 = vsub.f32 %v3800, %v3887
    %v3913 = vsub.f32 %v3801, %v3889
    %v3914 = vsub.f32 %v3802, %v3891
    %v3915 = vsub.f32 %v3803, %v3893
    %v3916 = vsub.f32 %v3804, %v3895
    %v3917 = vsub.f32 %v3805, %v3897
    %v3918 = vsub.f32 %v3806, %v3899
    %v3919 = vsub.f32 %v3807, %v3901
    %v3920 = vsub.f32 %v3808, %v3903
    %v3921 = vsub.f32 %v3809, %v3905
    %v3922 = vmul.f32 %v3906, %v3746
    %v3923 = vmul.f32 %v3907, %v3747
    %v3924 = vmul.f32 %v3908, %v3748
    %v3925 = vmul.f32 %v3909, %v3749
    %v3926 = vmul.f32 %v3910, %v3750
    %v3927 = vmul.f32 %v3911, %v3751
    %v3928 = vmul.f32 %v3912, %v3752
    %v3929 = vmul.f32 %v3913, %v3753
    %v3930 = vmul.f32 %v3914, %v3754
    %v3931 = vmul.f32 %v3915, %v3755
    %v3932 = vmul.f32 %v3916, %v3756
    %v3933 = vmul.f32 %v3917, %v3757
    %v3934 = vmul.f32 %v3918, %v3758
    %v3935 = vmul.f32 %v3919, %v3759
    %v3936 = vmul.f32 %v3920, %v3760
    %v3937 = vmul.f32 %v3921, %v3761
    %v3938 = vsel %vm3053, %v3922, 0.0
    %v3939 = vsel %vm3053, %v3923, 0.0
    %v3940 = vadd.f32 %v3938, %v3939
    %v3941 = vsel %vm3053, %v3924, 0.0
    %v3942 = vadd.f32 %v3940, %v3941
    %v3943 = vsel %vm3053, %v3925, 0.0
    %v3944 = vadd.f32 %v3942, %v3943
    %v3945 = vsel %vm3053, %v3926, 0.0
    %v3946 = vadd.f32 %v3944, %v3945
    %v3947 = vsel %vm3053, %v3927, 0.0
    %v3948 = vadd.f32 %v3946, %v3947
    %v3949 = vsel %vm3053, %v3928, 0.0
    %v3950 = vadd.f32 %v3948, %v3949
    %v3951 = vsel %vm3053, %v3929, 0.0
    %v3952 = vadd.f32 %v3950, %v3951
    %v3953 = vsel %vm3053, %v3930, 0.0
    %v3954 = vadd.f32 %v3952, %v3953
    %v3955 = vsel %vm3053, %v3931, 0.0
    %v3956 = vadd.f32 %v3954, %v3955
    %v3957 = vsel %vm3053, %v3932, 0.0
    %v3958 = vadd.f32 %v3956, %v3957
    %v3959 = vsel %vm3053, %v3933, 0.0
    %v3960 = vadd.f32 %v3958, %v3959
    %v3961 = vsel %vm3053, %v3934, 0.0
    %v3962 = vadd.f32 %v3960, %v3961
    %v3963 = vsel %vm3053, %v3935, 0.0
    %v3964 = vadd.f32 %v3962, %v3963
    %v3965 = vsel %vm3053, %v3936, 0.0
    %v3966 = vadd.f32 %v3964, %v3965
    %v3967 = vsel %vm3053, %v3937, 0.0
    %v3968 = vadd.f32 %v3966, %v3967
    %3969 = vadd.xlane.f32.xlu0 %v3968
    %v3970 = vpop.xlane.xlu0 %3969
    %v3971 = vrot.slane %v3970, 4
    %v3972 = vadd.f32 %v3970, %v3971
    %v3973 = vrot.slane %v3972, 2
    %v3974 = vadd.f32 %v3972, %v3973
    %v3975 = vrot.slane %v3974, 1
    %v3976 = vadd.f32 %v3974, %v3975
    %s3977 = vtos %v3976
    %s3978 = sadd.f32 %s3977, 0.0
    %v3979 = vadd.f32 %v2670, %v2799
    %v3980 = vadd.f32 %v2672, %v2802
    %v3981 = vadd.f32 %v2674, %v2805
    %v3982 = vadd.f32 %v2676, %v2808
    %v3983 = vadd.f32 %v2678, %v2811
    %v3984 = vadd.f32 %v2680, %v2814
    %v3985 = vadd.f32 %v2682, %v2817
    %v3986 = vadd.f32 %v2684, %v2820
    %v3987 = vadd.f32 %v2686, %v2823
    %v3988 = vadd.f32 %v2688, %v2826
    %v3989 = vadd.f32 %v2690, %v2829
    %v3990 = vadd.f32 %v2692, %v2832
    %v3991 = vadd.f32 %v2694, %v2835
    %v3992 = vadd.f32 %v2696, %v2838
    %v3993 = vadd.f32 %v2698, %v2841
    %v3994 = vadd.f32 %v2700, %v2844
    %v3995 = vlog2.pop %v3979
    %v3996 = vmul.f32 %v3995, 0.6931472
    %v3997 = vlog2.pop %v3980
    %v3998 = vmul.f32 %v3997, 0.6931472
    %v3999 = vlog2.pop %v3981
    %v4000 = vmul.f32 %v3999, 0.6931472
    %v4001 = vlog2.pop %v3982
    %v4002 = vmul.f32 %v4001, 0.6931472
    %v4003 = vlog2.pop %v3983
    %v4004 = vmul.f32 %v4003, 0.6931472
    %v4005 = vlog2.pop %v3984
    %v4006 = vmul.f32 %v4005, 0.6931472
    %v4007 = vlog2.pop %v3985
    %v4008 = vmul.f32 %v4007, 0.6931472
    %v4009 = vlog2.pop %v3986
    %v4010 = vmul.f32 %v4009, 0.6931472
    %v4011 = vlog2.pop %v3987
    %v4012 = vmul.f32 %v4011, 0.6931472
    %v4013 = vlog2.pop %v3988
    %v4014 = vmul.f32 %v4013, 0.6931472
    %v4015 = vlog2.pop %v3989
    %v4016 = vmul.f32 %v4015, 0.6931472
    %v4017 = vlog2.pop %v3990
    %v4018 = vmul.f32 %v4017, 0.6931472
    %v4019 = vlog2.pop %v3991
    %v4020 = vmul.f32 %v4019, 0.6931472
    %v4021 = vlog2.pop %v3992
    %v4022 = vmul.f32 %v4021, 0.6931472
    %v4023 = vlog2.pop %v3993
    %v4024 = vmul.f32 %v4023, 0.6931472
    %v4025 = vlog2.pop %v3994
    %v4026 = vmul.f32 %v4025, 0.6931472
    %v4027 = vmul.f32 %v1602, %v3996
    %v4028 = vmul.f32 %v1604, %v3998
    %v4029 = vmul.f32 %v1606, %v4000
    %v4030 = vmul.f32 %v1608, %v4002
    %v4031 = vmul.f32 %v1610, %v4004
    %v4032 = vmul.f32 %v1612, %v4006
    %v4033 = vmul.f32 %v1614, %v4008
    %v4034 = vmul.f32 %v1616, %v4010
    %v4035 = vmul.f32 %v1618, %v4012
    %v4036 = vmul.f32 %v1620, %v4014
    %v4037 = vmul.f32 %v1622, %v4016
    %v4038 = vmul.f32 %v1624, %v4018
    %v4039 = vmul.f32 %v1626, %v4020
    %v4040 = vmul.f32 %v1628, %v4022
    %v4041 = vmul.f32 %v1630, %v4024
    %v4042 = vmul.f32 %v1632, %v4026
    %4043 = vadd.xlane.f32.xlu0 %v4027
    %v4044 = vpop.xlane.xlu0 %4043
    %4045 = vadd.xlane.f32.xlu0 %v4028
    %v4046 = vpop.xlane.xlu0 %4045
    %4047 = vadd.xlane.f32.xlu0 %v4029
    %v4048 = vpop.xlane.xlu0 %4047
    %4049 = vadd.xlane.f32.xlu0 %v4030
    %v4050 = vpop.xlane.xlu0 %4049
    %4051 = vadd.xlane.f32.xlu0 %v4031
    %v4052 = vpop.xlane.xlu0 %4051
    %4053 = vadd.xlane.f32.xlu0 %v4032
    %v4054 = vpop.xlane.xlu0 %4053
    %4055 = vadd.xlane.f32.xlu0 %v4033
    %v4056 = vpop.xlane.xlu0 %4055
    %4057 = vadd.xlane.f32.xlu0 %v4034
    %v4058 = vpop.xlane.xlu0 %4057
    %4059 = vadd.xlane.f32.xlu0 %v4035
    %v4060 = vpop.xlane.xlu0 %4059
    %4061 = vadd.xlane.f32.xlu0 %v4036
    %v4062 = vpop.xlane.xlu0 %4061
    %4063 = vadd.xlane.f32.xlu0 %v4037
    %v4064 = vpop.xlane.xlu0 %4063
    %4065 = vadd.xlane.f32.xlu0 %v4038
    %v4066 = vpop.xlane.xlu0 %4065
    %4067 = vadd.xlane.f32.xlu0 %v4039
    %v4068 = vpop.xlane.xlu0 %4067
    %4069 = vadd.xlane.f32.xlu0 %v4040
    %v4070 = vpop.xlane.xlu0 %4069
    %4071 = vadd.xlane.f32.xlu0 %v4041
    %v4072 = vpop.xlane.xlu0 %4071
    %4073 = vadd.xlane.f32.xlu0 %v4042
    %v4074 = vpop.xlane.xlu0 %4073
    %v4075 = vsub.f32 %v3794, %v4044
    %v4076 = vsub.f32 %v3795, %v4046
    %v4077 = vsub.f32 %v3796, %v4048
    %v4078 = vsub.f32 %v3797, %v4050
    %v4079 = vsub.f32 %v3798, %v4052
    %v4080 = vsub.f32 %v3799, %v4054
    %v4081 = vsub.f32 %v3800, %v4056
    %v4082 = vsub.f32 %v3801, %v4058
    %v4083 = vsub.f32 %v3802, %v4060
    %v4084 = vsub.f32 %v3803, %v4062
    %v4085 = vsub.f32 %v3804, %v4064
    %v4086 = vsub.f32 %v3805, %v4066
    %v4087 = vsub.f32 %v3806, %v4068
    %v4088 = vsub.f32 %v3807, %v4070
    %v4089 = vsub.f32 %v3808, %v4072
    %v4090 = vsub.f32 %v3809, %v4074
    %v4091 = vmul.f32 %v4075, %v3746
    %v4092 = vmul.f32 %v4076, %v3747
    %v4093 = vmul.f32 %v4077, %v3748
    %v4094 = vmul.f32 %v4078, %v3749
    %v4095 = vmul.f32 %v4079, %v3750
    %v4096 = vmul.f32 %v4080, %v3751
    %v4097 = vmul.f32 %v4081, %v3752
    %v4098 = vmul.f32 %v4082, %v3753
    %v4099 = vmul.f32 %v4083, %v3754
    %v4100 = vmul.f32 %v4084, %v3755
    %v4101 = vmul.f32 %v4085, %v3756
    %v4102 = vmul.f32 %v4086, %v3757
    %v4103 = vmul.f32 %v4087, %v3758
    %v4104 = vmul.f32 %v4088, %v3759
    %v4105 = vmul.f32 %v4089, %v3760
    %v4106 = vmul.f32 %v4090, %v3761
    %v4107 = vsel %vm3053, %v4091, 0.0
    %v4108 = vsel %vm3053, %v4092, 0.0
    %v4109 = vadd.f32 %v4107, %v4108
    %v4110 = vsel %vm3053, %v4093, 0.0
    %v4111 = vadd.f32 %v4109, %v4110
    %v4112 = vsel %vm3053, %v4094, 0.0
    %v4113 = vadd.f32 %v4111, %v4112
    %v4114 = vsel %vm3053, %v4095, 0.0
    %v4115 = vadd.f32 %v4113, %v4114
    %v4116 = vsel %vm3053, %v4096, 0.0
    %v4117 = vadd.f32 %v4115, %v4116
    %v4118 = vsel %vm3053, %v4097, 0.0
    %v4119 = vadd.f32 %v4117, %v4118
    %v4120 = vsel %vm3053, %v4098, 0.0
    %v4121 = vadd.f32 %v4119, %v4120
    %v4122 = vsel %vm3053, %v4099, 0.0
    %v4123 = vadd.f32 %v4121, %v4122
    %v4124 = vsel %vm3053, %v4100, 0.0
    %v4125 = vadd.f32 %v4123, %v4124
    %v4126 = vsel %vm3053, %v4101, 0.0
    %v4127 = vadd.f32 %v4125, %v4126
    %v4128 = vsel %vm3053, %v4102, 0.0
    %v4129 = vadd.f32 %v4127, %v4128
    %v4130 = vsel %vm3053, %v4103, 0.0
    %v4131 = vadd.f32 %v4129, %v4130
    %v4132 = vsel %vm3053, %v4104, 0.0
    %v4133 = vadd.f32 %v4131, %v4132
    %v4134 = vsel %vm3053, %v4105, 0.0
    %v4135 = vadd.f32 %v4133, %v4134
    %v4136 = vsel %vm3053, %v4106, 0.0
    %v4137 = vadd.f32 %v4135, %v4136
    %4138 = vadd.xlane.f32.xlu0 %v4137
    %v4139 = vpop.xlane.xlu0 %4138
    %v4140 = vrot.slane %v4139, 4
    %v4141 = vadd.f32 %v4139, %v4140
    %v4142 = vrot.slane %v4141, 2
    %v4143 = vadd.f32 %v4141, %v4142
    %v4144 = vrot.slane %v4143, 1
    %v4145 = vadd.f32 %v4143, %v4144
    %s4146 = vtos %v4145
    %s4147 = sadd.f32 %s3978, %s4146
    %v4148 = vadd.f32 %v2701, %v2799
    %v4149 = vadd.f32 %v2703, %v2802
    %v4150 = vadd.f32 %v2705, %v2805
    %v4151 = vadd.f32 %v2707, %v2808
    %v4152 = vadd.f32 %v2709, %v2811
    %v4153 = vadd.f32 %v2711, %v2814
    %v4154 = vadd.f32 %v2713, %v2817
    %v4155 = vadd.f32 %v2715, %v2820
    %v4156 = vadd.f32 %v2717, %v2823
    %v4157 = vadd.f32 %v2719, %v2826
    %v4158 = vadd.f32 %v2721, %v2829
    %v4159 = vadd.f32 %v2723, %v2832
    %v4160 = vadd.f32 %v2725, %v2835
    %v4161 = vadd.f32 %v2727, %v2838
    %v4162 = vadd.f32 %v2729, %v2841
    %v4163 = vadd.f32 %v2731, %v2844
    %v4164 = vlog2.pop %v4148
    %v4165 = vmul.f32 %v4164, 0.6931472
    %v4166 = vlog2.pop %v4149
    %v4167 = vmul.f32 %v4166, 0.6931472
    %v4168 = vlog2.pop %v4150
    %v4169 = vmul.f32 %v4168, 0.6931472
    %v4170 = vlog2.pop %v4151
    %v4171 = vmul.f32 %v4170, 0.6931472
    %v4172 = vlog2.pop %v4152
    %v4173 = vmul.f32 %v4172, 0.6931472
    %v4174 = vlog2.pop %v4153
    %v4175 = vmul.f32 %v4174, 0.6931472
    %v4176 = vlog2.pop %v4154
    %v4177 = vmul.f32 %v4176, 0.6931472
    %v4178 = vlog2.pop %v4155
    %v4179 = vmul.f32 %v4178, 0.6931472
    %v4180 = vlog2.pop %v4156
    %v4181 = vmul.f32 %v4180, 0.6931472
    %v4182 = vlog2.pop %v4157
    %v4183 = vmul.f32 %v4182, 0.6931472
    %v4184 = vlog2.pop %v4158
    %v4185 = vmul.f32 %v4184, 0.6931472
    %v4186 = vlog2.pop %v4159
    %v4187 = vmul.f32 %v4186, 0.6931472
    %v4188 = vlog2.pop %v4160
    %v4189 = vmul.f32 %v4188, 0.6931472
    %v4190 = vlog2.pop %v4161
    %v4191 = vmul.f32 %v4190, 0.6931472
    %v4192 = vlog2.pop %v4162
    %v4193 = vmul.f32 %v4192, 0.6931472
    %v4194 = vlog2.pop %v4163
    %v4195 = vmul.f32 %v4194, 0.6931472
    %v4196 = vmul.f32 %v1602, %v4165
    %v4197 = vmul.f32 %v1604, %v4167
    %v4198 = vmul.f32 %v1606, %v4169
    %v4199 = vmul.f32 %v1608, %v4171
    %v4200 = vmul.f32 %v1610, %v4173
    %v4201 = vmul.f32 %v1612, %v4175
    %v4202 = vmul.f32 %v1614, %v4177
    %v4203 = vmul.f32 %v1616, %v4179
    %v4204 = vmul.f32 %v1618, %v4181
    %v4205 = vmul.f32 %v1620, %v4183
    %v4206 = vmul.f32 %v1622, %v4185
    %v4207 = vmul.f32 %v1624, %v4187
    %v4208 = vmul.f32 %v1626, %v4189
    %v4209 = vmul.f32 %v1628, %v4191
    %v4210 = vmul.f32 %v1630, %v4193
    %v4211 = vmul.f32 %v1632, %v4195
    %4212 = vadd.xlane.f32.xlu0 %v4196
    %v4213 = vpop.xlane.xlu0 %4212
    %4214 = vadd.xlane.f32.xlu0 %v4197
    %v4215 = vpop.xlane.xlu0 %4214
    %4216 = vadd.xlane.f32.xlu0 %v4198
    %v4217 = vpop.xlane.xlu0 %4216
    %4218 = vadd.xlane.f32.xlu0 %v4199
    %v4219 = vpop.xlane.xlu0 %4218
    %4220 = vadd.xlane.f32.xlu0 %v4200
    %v4221 = vpop.xlane.xlu0 %4220
    %4222 = vadd.xlane.f32.xlu0 %v4201
    %v4223 = vpop.xlane.xlu0 %4222
    %4224 = vadd.xlane.f32.xlu0 %v4202
    %v4225 = vpop.xlane.xlu0 %4224
    %4226 = vadd.xlane.f32.xlu0 %v4203
    %v4227 = vpop.xlane.xlu0 %4226
    %4228 = vadd.xlane.f32.xlu0 %v4204
    %v4229 = vpop.xlane.xlu0 %4228
    %4230 = vadd.xlane.f32.xlu0 %v4205
    %v4231 = vpop.xlane.xlu0 %4230
    %4232 = vadd.xlane.f32.xlu0 %v4206
    %v4233 = vpop.xlane.xlu0 %4232
    %4234 = vadd.xlane.f32.xlu0 %v4207
    %v4235 = vpop.xlane.xlu0 %4234
    %4236 = vadd.xlane.f32.xlu0 %v4208
    %v4237 = vpop.xlane.xlu0 %4236
    %4238 = vadd.xlane.f32.xlu0 %v4209
    %v4239 = vpop.xlane.xlu0 %4238
    %4240 = vadd.xlane.f32.xlu0 %v4210
    %v4241 = vpop.xlane.xlu0 %4240
    %4242 = vadd.xlane.f32.xlu0 %v4211
    %v4243 = vpop.xlane.xlu0 %4242
    %v4244 = vsub.f32 %v3794, %v4213
    %v4245 = vsub.f32 %v3795, %v4215
    %v4246 = vsub.f32 %v3796, %v4217
    %v4247 = vsub.f32 %v3797, %v4219
    %v4248 = vsub.f32 %v3798, %v4221
    %v4249 = vsub.f32 %v3799, %v4223
    %v4250 = vsub.f32 %v3800, %v4225
    %v4251 = vsub.f32 %v3801, %v4227
    %v4252 = vsub.f32 %v3802, %v4229
    %v4253 = vsub.f32 %v3803, %v4231
    %v4254 = vsub.f32 %v3804, %v4233
    %v4255 = vsub.f32 %v3805, %v4235
    %v4256 = vsub.f32 %v3806, %v4237
    %v4257 = vsub.f32 %v3807, %v4239
    %v4258 = vsub.f32 %v3808, %v4241
    %v4259 = vsub.f32 %v3809, %v4243
    %v4260 = vmul.f32 %v4244, %v3746
    %v4261 = vmul.f32 %v4245, %v3747
    %v4262 = vmul.f32 %v4246, %v3748
    %v4263 = vmul.f32 %v4247, %v3749
    %v4264 = vmul.f32 %v4248, %v3750
    %v4265 = vmul.f32 %v4249, %v3751
    %v4266 = vmul.f32 %v4250, %v3752
    %v4267 = vmul.f32 %v4251, %v3753
    %v4268 = vmul.f32 %v4252, %v3754
    %v4269 = vmul.f32 %v4253, %v3755
    %v4270 = vmul.f32 %v4254, %v3756
    %v4271 = vmul.f32 %v4255, %v3757
    %v4272 = vmul.f32 %v4256, %v3758
    %v4273 = vmul.f32 %v4257, %v3759
    %v4274 = vmul.f32 %v4258, %v3760
    %v4275 = vmul.f32 %v4259, %v3761
    %v4276 = vsel %vm3053, %v4260, 0.0
    %v4277 = vsel %vm3053, %v4261, 0.0
    %v4278 = vadd.f32 %v4276, %v4277
    %v4279 = vsel %vm3053, %v4262, 0.0
    %v4280 = vadd.f32 %v4278, %v4279
    %v4281 = vsel %vm3053, %v4263, 0.0
    %v4282 = vadd.f32 %v4280, %v4281
    %v4283 = vsel %vm3053, %v4264, 0.0
    %v4284 = vadd.f32 %v4282, %v4283
    %v4285 = vsel %vm3053, %v4265, 0.0
    %v4286 = vadd.f32 %v4284, %v4285
    %v4287 = vsel %vm3053, %v4266, 0.0
    %v4288 = vadd.f32 %v4286, %v4287
    %v4289 = vsel %vm3053, %v4267, 0.0
    %v4290 = vadd.f32 %v4288, %v4289
    %v4291 = vsel %vm3053, %v4268, 0.0
    %v4292 = vadd.f32 %v4290, %v4291
    %v4293 = vsel %vm3053, %v4269, 0.0
    %v4294 = vadd.f32 %v4292, %v4293
    %v4295 = vsel %vm3053, %v4270, 0.0
    %v4296 = vadd.f32 %v4294, %v4295
    %v4297 = vsel %vm3053, %v4271, 0.0
    %v4298 = vadd.f32 %v4296, %v4297
    %v4299 = vsel %vm3053, %v4272, 0.0
    %v4300 = vadd.f32 %v4298, %v4299
    %v4301 = vsel %vm3053, %v4273, 0.0
    %v4302 = vadd.f32 %v4300, %v4301
    %v4303 = vsel %vm3053, %v4274, 0.0
    %v4304 = vadd.f32 %v4302, %v4303
    %v4305 = vsel %vm3053, %v4275, 0.0
    %v4306 = vadd.f32 %v4304, %v4305
    %4307 = vadd.xlane.f32.xlu0 %v4306
    %v4308 = vpop.xlane.xlu0 %4307
    %v4309 = vrot.slane %v4308, 4
    %v4310 = vadd.f32 %v4308, %v4309
    %v4311 = vrot.slane %v4310, 2
    %v4312 = vadd.f32 %v4310, %v4311
    %v4313 = vrot.slane %v4312, 1
    %v4314 = vadd.f32 %v4312, %v4313
    %s4315 = vtos %v4314
    %s4316 = sadd.f32 %s4147, %s4315
    %v4317 = vadd.f32 %v2702, %v2799
    %v4318 = vadd.f32 %v2704, %v2802
    %v4319 = vadd.f32 %v2706, %v2805
    %v4320 = vadd.f32 %v2708, %v2808
    %v4321 = vadd.f32 %v2710, %v2811
    %v4322 = vadd.f32 %v2712, %v2814
    %v4323 = vadd.f32 %v2714, %v2817
    %v4324 = vadd.f32 %v2716, %v2820
    %v4325 = vadd.f32 %v2718, %v2823
    %v4326 = vadd.f32 %v2720, %v2826
    %v4327 = vadd.f32 %v2722, %v2829
    %v4328 = vadd.f32 %v2724, %v2832
    %v4329 = vadd.f32 %v2726, %v2835
    %v4330 = vadd.f32 %v2728, %v2838
    %v4331 = vadd.f32 %v2730, %v2841
    %v4332 = vadd.f32 %v2732, %v2844
    %v4333 = vlog2.pop %v4317
    %v4334 = vmul.f32 %v4333, 0.6931472
    %v4335 = vlog2.pop %v4318
    %v4336 = vmul.f32 %v4335, 0.6931472
    %v4337 = vlog2.pop %v4319
    %v4338 = vmul.f32 %v4337, 0.6931472
    %v4339 = vlog2.pop %v4320
    %v4340 = vmul.f32 %v4339, 0.6931472
    %v4341 = vlog2.pop %v4321
    %v4342 = vmul.f32 %v4341, 0.6931472
    %v4343 = vlog2.pop %v4322
    %v4344 = vmul.f32 %v4343, 0.6931472
    %v4345 = vlog2.pop %v4323
    %v4346 = vmul.f32 %v4345, 0.6931472
    %v4347 = vlog2.pop %v4324
    %v4348 = vmul.f32 %v4347, 0.6931472
    %v4349 = vlog2.pop %v4325
    %v4350 = vmul.f32 %v4349, 0.6931472
    %v4351 = vlog2.pop %v4326
    %v4352 = vmul.f32 %v4351, 0.6931472
    %v4353 = vlog2.pop %v4327
    %v4354 = vmul.f32 %v4353, 0.6931472
    %v4355 = vlog2.pop %v4328
    %v4356 = vmul.f32 %v4355, 0.6931472
    %v4357 = vlog2.pop %v4329
    %v4358 = vmul.f32 %v4357, 0.6931472
    %v4359 = vlog2.pop %v4330
    %v4360 = vmul.f32 %v4359, 0.6931472
    %v4361 = vlog2.pop %v4331
    %v4362 = vmul.f32 %v4361, 0.6931472
    %v4363 = vlog2.pop %v4332
    %v4364 = vmul.f32 %v4363, 0.6931472
    %v4365 = vmul.f32 %v1602, %v4334
    %v4366 = vmul.f32 %v1604, %v4336
    %v4367 = vmul.f32 %v1606, %v4338
    %v4368 = vmul.f32 %v1608, %v4340
    %v4369 = vmul.f32 %v1610, %v4342
    %v4370 = vmul.f32 %v1612, %v4344
    %v4371 = vmul.f32 %v1614, %v4346
    %v4372 = vmul.f32 %v1616, %v4348
    %v4373 = vmul.f32 %v1618, %v4350
    %v4374 = vmul.f32 %v1620, %v4352
    %v4375 = vmul.f32 %v1622, %v4354
    %v4376 = vmul.f32 %v1624, %v4356
    %v4377 = vmul.f32 %v1626, %v4358
    %v4378 = vmul.f32 %v1628, %v4360
    %v4379 = vmul.f32 %v1630, %v4362
    %v4380 = vmul.f32 %v1632, %v4364
    %4381 = vadd.xlane.f32.xlu0 %v4365
    %v4382 = vpop.xlane.xlu0 %4381
    %4383 = vadd.xlane.f32.xlu0 %v4366
    %v4384 = vpop.xlane.xlu0 %4383
    %4385 = vadd.xlane.f32.xlu0 %v4367
    %v4386 = vpop.xlane.xlu0 %4385
    %4387 = vadd.xlane.f32.xlu0 %v4368
    %v4388 = vpop.xlane.xlu0 %4387
    %4389 = vadd.xlane.f32.xlu0 %v4369
    %v4390 = vpop.xlane.xlu0 %4389
    %4391 = vadd.xlane.f32.xlu0 %v4370
    %v4392 = vpop.xlane.xlu0 %4391
    %4393 = vadd.xlane.f32.xlu0 %v4371
    %v4394 = vpop.xlane.xlu0 %4393
    %4395 = vadd.xlane.f32.xlu0 %v4372
    %v4396 = vpop.xlane.xlu0 %4395
    %4397 = vadd.xlane.f32.xlu0 %v4373
    %v4398 = vpop.xlane.xlu0 %4397
    %4399 = vadd.xlane.f32.xlu0 %v4374
    %v4400 = vpop.xlane.xlu0 %4399
    %4401 = vadd.xlane.f32.xlu0 %v4375
    %v4402 = vpop.xlane.xlu0 %4401
    %4403 = vadd.xlane.f32.xlu0 %v4376
    %v4404 = vpop.xlane.xlu0 %4403
    %4405 = vadd.xlane.f32.xlu0 %v4377
    %v4406 = vpop.xlane.xlu0 %4405
    %4407 = vadd.xlane.f32.xlu0 %v4378
    %v4408 = vpop.xlane.xlu0 %4407
    %4409 = vadd.xlane.f32.xlu0 %v4379
    %v4410 = vpop.xlane.xlu0 %4409
    %4411 = vadd.xlane.f32.xlu0 %v4380
    %v4412 = vpop.xlane.xlu0 %4411
    %v4413 = vsub.f32 %v3794, %v4382
    %v4414 = vsub.f32 %v3795, %v4384
    %v4415 = vsub.f32 %v3796, %v4386
    %v4416 = vsub.f32 %v3797, %v4388
    %v4417 = vsub.f32 %v3798, %v4390
    %v4418 = vsub.f32 %v3799, %v4392
    %v4419 = vsub.f32 %v3800, %v4394
    %v4420 = vsub.f32 %v3801, %v4396
    %v4421 = vsub.f32 %v3802, %v4398
    %v4422 = vsub.f32 %v3803, %v4400
    %v4423 = vsub.f32 %v3804, %v4402
    %v4424 = vsub.f32 %v3805, %v4404
    %v4425 = vsub.f32 %v3806, %v4406
    %v4426 = vsub.f32 %v3807, %v4408
    %v4427 = vsub.f32 %v3808, %v4410
    %v4428 = vsub.f32 %v3809, %v4412
    %v4429 = vmul.f32 %v4413, %v3746
    %v4430 = vmul.f32 %v4414, %v3747
    %v4431 = vmul.f32 %v4415, %v3748
    %v4432 = vmul.f32 %v4416, %v3749
    %v4433 = vmul.f32 %v4417, %v3750
    %v4434 = vmul.f32 %v4418, %v3751
    %v4435 = vmul.f32 %v4419, %v3752
    %v4436 = vmul.f32 %v4420, %v3753
    %v4437 = vmul.f32 %v4421, %v3754
    %v4438 = vmul.f32 %v4422, %v3755
    %v4439 = vmul.f32 %v4423, %v3756
    %v4440 = vmul.f32 %v4424, %v3757
    %v4441 = vmul.f32 %v4425, %v3758
    %v4442 = vmul.f32 %v4426, %v3759
    %v4443 = vmul.f32 %v4427, %v3760
    %v4444 = vmul.f32 %v4428, %v3761
    %v4445 = vsel %vm3053, %v4429, 0.0
    %v4446 = vsel %vm3053, %v4430, 0.0
    %v4447 = vadd.f32 %v4445, %v4446
    %v4448 = vsel %vm3053, %v4431, 0.0
    %v4449 = vadd.f32 %v4447, %v4448
    %v4450 = vsel %vm3053, %v4432, 0.0
    %v4451 = vadd.f32 %v4449, %v4450
    %v4452 = vsel %vm3053, %v4433, 0.0
    %v4453 = vadd.f32 %v4451, %v4452
    %v4454 = vsel %vm3053, %v4434, 0.0
    %v4455 = vadd.f32 %v4453, %v4454
    %v4456 = vsel %vm3053, %v4435, 0.0
    %v4457 = vadd.f32 %v4455, %v4456
    %v4458 = vsel %vm3053, %v4436, 0.0
    %v4459 = vadd.f32 %v4457, %v4458
    %v4460 = vsel %vm3053, %v4437, 0.0
    %v4461 = vadd.f32 %v4459, %v4460
    %v4462 = vsel %vm3053, %v4438, 0.0
    %v4463 = vadd.f32 %v4461, %v4462
    %v4464 = vsel %vm3053, %v4439, 0.0
    %v4465 = vadd.f32 %v4463, %v4464
    %v4466 = vsel %vm3053, %v4440, 0.0
    %v4467 = vadd.f32 %v4465, %v4466
    %v4468 = vsel %vm3053, %v4441, 0.0
    %v4469 = vadd.f32 %v4467, %v4468
    %v4470 = vsel %vm3053, %v4442, 0.0
    %v4471 = vadd.f32 %v4469, %v4470
    %v4472 = vsel %vm3053, %v4443, 0.0
    %v4473 = vadd.f32 %v4471, %v4472
    %v4474 = vsel %vm3053, %v4444, 0.0
    %v4475 = vadd.f32 %v4473, %v4474
    %4476 = vadd.xlane.f32.xlu0 %v4475
    %v4477 = vpop.xlane.xlu0 %4476
    %v4478 = vrot.slane %v4477, 4
    %v4479 = vadd.f32 %v4477, %v4478
    %v4480 = vrot.slane %v4479, 2
    %v4481 = vadd.f32 %v4479, %v4480
    %v4482 = vrot.slane %v4481, 1
    %v4483 = vadd.f32 %v4481, %v4482
    %s4484 = vtos %v4483
    %s4485 = sadd.f32 %s4316, %s4484
    %s4486 = smul.f32 %s4485, 0.25
    %s4487 = smul.f32 %s4486, %s3128
    %s4488 = ssub.f32 %s3745, %s4487
    %v4489 = vstv %s4488
    %4490 = vst [vmem:[%s6] sm:$0x1] %v4489
  $region25: #{block_con_loss.1} parent=0 // pred_fallthru
    _
  // Predicated region
  $region26: #{block_con_loss.1} parent=0 // pred_check
    _
  $region27: #{block_con_loss.1} parent=0 // pred_check_branch
    %4492 = sbr.rel (0) target = $region29
  $region28: #{block_con_loss.1} parent=0 // pred_region
    _
  $region29: #{block_con_loss.1} parent=0 // pred_fallthru
    _
  // Predicated region
  $region30: #{block_con_loss.1} parent=0 // pred_check
    _
  $region31: #{block_con_loss.1} parent=0 // pred_check_branch
    %4494 = sbr.rel (0) target = $region33
  $region32: #{block_con_loss.1} parent=0 // pred_region
    _
  $region33: #{block_con_loss.1} parent=0 // pred_fallthru
    _

</llo_original>
